<compile_context>
chip_gen: v6e
topology: v6e:2x2x1
jax: 0.10.0
libtpu: 0.0.40
codegen_flags: <defaults>
</compile_context>

<pallas_src>
import functools

import numpy as np
import jax
import jax.numpy as jnp
from jax.experimental import pallas as pl
from jax.experimental.pallas import tpu as pltpu

_VMEM = pltpu.MemorySpace.VMEM


def _vmem_full():
    return pl.BlockSpec(memory_space=_VMEM)


def _lane_block(n, target=1024):
    """Pick a lane-axis block: whole axis if small/unaligned, else a multiple of
    128 dividing n (enables a parallel grid over the lane axis, e.g. v7x 2 TCs)."""
    if n <= target or n % 128 != 0:
        return n, 1
    blk = target - (target % 128)
    while n % blk != 0:
        blk -= 128
    return blk, n // blk


def _par(n_axes=1):
    return pltpu.CompilerParams(dimension_semantics=("parallel",) * n_axes)


# ----------------------------------------------------------------------------
# Local frame (norm_diff=True).  xi, xj: (3, E) component-major coordinates.
# ----------------------------------------------------------------------------
def _local_frame(xi, xj):
    ax, ay, az = xi[0:1, :], xi[1:2, :], xi[2:3, :]
    bx, by, bz = xj[0:1, :], xj[1:2, :], xj[2:3, :]
    dx, dy, dz = ax - bx, ay - by, az - bz
    radial = dx * dx + dy * dy + dz * dz
    cx = ay * bz - az * by
    cy = az * bx - ax * bz
    cz = ax * by - ay * bx
    nrm = jnp.sqrt(radial) + 1.0
    dx, dy, dz = dx / nrm, dy / nrm, dz / nrm
    cnorm = jnp.sqrt(cx * cx + cy * cy + cz * cz) + 1.0
    cx, cy, cz = cx / cnorm, cy / cnorm, cz / cnorm
    vx = dy * cz - dz * cy
    vy = dz * cx - dx * cz
    vz = dx * cy - dy * cx
    return radial, (dx, dy, dz), (cx, cy, cz), (vx, vy, vz)


# ----------------------------------------------------------------------------
# Transposed fused MLP:  y^T = act(... act(W1 @ x^T + b1) ...), lane-dense in n.
# ----------------------------------------------------------------------------
def _tmlp_kernel(*refs, acts):
    x = refs[0][...]
    o_ref = refs[-1]
    for i, act in enumerate(acts):
        w = refs[1 + 2 * i][...]                     # (out, in)  torch layout
        b = refs[2 + 2 * i][...]                     # (out, 1)
        x = jnp.dot(w, x, preferred_element_type=jnp.float32) + b
        if act == "relu":
            x = jnp.maximum(x, 0.0)
    o_ref[...] = x


def pallas_tmlp(x_t, layers, acts):
    in_dim, n = x_t.shape
    out_dim = layers[-1][0].shape[0]
    flat = []
    for w, b in layers:
        flat += [w, b]
    blk, steps = _lane_block(n)
    in_specs = [pl.BlockSpec((in_dim, blk), lambda j: (0, j))]
    in_specs += [pl.BlockSpec(a.shape, lambda j: (0, 0)) for a in flat]
    return pl.pallas_call(
        functools.partial(_tmlp_kernel, acts=tuple(acts)),
        out_shape=jax.ShapeDtypeStruct((out_dim, n), jnp.float32),
        grid=(steps,),
        in_specs=in_specs,
        out_specs=pl.BlockSpec((out_dim, blk), lambda j: (0, j)),
        compiler_params=_par(),
    )(x_t, *flat)


# ----------------------------------------------------------------------------
# Fused scalarization + fuse_edge kernel (setup, constant across layers).
# ----------------------------------------------------------------------------
def _scalar_fuse_kernel(xi_ref, xj_ref, vi_ref, vj_ref, ea_ref,
                        w1f_ref, w1e_ref, b1_ref, w2_ref, b2_ref,
                        o_ref, feat_ref):
    xi, xj = xi_ref[...], xj_ref[...]
    vi, vj = vi_ref[...], vj_ref[...]
    _, (dx, dy, dz), (cx, cy, cz), (vx, vy, vz) = _local_frame(xi, xj)

    def project(p):                                   # edge_basis @ p, p: (3, E)
        px, py, pz = p[0:1, :], p[1:2, :], p[2:3, :]
        return (dx * px + dy * py + dz * pz,
                cx * px + cy * py + cz * pz,
                vx * px + vy * py + vz * pz)

    ci = project(xi)                                  # coff_i
    cj = project(xj)                                  # coff_j
    wi = project(vi)                                  # vel_i
    wj = project(vj)                                  # vel_j
    dot_ij = ci[0] * cj[0] + ci[1] * cj[1] + ci[2] * cj[2]
    ni = jnp.sqrt(ci[0] ** 2 + ci[1] ** 2 + ci[2] ** 2)
    nj = jnp.sqrt(cj[0] ** 2 + cj[1] ** 2 + cj[2] ** 2)
    cos = dot_ij / (ni + 1e-5) / (nj + 1e-5)
    # TODO(synk): reference uses sqrt(1 - cos^2) which can NaN from rounding;
    # clamped at 0 here (matches reference up to fp rounding).
    sin = jnp.sqrt(jnp.maximum(1.0 - cos * cos, 0.0))

    # Stack the 14 scalarization rows in VMEM scratch so fuse_edge layer 1 can
    # consume them with a single MXU contraction (no in-kernel concatenate).
    rows = (sin, cos) + ci + cj + wi + wj
    for k, r in enumerate(rows):
        feat_ref[k:k + 1, :] = r

    pre = (jnp.dot(w1e_ref[...], ea_ref[...], preferred_element_type=jnp.float32)
           + jnp.dot(w1f_ref[...], feat_ref[...], preferred_element_type=jnp.float32)
           + b1_ref[...])
    y = jnp.maximum(pre, 0.0)
    y = jnp.dot(w2_ref[...], y, preferred_element_type=jnp.float32) + b2_ref[...]
    o_ref[...] = jnp.maximum(y, 0.0)


def pallas_scalar_fuse(xi_t, xj_t, vi_t, vj_t, ea_t, fe):
    e = xi_t.shape[1]
    d_ea = ea_t.shape[0]
    out_dim = fe["w2"].shape[0]
    blk, steps = _lane_block(e)
    lane = lambda r: pl.BlockSpec((r, blk), lambda j: (0, j))
    full = lambda a: pl.BlockSpec(a.shape, lambda j: (0, 0))
    weights = (fe["w1_feat"], fe["w1_ea"], fe["b1"], fe["w2"], fe["b2"])
    return pl.pallas_call(
        _scalar_fuse_kernel,
        out_shape=jax.ShapeDtypeStruct((out_dim, e), jnp.float32),
        grid=(steps,),
        in_specs=[lane(3), lane(3), lane(3), lane(3), lane(d_ea)]
                 + [full(w) for w in weights],
        out_specs=lane(out_dim),
        scratch_shapes=[pltpu.VMEM((14, blk), jnp.float32)],
        compiler_params=_par(),
    )(xi_t, xj_t, vi_t, vj_t, ea_t, *weights)


# ----------------------------------------------------------------------------
# Fused Clof_GCL per-edge kernel: frame + edge_mlp + coord_mlp + trans/clip.
# ----------------------------------------------------------------------------
def _gcl_edge_kernel(xi_ref, xj_ref, hr_ref, hc_ref, ea_ref,
                     wes_ref, wed_ref, wer_ref, wee_ref, be1_ref,
                     we2_ref, be2_ref, wc1_ref, bc1_ref, wc2_ref,
                     ef_ref, tr_ref):
    xi, xj = xi_ref[...], xj_ref[...]
    radial, (dx, dy, dz), (cx, cy, cz), (vx, vy, vz) = _local_frame(xi, xj)

    # edge_mlp layer 1 on the split input [h_i | h_j | radial | edge_attr]:
    # three MXU partial contractions + VPU rank-1 term for the radial column.
    pre = (jnp.dot(wes_ref[...], hr_ref[...], preferred_element_type=jnp.float32)
           + jnp.dot(wed_ref[...], hc_ref[...], preferred_element_type=jnp.float32)
           + jnp.dot(wee_ref[...], ea_ref[...], preferred_element_type=jnp.float32)
           + wer_ref[...] * radial
           + be1_ref[...])
    m = jnp.maximum(pre, 0.0)
    ef = jnp.dot(we2_ref[...], m, preferred_element_type=jnp.float32) + be2_ref[...]
    ef = jnp.maximum(ef, 0.0)
    ef_ref[...] = ef                                   # edge_feat (hidden, E)

    # coord_mlp (tanh=False) fused: frame coefficients -> clipped translations.
    c1 = jnp.maximum(
        jnp.dot(wc1_ref[...], ef, preferred_element_type=jnp.float32) + bc1_ref[...],
        0.0)
    coff = jnp.dot(wc2_ref[...], c1, preferred_element_type=jnp.float32)   # (3, E)
    f0, f1, f2 = coff[0:1, :], coff[1:2, :], coff[2:3, :]
    tr_ref[0:1, :] = jnp.clip(dx * f0 + cx * f1 + vx * f2, -100.0, 100.0)
    tr_ref[1:2, :] = jnp.clip(dy * f0 + cy * f1 + vy * f2, -100.0, 100.0)
    tr_ref[2:3, :] = jnp.clip(dz * f0 + cz * f1 + vz * f2, -100.0, 100.0)


def pallas_gcl_edge(xi_t, xj_t, hr_t, hc_t, ea_t, p):
    hidden, e = hr_t.shape
    d_ea = ea_t.shape[0]
    blk, steps = _lane_block(e)
    lane = lambda r: pl.BlockSpec((r, blk), lambda j: (0, j))
    full = lambda a: pl.BlockSpec(a.shape, lambda j: (0, 0))
    weights = (p["we1_src"], p["we1_dst"], p["we1_rad"], p["we1_ea"], p["be1"],
               p["we2"], p["be2"], p["wc1"], p["bc1"], p["wc2"])
    return pl.pallas_call(
        _gcl_edge_kernel,
        out_shape=(jax.ShapeDtypeStruct((hidden, e), jnp.float32),
                   jax.ShapeDtypeStruct((3, e), jnp.float32)),
        grid=(steps,),
        in_specs=[lane(3), lane(3), lane(hidden), lane(hidden), lane(d_ea)]
                 + [full(w) for w in weights],
        out_specs=(lane(hidden), lane(3)),
        compiler_params=_par(),
    )(xi_t, xj_t, hr_t, hc_t, ea_t, *weights)


# ----------------------------------------------------------------------------
# Fused Clof_GCL per-node kernel: node_mlp (+residual) and coord_mlp_vel * vel.
# ----------------------------------------------------------------------------
def _gcl_node_kernel(h_ref, agg_ref, vel_ref,
                     wnh_ref, wna_ref, bn1_ref, wn2_ref, bn2_ref,
                     wv1_ref, bv1_ref, wv2_ref, bv2_ref,
                     ho_ref, vc_ref):
    h = h_ref[...]
    n1 = jnp.maximum(
        jnp.dot(wnh_ref[...], h, preferred_element_type=jnp.float32)
        + jnp.dot(wna_ref[...], agg_ref[...], preferred_element_type=jnp.float32)
        + bn1_ref[...], 0.0)
    out = jnp.dot(wn2_ref[...], n1, preferred_element_type=jnp.float32) + bn2_ref[...]
    ho_ref[...] = h + out                               # recurrent=True

    v1 = jnp.maximum(
        jnp.dot(wv1_ref[...], h, preferred_element_type=jnp.float32) + bv1_ref[...],
        0.0)
    scale = jnp.dot(wv2_ref[...], v1, preferred_element_type=jnp.float32) + bv2_ref[...]
    vc_ref[...] = scale * vel_ref[...]                  # (3, N), lane-dense


def pallas_gcl_node(h_t, agg_t, vel_t, p):
    hidden, n = h_t.shape
    blk, steps = _lane_block(n)
    lane = lambda r: pl.BlockSpec((r, blk), lambda j: (0, j))
    full = lambda a: pl.BlockSpec(a.shape, lambda j: (0, 0))
    weights = (p["wn1_h"], p["wn1_agg"], p["bn1"], p["wn2"], p["bn2"],
               p["wv1"], p["bv1"], p["wv2"], p["bv2"])
    return pl.pallas_call(
        _gcl_node_kernel,
        out_shape=(jax.ShapeDtypeStruct((hidden, n), jnp.float32),
                   jax.ShapeDtypeStruct((3, n), jnp.float32)),
        grid=(steps,),
        in_specs=[lane(hidden), lane(hidden), lane(3)] + [full(w) for w in weights],
        out_specs=(lane(hidden), lane(3)),
        compiler_params=_par(),
    )(h_t, agg_t, vel_t, *weights)


# ----------------------------------------------------------------------------
# Pairwise Euclidean distance (torch.cdist p=2), exact per-component form.
# ----------------------------------------------------------------------------
def _cdist_kernel(x0_ref, x1_ref, x2_ref, xt_ref, o_ref):
    xt = xt_ref[...]
    d0 = x0_ref[...] - xt[0:1, :]
    d1 = x1_ref[...] - xt[1:2, :]
    d2 = x2_ref[...] - xt[2:3, :]
    o_ref[...] = jnp.sqrt(d0 * d0 + d1 * d1 + d2 * d2)


def pallas_cdist(x):
    n = x.shape[0]
    vm = _vmem_full()
    return pl.pallas_call(
        _cdist_kernel,
        out_shape=jax.ShapeDtypeStruct((n, n), jnp.float32),
        in_specs=[vm, vm, vm, vm],
        out_specs=vm,
    )(x[:, 0:1], x[:, 1:2], x[:, 2:3], x.T)


# ----------------------------------------------------------------------------
# Parameter initialization (torch nn.Linear layout: W (out, in), b (out, 1))
# ----------------------------------------------------------------------------
def _init_linear(key, fan_in, fan_out, bias=True, scale=None):
    kw, kb = jax.random.split(key)
    bound = (1.0 / np.sqrt(fan_in)) if scale is None else scale
    w = jax.random.uniform(kw, (fan_out, fan_in), jnp.float32, -bound, bound)
    if bias:
        b = jax.random.uniform(kb, (fan_out, 1), jnp.float32, -bound, bound)
    else:
        b = jnp.zeros((fan_out, 1), jnp.float32)
    return w, b


def init_gcl(key, hidden_nf, edges_in_d):
    ks = jax.random.split(key, 8)
    h = hidden_nf
    we1, be1 = _init_linear(ks[0], 2 * h + 1 + edges_in_d, h)
    we2, be2 = _init_linear(ks[1], h, h)
    wn1, bn1 = _init_linear(ks[2], h + h, h)
    wn2, bn2 = _init_linear(ks[3], h, h)
    wc1, bc1 = _init_linear(ks[4], h, h)
    xav = 0.001 * np.sqrt(6.0 / (h + 3))                 # xavier_uniform(gain=0.001)
    wc2, _ = _init_linear(ks[5], h, 3, bias=False, scale=xav)
    wv1, bv1 = _init_linear(ks[6], h, h)
    wv2, bv2 = _init_linear(ks[7], h, 1)
    return {
        # edge_mlp layer 1 pre-split by input block: [h_i | h_j | radial | e_attr]
        "we1_src": we1[:, :h], "we1_dst": we1[:, h:2 * h],
        "we1_rad": we1[:, 2 * h:2 * h + 1], "we1_ea": we1[:, 2 * h + 1:], "be1": be1,
        "we2": we2, "be2": be2,
        # node_mlp layer 1 pre-split: [h | agg]
        "wn1_h": wn1[:, :h], "wn1_agg": wn1[:, h:], "bn1": bn1,
        "wn2": wn2, "bn2": bn2,
        "wc1": wc1, "bc1": bc1, "wc2": wc2,
        "wv1": wv1, "bv1": bv1, "wv2": wv2, "bv2": bv2,
    }


def init_params(key, in_node_nf, in_edge_nf, hidden_nf, n_layers):
    ks = jax.random.split(key, 3 + n_layers)
    h2 = hidden_nf // 2
    wf1, bf1 = _init_linear(ks[1], 14 + in_edge_nf, h2)
    wf2, bf2 = _init_linear(ks[2], h2, h2)
    return {
        "embedding_node": [_init_linear(ks[0], in_node_nf, hidden_nf)],
        # fuse_edge layer 1 pre-split by input block: [edge_attr | coff_feat(14)]
        "fuse_edge": {"w1_ea": wf1[:, :in_edge_nf], "w1_feat": wf1[:, in_edge_nf:],
                      "b1": bf1, "w2": wf2, "b2": bf2},
        "gcl": [init_gcl(ks[3 + i], hidden_nf, h2) for i in range(n_layers)],
    }


# ----------------------------------------------------------------------------
# Clof_GCL layer (reconstructed reference semantics), component-major state.
# ----------------------------------------------------------------------------
def clof_gcl(p, h_t, row, col, coord_t, vel_t, eattr_t, coords_weight=1.0):
    hidden, n = h_t.shape
    ef_t, trans_t = pallas_gcl_edge(coord_t[:, row], coord_t[:, col],
                                    h_t[:, row], h_t[:, col], eattr_t, p)
    # coord model: segment-mean of clipped frame translations over receiver row
    agg = jnp.zeros((3, n), jnp.float32).at[:, row].add(trans_t)
    cnt = jnp.zeros((1, n), jnp.float32).at[:, row].add(1.0)
    coord_t = coord_t + (agg / jnp.maximum(cnt, 1.0)) * coords_weight
    # node model + velocity term (both use the pre-update h)
    agg_h = jnp.zeros((hidden, n), jnp.float32).at[:, row].add(ef_t)
    h_t, vel_contrib = pallas_gcl_node(h_t, agg_h, vel_t, p)
    coord_t = coord_t + vel_contrib
    return h_t, coord_t


# ----------------------------------------------------------------------------
# ClofNet_vel forward
# ----------------------------------------------------------------------------
@functools.partial(jax.jit, static_argnames=("n_nodes",))
def clofnet_vel_forward(params, h, x, edges, vel, edge_attr, n_nodes=5):
    row, col = edges

    # node embedding (transposed, lane-dense over nodes)
    h_t = pallas_tmlp(h.T, params["embedding_node"], ("none",))        # (hidden, N)

    # center coordinates per graph
    x_r = x.reshape(-1, n_nodes, 3)
    centroid = jnp.mean(x_r, axis=1, keepdims=True)
    x_center = (x_r - centroid).reshape(-1, 3)
    coord_t = x_center.T                                               # (3, N)
    vel_t = vel.T                                                      # (3, N)

    # scalarization + fuse_edge fused into one kernel (constant across layers)
    eattr0_t = edge_attr.T                                             # (in_edge_nf, E)
    edge_feat_t = pallas_scalar_fuse(coord_t[:, row], coord_t[:, col],
                                     vel_t[:, row], vel_t[:, col],
                                     eattr0_t, params["fuse_edge"])    # (hidden//2, E)

    for lp in params["gcl"]:
        h_t, coord_t = clof_gcl(lp, h_t, row, col, coord_t, vel_t, edge_feat_t)

    h_out = h_t.T
    x_out = (coord_t.T.reshape(-1, n_nodes, 3) + centroid).reshape(-1, 3)
    dist = pallas_cdist(x_out)
    return h_out, x_out, dist


# ----------------------------------------------------------------------------
# Demo
# ----------------------------------------------------------------------------
if __name__ == "__main__":
    n_graphs, n_nodes = 2, 5
    n_total = n_graphs * n_nodes                      # 10 nodes
    in_node_nf, in_edge_nf = 8, 2
    hidden_nf, n_layers = 32, 4

    # fully-connected edges within each graph (no self loops)
    rows, cols = [], []
    for g in range(n_graphs):
        for i in range(n_nodes):
            for j in range(n_nodes):
                if i != j:
                    rows.append(g * n_nodes + i)
                    cols.append(g * n_nodes + j)
    row = jnp.asarray(np.array(rows, dtype=np.int32))
    col = jnp.asarray(np.array(cols, dtype=np.int32))
    n_edges = row.shape[0]                            # 40

    key = jax.random.PRNGKey(0)
    k_h, k_x, k_v, k_e = jax.random.split(key, 4)
    h_in = jax.random.normal(k_h, (n_total, in_node_nf), jnp.float32)
    x_in = jax.random.normal(k_x, (n_total, 3), jnp.float32)
    vel_in = jax.random.normal(k_v, (n_total, 3), jnp.float32)
    edge_attr = jax.random.normal(k_e, (n_edges, in_edge_nf), jnp.float32)

    params = init_params(jax.random.PRNGKey(42), in_node_nf, in_edge_nf,
                         hidden_nf, n_layers)

    h_out, x_out, dist = clofnet_vel_forward(
        params, h_in, x_in, (row, col), vel_in, edge_attr, n_nodes=n_nodes)
    jax.block_until_ready((h_out, x_out, dist))

    assert h_out.shape == (n_total, hidden_nf)
    assert x_out.shape == (n_total, 3)
    assert dist.shape == (n_total, n_total)
    assert bool(jnp.all(jnp.isfinite(h_out)))
    assert bool(jnp.all(jnp.isfinite(x_out)))
    assert bool(jnp.all(jnp.isfinite(dist)))
    print("KERNEL_OK")
</pallas_src>

<mosaic_0001>
module attributes {stable_mosaic.version = 11 : i64} {
  func.func private @main(%arg0: i32) attributes {dimension_semantics = [#tpu.dimension_semantics<core_parallel>], iteration_bounds = array<i64: 2>, tpu.core_type = #tpu.core_type<sc_scalar_subcore>, window_params = []} {
    return
  }
}

module attributes {stable_mosaic.version = 11 : i64} {
  func.func private @main(%arg0: i32) attributes {dimension_semantics = [#tpu.dimension_semantics<core_parallel>], iteration_bounds = array<i64: 2>, tpu.core_type = #tpu.core_type<sc_scalar_subcore>, window_params = []} {
    return
  }
}

module attributes {stable_mosaic.version = 11 : i64} {
  func.func @_tmlp_kernel(%arg0: i32, %arg1: memref<8x10xf32, #tpu.memory_space<vmem>>, %arg2: memref<32x8xf32, #tpu.memory_space<vmem>>, %arg3: memref<32x1xf32, #tpu.memory_space<vmem>>, %arg4: memref<32x10xf32, #tpu.memory_space<vmem>>) attributes {dimension_semantics = [#tpu.dimension_semantics<parallel>], iteration_bounds = array<i64: 1>, scalar_prefetch = 0 : i64, scratch_operands = 0 : i64, tpu.core_type = #tpu.core_type<tc>, window_params = [{transform_indices = @transform_0, window_bounds = array<i64: 8, 10>}, {pipeline_mode = #tpu.pipeline_mode<synchronous>, transform_indices = @transform_1, window_bounds = array<i64: 32, 8>}, {pipeline_mode = #tpu.pipeline_mode<synchronous>, transform_indices = @transform_2, window_bounds = array<i64: 32, 1>}, {transform_indices = @transform_3, window_bounds = array<i64: 32, 10>}]} {
    %c0 = arith.constant 0 : index
    %c0_0 = arith.constant 0 : index
    %0 = vector.load %arg1[%c0, %c0_0] : memref<8x10xf32, #tpu.memory_space<vmem>>, vector<8x10xf32>
    %c0_1 = arith.constant 0 : index
    %c0_2 = arith.constant 0 : index
    %1 = vector.load %arg2[%c0_1, %c0_2] : memref<32x8xf32, #tpu.memory_space<vmem>>, vector<32x8xf32>
    %c0_3 = arith.constant 0 : index
    %c0_4 = arith.constant 0 : index
    %2 = vector.load %arg3[%c0_3, %c0_4] : memref<32x1xf32, #tpu.memory_space<vmem>>, vector<32x1xf32>
    %cst = arith.constant dense<0.000000e+00> : vector<32x10xf32>
    %3 = tpu.matmul %1, %0, %cst {dimension_numbers = #tpu.dot_dimension_numbers<[1], [0], [0], [1], [0, 0, 1, 1], [], []>} : vector<32x8xf32>, vector<8x10xf32>, vector<32x10xf32> -> vector<32x10xf32>
    %4 = vector.broadcast %2 : vector<32x1xf32> to vector<32x10xf32>
    %5 = arith.addf %3, %4 : vector<32x10xf32>
    %c0_5 = arith.constant 0 : index
    %c0_6 = arith.constant 0 : index
    %6 = vector.load %arg4[%c0_5, %c0_6] : memref<32x10xf32, #tpu.memory_space<vmem>>, vector<32x10xf32>
    tpu.vector_store %arg4[%c0_5, %c0_6], %5 {strides = array<i32>} : memref<32x10xf32, #tpu.memory_space<vmem>>, vector<32x10xf32>,
    return
  }
  func.func @transform_0(%arg0: i32) -> (i32, i32) {
    %c0_i32 = arith.constant 0 : i32
    %c0_i32_0 = arith.constant 0 : i32
    return %c0_i32, %arg0 : i32, i32
  }
  func.func @transform_1(%arg0: i32) -> (i32, i32) {
    %c0_i32 = arith.constant 0 : i32
    %c0_i32_0 = arith.constant 0 : i32
    %c0_i32_1 = arith.constant 0 : i32
    return %c0_i32, %c0_i32_0 : i32, i32
  }
  func.func @transform_2(%arg0: i32) -> (i32, i32) {
    %c0_i32 = arith.constant 0 : i32
    %c0_i32_0 = arith.constant 0 : i32
    %c0_i32_1 = arith.constant 0 : i32
    return %c0_i32, %c0_i32_0 : i32, i32
  }
  func.func @transform_3(%arg0: i32) -> (i32, i32) {
    %c0_i32 = arith.constant 0 : i32
    %c0_i32_0 = arith.constant 0 : i32
    return %c0_i32, %arg0 : i32, i32
  }
}

module attributes {stable_mosaic.version = 11 : i64} {
  func.func @_scalar_fuse_kernel(%arg0: i32, %arg1: memref<3x40xf32, #tpu.memory_space<vmem>>, %arg2: memref<3x40xf32, #tpu.memory_space<vmem>>, %arg3: memref<3x40xf32, #tpu.memory_space<vmem>>, %arg4: memref<3x40xf32, #tpu.memory_space<vmem>>, %arg5: memref<2x40xf32, #tpu.memory_space<vmem>>, %arg6: memref<16x14xf32, #tpu.memory_space<vmem>>, %arg7: memref<16x2xf32, #tpu.memory_space<vmem>>, %arg8: memref<16x1xf32, #tpu.memory_space<vmem>>, %arg9: memref<16x16xf32, #tpu.memory_space<vmem>>, %arg10: memref<16x1xf32, #tpu.memory_space<vmem>>, %arg11: memref<16x40xf32, #tpu.memory_space<vmem>>, %arg12: memref<14x40xf32, #tpu.memory_space<vmem>>) attributes {dimension_semantics = [#tpu.dimension_semantics<parallel>], iteration_bounds = array<i64: 1>, scalar_prefetch = 0 : i64, scratch_operands = 1 : i64, tpu.core_type = #tpu.core_type<tc>, window_params = [{transform_indices = @transform_0, window_bounds = array<i64: 3, 40>}, {transform_indices = @transform_1, window_bounds = array<i64: 3, 40>}, {transform_indices = @transform_2, window_bounds = array<i64: 3, 40>}, {transform_indices = @transform_3, window_bounds = array<i64: 3, 40>}, {transform_indices = @transform_4, window_bounds = array<i64: 2, 40>}, {pipeline_mode = #tpu.pipeline_mode<synchronous>, transform_indices = @transform_5, window_bounds = array<i64: 16, 14>}, {pipeline_mode = #tpu.pipeline_mode<synchronous>, transform_indices = @transform_6, window_bounds = array<i64: 16, 2>}, {pipeline_mode = #tpu.pipeline_mode<synchronous>, transform_indices = @transform_7, window_bounds = array<i64: 16, 1>}, {pipeline_mode = #tpu.pipeline_mode<synchronous>, transform_indices = @transform_8, window_bounds = array<i64: 16, 16>}, {pipeline_mode = #tpu.pipeline_mode<synchronous>, transform_indices = @transform_9, window_bounds = array<i64: 16, 1>}, {transform_indices = @transform_10, window_bounds = array<i64: 16, 40>}]} {
    %c0 = arith.constant 0 : index
    %c0_0 = arith.constant 0 : index
    %0 = vector.load %arg1[%c0, %c0_0] : memref<3x40xf32, #tpu.memory_space<vmem>>, vector<3x40xf32>
    %c0_1 = arith.constant 0 : index
    %c0_2 = arith.constant 0 : index
    %1 = vector.load %arg2[%c0_1, %c0_2] : memref<3x40xf32, #tpu.memory_space<vmem>>, vector<3x40xf32>
    %c0_3 = arith.constant 0 : index
    %c0_4 = arith.constant 0 : index
    %2 = vector.load %arg3[%c0_3, %c0_4] : memref<3x40xf32, #tpu.memory_space<vmem>>, vector<3x40xf32>
    %c0_5 = arith.constant 0 : index
    %c0_6 = arith.constant 0 : index
    %3 = vector.load %arg4[%c0_5, %c0_6] : memref<3x40xf32, #tpu.memory_space<vmem>>, vector<3x40xf32>
    %4 = vector.extract_strided_slice %0 {offsets = [0, 0], sizes = [1, 40], strides = [1, 1]} : vector<3x40xf32> to vector<1x40xf32>
    %5 = vector.extract_strided_slice %0 {offsets = [1, 0], sizes = [1, 40], strides = [1, 1]} : vector<3x40xf32> to vector<1x40xf32>
    %6 = vector.extract_strided_slice %0 {offsets = [2, 0], sizes = [1, 40], strides = [1, 1]} : vector<3x40xf32> to vector<1x40xf32>
    %7 = vector.extract_strided_slice %1 {offsets = [0, 0], sizes = [1, 40], strides = [1, 1]} : vector<3x40xf32> to vector<1x40xf32>
    %8 = vector.extract_strided_slice %1 {offsets = [1, 0], sizes = [1, 40], strides = [1, 1]} : vector<3x40xf32> to vector<1x40xf32>
    %9 = vector.extract_strided_slice %1 {offsets = [2, 0], sizes = [1, 40], strides = [1, 1]} : vector<3x40xf32> to vector<1x40xf32>
    %10 = arith.subf %4, %7 : vector<1x40xf32>
    %11 = arith.subf %5, %8 : vector<1x40xf32>
    %12 = arith.subf %6, %9 : vector<1x40xf32>
    %13 = arith.mulf %10, %10 : vector<1x40xf32>
    %14 = arith.mulf %11, %11 : vector<1x40xf32>
    %15 = arith.addf %13, %14 : vector<1x40xf32>
    %16 = arith.mulf %12, %12 : vector<1x40xf32>
    %17 = arith.addf %15, %16 : vector<1x40xf32>
    %18 = arith.mulf %5, %9 : vector<1x40xf32>
    %19 = arith.mulf %6, %8 : vector<1x40xf32>
    %20 = arith.subf %18, %19 : vector<1x40xf32>
    %21 = arith.mulf %6, %7 : vector<1x40xf32>
    %22 = arith.mulf %4, %9 : vector<1x40xf32>
    %23 = arith.subf %21, %22 : vector<1x40xf32>
    %24 = arith.mulf %4, %8 : vector<1x40xf32>
    %25 = arith.mulf %5, %7 : vector<1x40xf32>
    %26 = arith.subf %24, %25 : vector<1x40xf32>
    %27 = math.sqrt %17 : vector<1x40xf32>
    %cst = arith.constant 1.000000e+00 : f32
    %28 = vector.broadcast %cst : f32 to vector<1x40xf32>
    %29 = arith.addf %27, %28 : vector<1x40xf32>
    %30 = arith.divf %10, %29 : vector<1x40xf32>
    %31 = arith.divf %11, %29 : vector<1x40xf32>
    %32 = arith.divf %12, %29 : vector<1x40xf32>
    %33 = arith.mulf %20, %20 : vector<1x40xf32>
    %34 = arith.mulf %23, %23 : vector<1x40xf32>
    %35 = arith.addf %33, %34 : vector<1x40xf32>
    %36 = arith.mulf %26, %26 : vector<1x40xf32>
    %37 = arith.addf %35, %36 : vector<1x40xf32>
    %38 = math.sqrt %37 : vector<1x40xf32>
    %cst_7 = arith.constant 1.000000e+00 : f32
    %39 = vector.broadcast %cst_7 : f32 to vector<1x40xf32>
    %40 = arith.addf %38, %39 : vector<1x40xf32>
    %41 = arith.divf %20, %40 : vector<1x40xf32>
    %42 = arith.divf %23, %40 : vector<1x40xf32>
    %43 = arith.divf %26, %40 : vector<1x40xf32>
    %44 = arith.mulf %31, %43 : vector<1x40xf32>
    %45 = arith.mulf %32, %42 : vector<1x40xf32>
    %46 = arith.subf %44, %45 : vector<1x40xf32>
    %47 = arith.mulf %32, %41 : vector<1x40xf32>
    %48 = arith.mulf %30, %43 : vector<1x40xf32>
    %49 = arith.subf %47, %48 : vector<1x40xf32>
    %50 = arith.mulf %30, %42 : vector<1x40xf32>
    %51 = arith.mulf %31, %41 : vector<1x40xf32>
    %52 = arith.subf %50, %51 : vector<1x40xf32>
    %53 = vector.extract_strided_slice %0 {offsets = [0, 0], sizes = [1, 40], strides = [1, 1]} : vector<3x40xf32> to vector<1x40xf32>
    %54 = vector.extract_strided_slice %0 {offsets = [1, 0], sizes = [1, 40], strides = [1, 1]} : vector<3x40xf32> to vector<1x40xf32>
    %55 = vector.extract_strided_slice %0 {offsets = [2, 0], sizes = [1, 40], strides = [1, 1]} : vector<3x40xf32> to vector<1x40xf32>
    %56 = arith.mulf %30, %53 : vector<1x40xf32>
    %57 = arith.mulf %31, %54 : vector<1x40xf32>
    %58 = arith.addf %56, %57 : vector<1x40xf32>
    %59 = arith.mulf %32, %55 : vector<1x40xf32>
    %60 = arith.addf %58, %59 : vector<1x40xf32>
    %61 = arith.mulf %41, %53 : vector<1x40xf32>
    %62 = arith.mulf %42, %54 : vector<1x40xf32>
    %63 = arith.addf %61, %62 : vector<1x40xf32>
    %64 = arith.mulf %43, %55 : vector<1x40xf32>
    %65 = arith.addf %63, %64 : vector<1x40xf32>
    %66 = arith.mulf %46, %53 : vector<1x40xf32>
    %67 = arith.mulf %49, %54 : vector<1x40xf32>
    %68 = arith.addf %66, %67 : vector<1x40xf32>
    %69 = arith.mulf %52, %55 : vector<1x40xf32>
    %70 = arith.addf %68, %69 : vector<1x40xf32>
    %71 = vector.extract_strided_slice %1 {offsets = [0, 0], sizes = [1, 40], strides = [1, 1]} : vector<3x40xf32> to vector<1x40xf32>
    %72 = vector.extract_strided_slice %1 {offsets = [1, 0], sizes = [1, 40], strides = [1, 1]} : vector<3x40xf32> to vector<1x40xf32>
    %73 = vector.extract_strided_slice %1 {offsets = [2, 0], sizes = [1, 40], strides = [1, 1]} : vector<3x40xf32> to vector<1x40xf32>
    %74 = arith.mulf %30, %71 : vector<1x40xf32>
    %75 = arith.mulf %31, %72 : vector<1x40xf32>
    %76 = arith.addf %74, %75 : vector<1x40xf32>
    %77 = arith.mulf %32, %73 : vector<1x40xf32>
    %78 = arith.addf %76, %77 : vector<1x40xf32>
    %79 = arith.mulf %41, %71 : vector<1x40xf32>
    %80 = arith.mulf %42, %72 : vector<1x40xf32>
    %81 = arith.addf %79, %80 : vector<1x40xf32>
    %82 = arith.mulf %43, %73 : vector<1x40xf32>
    %83 = arith.addf %81, %82 : vector<1x40xf32>
    %84 = arith.mulf %46, %71 : vector<1x40xf32>
    %85 = arith.mulf %49, %72 : vector<1x40xf32>
    %86 = arith.addf %84, %85 : vector<1x40xf32>
    %87 = arith.mulf %52, %73 : vector<1x40xf32>
    %88 = arith.addf %86, %87 : vector<1x40xf32>
    %89 = vector.extract_strided_slice %2 {offsets = [0, 0], sizes = [1, 40], strides = [1, 1]} : vector<3x40xf32> to vector<1x40xf32>
    %90 = vector.extract_strided_slice %2 {offsets = [1, 0], sizes = [1, 40], strides = [1, 1]} : vector<3x40xf32> to vector<1x40xf32>
    %91 = vector.extract_strided_slice %2 {offsets = [2, 0], sizes = [1, 40], strides = [1, 1]} : vector<3x40xf32> to vector<1x40xf32>
    %92 = arith.mulf %30, %89 : vector<1x40xf32>
    %93 = arith.mulf %31, %90 : vector<1x40xf32>
    %94 = arith.addf %92, %93 : vector<1x40xf32>
    %95 = arith.mulf %32, %91 : vector<1x40xf32>
    %96 = arith.addf %94, %95 : vector<1x40xf32>
    %97 = arith.mulf %41, %89 : vector<1x40xf32>
    %98 = arith.mulf %42, %90 : vector<1x40xf32>
    %99 = arith.addf %97, %98 : vector<1x40xf32>
    %100 = arith.mulf %43, %91 : vector<1x40xf32>
    %101 = arith.addf %99, %100 : vector<1x40xf32>
    %102 = arith.mulf %46, %89 : vector<1x40xf32>
    %103 = arith.mulf %49, %90 : vector<1x40xf32>
    %104 = arith.addf %102, %103 : vector<1x40xf32>
    %105 = arith.mulf %52, %91 : vector<1x40xf32>
    %106 = arith.addf %104, %105 : vector<1x40xf32>
    %107 = vector.extract_strided_slice %3 {offsets = [0, 0], sizes = [1, 40], strides = [1, 1]} : vector<3x40xf32> to vector<1x40xf32>
    %108 = vector.extract_strided_slice %3 {offsets = [1, 0], sizes = [1, 40], strides = [1, 1]} : vector<3x40xf32> to vector<1x40xf32>
    %109 = vector.extract_strided_slice %3 {offsets = [2, 0], sizes = [1, 40], strides = [1, 1]} : vector<3x40xf32> to vector<1x40xf32>
    %110 = arith.mulf %30, %107 : vector<1x40xf32>
    %111 = arith.mulf %31, %108 : vector<1x40xf32>
    %112 = arith.addf %110, %111 : vector<1x40xf32>
    %113 = arith.mulf %32, %109 : vector<1x40xf32>
    %114 = arith.addf %112, %113 : vector<1x40xf32>
    %115 = arith.mulf %41, %107 : vector<1x40xf32>
    %116 = arith.mulf %42, %108 : vector<1x40xf32>
    %117 = arith.addf %115, %116 : vector<1x40xf32>
    %118 = arith.mulf %43, %109 : vector<1x40xf32>
    %119 = arith.addf %117, %118 : vector<1x40xf32>
    %120 = arith.mulf %46, %107 : vector<1x40xf32>
    %121 = arith.mulf %49, %108 : vector<1x40xf32>
    %122 = arith.addf %120, %121 : vector<1x40xf32>
    %123 = arith.mulf %52, %109 : vector<1x40xf32>
    %124 = arith.addf %122, %123 : vector<1x40xf32>
    %125 = arith.mulf %60, %78 : vector<1x40xf32>
    %126 = arith.mulf %65, %83 : vector<1x40xf32>
    %127 = arith.addf %125, %126 : vector<1x40xf32>
    %128 = arith.mulf %70, %88 : vector<1x40xf32>
    %129 = arith.addf %127, %128 : vector<1x40xf32>
    %130 = arith.mulf %60, %60 : vector<1x40xf32>
    %131 = arith.mulf %65, %65 : vector<1x40xf32>
    %132 = arith.addf %130, %131 : vector<1x40xf32>
    %133 = arith.mulf %70, %70 : vector<1x40xf32>
    %134 = arith.addf %132, %133 : vector<1x40xf32>
    %135 = math.sqrt %134 : vector<1x40xf32>
    %136 = arith.mulf %78, %78 : vector<1x40xf32>
    %137 = arith.mulf %83, %83 : vector<1x40xf32>
    %138 = arith.addf %136, %137 : vector<1x40xf32>
    %139 = arith.mulf %88, %88 : vector<1x40xf32>
    %140 = arith.addf %138, %139 : vector<1x40xf32>
    %141 = math.sqrt %140 : vector<1x40xf32>
    %cst_8 = arith.constant 9.99999974E-6 : f32
    %142 = vector.broadcast %cst_8 : f32 to vector<1x40xf32>
    %143 = arith.addf %135, %142 : vector<1x40xf32>
    %144 = arith.divf %129, %143 : vector<1x40xf32>
    %cst_9 = arith.constant 9.99999974E-6 : f32
    %145 = vector.broadcast %cst_9 : f32 to vector<1x40xf32>
    %146 = arith.addf %141, %145 : vector<1x40xf32>
    %147 = arith.divf %144, %146 : vector<1x40xf32>
    %148 = arith.mulf %147, %147 : vector<1x40xf32>
    %cst_10 = arith.constant 1.000000e+00 : f32
    %149 = vector.broadcast %cst_10 : f32 to vector<1x40xf32>
    %150 = arith.subf %149, %148 : vector<1x40xf32>
    %cst_11 = arith.constant 0.000000e+00 : f32
    %151 = vector.broadcast %cst_11 : f32 to vector<1x40xf32>
    %152 = arith.maximumf %150, %151 : vector<1x40xf32>
    %153 = math.sqrt %152 : vector<1x40xf32>
    %c0_12 = arith.constant 0 : index
    %c0_13 = arith.constant 0 : index
    %154 = vector.load %arg12[%c0_12, %c0_13] : memref<14x40xf32, #tpu.memory_space<vmem>>, vector<1x40xf32>
    tpu.vector_store %arg12[%c0_12, %c0_13], %153 {strides = array<i32>} : memref<14x40xf32, #tpu.memory_space<vmem>>, vector<1x40xf32>,
    %c1 = arith.constant 1 : index
    %c0_14 = arith.constant 0 : index
    %155 = vector.load %arg12[%c1, %c0_14] : memref<14x40xf32, #tpu.memory_space<vmem>>, vector<1x40xf32>
    tpu.vector_store %arg12[%c1, %c0_14], %147 {strides = array<i32>} : memref<14x40xf32, #tpu.memory_space<vmem>>, vector<1x40xf32>,
    %c2 = arith.constant 2 : index
    %c0_15 = arith.constant 0 : index
    %156 = vector.load %arg12[%c2, %c0_15] : memref<14x40xf32, #tpu.memory_space<vmem>>, vector<1x40xf32>
    tpu.vector_store %arg12[%c2, %c0_15], %60 {strides = array<i32>} : memref<14x40xf32, #tpu.memory_space<vmem>>, vector<1x40xf32>,
    %c3 = arith.constant 3 : index
    %c0_16 = arith.constant 0 : index
    %157 = vector.load %arg12[%c3, %c0_16] : memref<14x40xf32, #tpu.memory_space<vmem>>, vector<1x40xf32>
    tpu.vector_store %arg12[%c3, %c0_16], %65 {strides = array<i32>} : memref<14x40xf32, #tpu.memory_space<vmem>>, vector<1x40xf32>,
    %c4 = arith.constant 4 : index
    %c0_17 = arith.constant 0 : index
    %158 = vector.load %arg12[%c4, %c0_17] : memref<14x40xf32, #tpu.memory_space<vmem>>, vector<1x40xf32>
    tpu.vector_store %arg12[%c4, %c0_17], %70 {strides = array<i32>} : memref<14x40xf32, #tpu.memory_space<vmem>>, vector<1x40xf32>,
    %c5 = arith.constant 5 : index
    %c0_18 = arith.constant 0 : index
    %159 = vector.load %arg12[%c5, %c0_18] : memref<14x40xf32, #tpu.memory_space<vmem>>, vector<1x40xf32>
    tpu.vector_store %arg12[%c5, %c0_18], %78 {strides = array<i32>} : memref<14x40xf32, #tpu.memory_space<vmem>>, vector<1x40xf32>,
    %c6 = arith.constant 6 : index
    %c0_19 = arith.constant 0 : index
    %160 = vector.load %arg12[%c6, %c0_19] : memref<14x40xf32, #tpu.memory_space<vmem>>, vector<1x40xf32>
    tpu.vector_store %arg12[%c6, %c0_19], %83 {strides = array<i32>} : memref<14x40xf32, #tpu.memory_space<vmem>>, vector<1x40xf32>,
    %c7 = arith.constant 7 : index
    %c0_20 = arith.constant 0 : index
    %161 = vector.load %arg12[%c7, %c0_20] : memref<14x40xf32, #tpu.memory_space<vmem>>, vector<1x40xf32>
    tpu.vector_store %arg12[%c7, %c0_20], %88 {strides = array<i32>} : memref<14x40xf32, #tpu.memory_space<vmem>>, vector<1x40xf32>,
    %c8 = arith.constant 8 : index
    %c0_21 = arith.constant 0 : index
    %162 = vector.load %arg12[%c8, %c0_21] : memref<14x40xf32, #tpu.memory_space<vmem>>, vector<1x40xf32>
    tpu.vector_store %arg12[%c8, %c0_21], %96 {strides = array<i32>} : memref<14x40xf32, #tpu.memory_space<vmem>>, vector<1x40xf32>,
    %c9 = arith.constant 9 : index
    %c0_22 = arith.constant 0 : index
    %163 = vector.load %arg12[%c9, %c0_22] : memref<14x40xf32, #tpu.memory_space<vmem>>, vector<1x40xf32>
    tpu.vector_store %arg12[%c9, %c0_22], %101 {strides = array<i32>} : memref<14x40xf32, #tpu.memory_space<vmem>>, vector<1x40xf32>,
    %c10 = arith.constant 10 : index
    %c0_23 = arith.constant 0 : index
    %164 = vector.load %arg12[%c10, %c0_23] : memref<14x40xf32, #tpu.memory_space<vmem>>, vector<1x40xf32>
    tpu.vector_store %arg12[%c10, %c0_23], %106 {strides = array<i32>} : memref<14x40xf32, #tpu.memory_space<vmem>>, vector<1x40xf32>,
    %c11 = arith.constant 11 : index
    %c0_24 = arith.constant 0 : index
    %165 = vector.load %arg12[%c11, %c0_24] : memref<14x40xf32, #tpu.memory_space<vmem>>, vector<1x40xf32>
    tpu.vector_store %arg12[%c11, %c0_24], %114 {strides = array<i32>} : memref<14x40xf32, #tpu.memory_space<vmem>>, vector<1x40xf32>,
    %c12 = arith.constant 12 : index
    %c0_25 = arith.constant 0 : index
    %166 = vector.load %arg12[%c12, %c0_25] : memref<14x40xf32, #tpu.memory_space<vmem>>, vector<1x40xf32>
    tpu.vector_store %arg12[%c12, %c0_25], %119 {strides = array<i32>} : memref<14x40xf32, #tpu.memory_space<vmem>>, vector<1x40xf32>,
    %c13 = arith.constant 13 : index
    %c0_26 = arith.constant 0 : index
    %167 = vector.load %arg12[%c13, %c0_26] : memref<14x40xf32, #tpu.memory_space<vmem>>, vector<1x40xf32>
    tpu.vector_store %arg12[%c13, %c0_26], %124 {strides = array<i32>} : memref<14x40xf32, #tpu.memory_space<vmem>>, vector<1x40xf32>,
    %c0_27 = arith.constant 0 : index
    %c0_28 = arith.constant 0 : index
    %168 = vector.load %arg7[%c0_27, %c0_28] : memref<16x2xf32, #tpu.memory_space<vmem>>, vector<16x2xf32>
    %c0_29 = arith.constant 0 : index
    %c0_30 = arith.constant 0 : index
    %169 = vector.load %arg5[%c0_29, %c0_30] : memref<2x40xf32, #tpu.memory_space<vmem>>, vector<2x40xf32>
    %cst_31 = arith.constant dense<0.000000e+00> : vector<16x40xf32>
    %170 = tpu.matmul %168, %169, %cst_31 {dimension_numbers = #tpu.dot_dimension_numbers<[1], [0], [0], [1], [0, 0, 1, 1], [], []>} : vector<16x2xf32>, vector<2x40xf32>, vector<16x40xf32> -> vector<16x40xf32>
    %c0_32 = arith.constant 0 : index
    %c0_33 = arith.constant 0 : index
    %171 = vector.load %arg6[%c0_32, %c0_33] : memref<16x14xf32, #tpu.memory_space<vmem>>, vector<16x14xf32>
    %c0_34 = arith.constant 0 : index
    %c0_35 = arith.constant 0 : index
    %172 = vector.load %arg12[%c0_34, %c0_35] : memref<14x40xf32, #tpu.memory_space<vmem>>, vector<14x40xf32>
    %cst_36 = arith.constant dense<0.000000e+00> : vector<16x40xf32>
    %173 = tpu.matmul %171, %172, %cst_36 {dimension_numbers = #tpu.dot_dimension_numbers<[1], [0], [0], [1], [0, 0, 1, 1], [], []>} : vector<16x14xf32>, vector<14x40xf32>, vector<16x40xf32> -> vector<16x40xf32>
    %174 = arith.addf %170, %173 : vector<16x40xf32>
    %c0_37 = arith.constant 0 : index
    %c0_38 = arith.constant 0 : index
    %175 = vector.load %arg8[%c0_37, %c0_38] : memref<16x1xf32, #tpu.memory_space<vmem>>, vector<16x1xf32>
    %176 = vector.broadcast %175 : vector<16x1xf32> to vector<16x40xf32>
    %177 = arith.addf %174, %176 : vector<16x40xf32>
    %cst_39 = arith.constant 0.000000e+00 : f32
    %178 = vector.broadcast %cst_39 : f32 to vector<16x40xf32>
    %179 = arith.maximumf %177, %178 : vector<16x40xf32>
    %c0_40 = arith.constant 0 : index
    %c0_41 = arith.constant 0 : index
    %180 = vector.load %arg9[%c0_40, %c0_41] : memref<16x16xf32, #tpu.memory_space<vmem>>, vector<16x16xf32>
    %cst_42 = arith.constant dense<0.000000e+00> : vector<16x40xf32>
    %181 = tpu.matmul %180, %179, %cst_42 {dimension_numbers = #tpu.dot_dimension_numbers<[1], [0], [0], [1], [0, 0, 1, 1], [], []>} : vector<16x16xf32>, vector<16x40xf32>, vector<16x40xf32> -> vector<16x40xf32>
    %c0_43 = arith.constant 0 : index
    %c0_44 = arith.constant 0 : index
    %182 = vector.load %arg10[%c0_43, %c0_44] : memref<16x1xf32, #tpu.memory_space<vmem>>, vector<16x1xf32>
    %183 = vector.broadcast %182 : vector<16x1xf32> to vector<16x40xf32>
    %184 = arith.addf %181, %183 : vector<16x40xf32>
    %cst_45 = arith.constant 0.000000e+00 : f32
    %185 = vector.broadcast %cst_45 : f32 to vector<16x40xf32>
    %186 = arith.maximumf %184, %185 : vector<16x40xf32>
    %c0_46 = arith.constant 0 : index
    %c0_47 = arith.constant 0 : index
    %187 = vector.load %arg11[%c0_46, %c0_47] : memref<16x40xf32, #tpu.memory_space<vmem>>, vector<16x40xf32>
    tpu.vector_store %arg11[%c0_46, %c0_47], %186 {strides = array<i32>} : memref<16x40xf32, #tpu.memory_space<vmem>>, vector<16x40xf32>,
    return
  }
  func.func @transform_0(%arg0: i32) -> (i32, i32) {
    %c0_i32 = arith.constant 0 : i32
    %c0_i32_0 = arith.constant 0 : i32
    return %c0_i32, %arg0 : i32, i32
  }
  func.func @transform_1(%arg0: i32) -> (i32, i32) {
    %c0_i32 = arith.constant 0 : i32
    %c0_i32_0 = arith.constant 0 : i32
    return %c0_i32, %arg0 : i32, i32
  }
  func.func @transform_2(%arg0: i32) -> (i32, i32) {
    %c0_i32 = arith.constant 0 : i32
    %c0_i32_0 = arith.constant 0 : i32
    return %c0_i32, %arg0 : i32, i32
  }
  func.func @transform_3(%arg0: i32) -> (i32, i32) {
    %c0_i32 = arith.constant 0 : i32
    %c0_i32_0 = arith.constant 0 : i32
    return %c0_i32, %arg0 : i32, i32
  }
  func.func @transform_4(%arg0: i32) -> (i32, i32) {
    %c0_i32 = arith.constant 0 : i32
    %c0_i32_0 = arith.constant 0 : i32
    return %c0_i32, %arg0 : i32, i32
  }
  func.func @transform_5(%arg0: i32) -> (i32, i32) {
    %c0_i32 = arith.constant 0 : i32
    %c0_i32_0 = arith.constant 0 : i32
    %c0_i32_1 = arith.constant 0 : i32
    return %c0_i32, %c0_i32_0 : i32, i32
  }
  func.func @transform_6(%arg0: i32) -> (i32, i32) {
    %c0_i32 = arith.constant 0 : i32
    %c0_i32_0 = arith.constant 0 : i32
    %c0_i32_1 = arith.constant 0 : i32
    return %c0_i32, %c0_i32_0 : i32, i32
  }
  func.func @transform_7(%arg0: i32) -> (i32, i32) {
    %c0_i32 = arith.constant 0 : i32
    %c0_i32_0 = arith.constant 0 : i32
    %c0_i32_1 = arith.constant 0 : i32
    return %c0_i32, %c0_i32_0 : i32, i32
  }
  func.func @transform_8(%arg0: i32) -> (i32, i32) {
    %c0_i32 = arith.constant 0 : i32
    %c0_i32_0 = arith.constant 0 : i32
    %c0_i32_1 = arith.constant 0 : i32
    return %c0_i32, %c0_i32_0 : i32, i32
  }
  func.func @transform_9(%arg0: i32) -> (i32, i32) {
    %c0_i32 = arith.constant 0 : i32
    %c0_i32_0 = arith.constant 0 : i32
    %c0_i32_1 = arith.constant 0 : i32
    return %c0_i32, %c0_i32_0 : i32, i32
  }
  func.func @transform_10(%arg0: i32) -> (i32, i32) {
    %c0_i32 = arith.constant 0 : i32
    %c0_i32_0 = arith.constant 0 : i32
    return %c0_i32, %arg0 : i32, i32
  }
}

module attributes {stable_mosaic.version = 11 : i64} {
  func.func @_gcl_edge_kernel(%arg0: i32, %arg1: memref<3x40xf32, #tpu.memory_space<vmem>>, %arg2: memref<3x40xf32, #tpu.memory_space<vmem>>, %arg3: memref<32x40xf32, #tpu.memory_space<vmem>>, %arg4: memref<32x40xf32, #tpu.memory_space<vmem>>, %arg5: memref<16x40xf32, #tpu.memory_space<vmem>>, %arg6: memref<32x32xf32, #tpu.memory_space<vmem>>, %arg7: memref<32x32xf32, #tpu.memory_space<vmem>>, %arg8: memref<32x1xf32, #tpu.memory_space<vmem>>, %arg9: memref<32x16xf32, #tpu.memory_space<vmem>>, %arg10: memref<32x1xf32, #tpu.memory_space<vmem>>, %arg11: memref<32x32xf32, #tpu.memory_space<vmem>>, %arg12: memref<32x1xf32, #tpu.memory_space<vmem>>, %arg13: memref<32x32xf32, #tpu.memory_space<vmem>>, %arg14: memref<32x1xf32, #tpu.memory_space<vmem>>, %arg15: memref<3x32xf32, #tpu.memory_space<vmem>>, %arg16: memref<32x40xf32, #tpu.memory_space<vmem>>, %arg17: memref<3x40xf32, #tpu.memory_space<vmem>>) attributes {dimension_semantics = [#tpu.dimension_semantics<parallel>], iteration_bounds = array<i64: 1>, scalar_prefetch = 0 : i64, scratch_operands = 0 : i64, tpu.core_type = #tpu.core_type<tc>, window_params = [{transform_indices = @transform_0, window_bounds = array<i64: 3, 40>}, {transform_indices = @transform_1, window_bounds = array<i64: 3, 40>}, {transform_indices = @transform_2, window_bounds = array<i64: 32, 40>}, {transform_indices = @transform_3, window_bounds = array<i64: 32, 40>}, {transform_indices = @transform_4, window_bounds = array<i64: 16, 40>}, {pipeline_mode = #tpu.pipeline_mode<synchronous>, transform_indices = @transform_5, window_bounds = array<i64: 32, 32>}, {pipeline_mode = #tpu.pipeline_mode<synchronous>, transform_indices = @transform_6, window_bounds = array<i64: 32, 32>}, {pipeline_mode = #tpu.pipeline_mode<synchronous>, transform_indices = @transform_7, window_bounds = array<i64: 32, 1>}, {pipeline_mode = #tpu.pipeline_mode<synchronous>, transform_indices = @transform_8, window_bounds = array<i64: 32, 16>}, {pipeline_mode = #tpu.pipeline_mode<synchronous>, transform_indices = @transform_9, window_bounds = array<i64: 32, 1>}, {pipeline_mode = #tpu.pipeline_mode<synchronous>, transform_indices = @transform_10, window_bounds = array<i64: 32, 32>}, {pipeline_mode = #tpu.pipeline_mode<synchronous>, transform_indices = @transform_11, window_bounds = array<i64: 32, 1>}, {pipeline_mode = #tpu.pipeline_mode<synchronous>, transform_indices = @transform_12, window_bounds = array<i64: 32, 32>}, {pipeline_mode = #tpu.pipeline_mode<synchronous>, transform_indices = @transform_13, window_bounds = array<i64: 32, 1>}, {pipeline_mode = #tpu.pipeline_mode<synchronous>, transform_indices = @transform_14, window_bounds = array<i64: 3, 32>}, {transform_indices = @transform_15, window_bounds = array<i64: 32, 40>}, {transform_indices = @transform_16, window_bounds = array<i64: 3, 40>}]} {
    %c0 = arith.constant 0 : index
    %c0_0 = arith.constant 0 : index
    %0 = vector.load %arg1[%c0, %c0_0] : memref<3x40xf32, #tpu.memory_space<vmem>>, vector<3x40xf32>
    %c0_1 = arith.constant 0 : index
    %c0_2 = arith.constant 0 : index
    %1 = vector.load %arg2[%c0_1, %c0_2] : memref<3x40xf32, #tpu.memory_space<vmem>>, vector<3x40xf32>
    %2 = vector.extract_strided_slice %0 {offsets = [0, 0], sizes = [1, 40], strides = [1, 1]} : vector<3x40xf32> to vector<1x40xf32>
    %3 = vector.extract_strided_slice %0 {offsets = [1, 0], sizes = [1, 40], strides = [1, 1]} : vector<3x40xf32> to vector<1x40xf32>
    %4 = vector.extract_strided_slice %0 {offsets = [2, 0], sizes = [1, 40], strides = [1, 1]} : vector<3x40xf32> to vector<1x40xf32>
    %5 = vector.extract_strided_slice %1 {offsets = [0, 0], sizes = [1, 40], strides = [1, 1]} : vector<3x40xf32> to vector<1x40xf32>
    %6 = vector.extract_strided_slice %1 {offsets = [1, 0], sizes = [1, 40], strides = [1, 1]} : vector<3x40xf32> to vector<1x40xf32>
    %7 = vector.extract_strided_slice %1 {offsets = [2, 0], sizes = [1, 40], strides = [1, 1]} : vector<3x40xf32> to vector<1x40xf32>
    %8 = arith.subf %2, %5 : vector<1x40xf32>
    %9 = arith.subf %3, %6 : vector<1x40xf32>
    %10 = arith.subf %4, %7 : vector<1x40xf32>
    %11 = arith.mulf %8, %8 : vector<1x40xf32>
    %12 = arith.mulf %9, %9 : vector<1x40xf32>
    %13 = arith.addf %11, %12 : vector<1x40xf32>
    %14 = arith.mulf %10, %10 : vector<1x40xf32>
    %15 = arith.addf %13, %14 : vector<1x40xf32>
    %16 = arith.mulf %3, %7 : vector<1x40xf32>
    %17 = arith.mulf %4, %6 : vector<1x40xf32>
    %18 = arith.subf %16, %17 : vector<1x40xf32>
    %19 = arith.mulf %4, %5 : vector<1x40xf32>
    %20 = arith.mulf %2, %7 : vector<1x40xf32>
    %21 = arith.subf %19, %20 : vector<1x40xf32>
    %22 = arith.mulf %2, %6 : vector<1x40xf32>
    %23 = arith.mulf %3, %5 : vector<1x40xf32>
    %24 = arith.subf %22, %23 : vector<1x40xf32>
    %25 = math.sqrt %15 : vector<1x40xf32>
    %cst = arith.constant 1.000000e+00 : f32
    %26 = vector.broadcast %cst : f32 to vector<1x40xf32>
    %27 = arith.addf %25, %26 : vector<1x40xf32>
    %28 = arith.divf %8, %27 : vector<1x40xf32>
    %29 = arith.divf %9, %27 : vector<1x40xf32>
    %30 = arith.divf %10, %27 : vector<1x40xf32>
    %31 = arith.mulf %18, %18 : vector<1x40xf32>
    %32 = arith.mulf %21, %21 : vector<1x40xf32>
    %33 = arith.addf %31, %32 : vector<1x40xf32>
    %34 = arith.mulf %24, %24 : vector<1x40xf32>
    %35 = arith.addf %33, %34 : vector<1x40xf32>
    %36 = math.sqrt %35 : vector<1x40xf32>
    %cst_3 = arith.constant 1.000000e+00 : f32
    %37 = vector.broadcast %cst_3 : f32 to vector<1x40xf32>
    %38 = arith.addf %36, %37 : vector<1x40xf32>
    %39 = arith.divf %18, %38 : vector<1x40xf32>
    %40 = arith.divf %21, %38 : vector<1x40xf32>
    %41 = arith.divf %24, %38 : vector<1x40xf32>
    %42 = arith.mulf %29, %41 : vector<1x40xf32>
    %43 = arith.mulf %30, %40 : vector<1x40xf32>
    %44 = arith.subf %42, %43 : vector<1x40xf32>
    %45 = arith.mulf %30, %39 : vector<1x40xf32>
    %46 = arith.mulf %28, %41 : vector<1x40xf32>
    %47 = arith.subf %45, %46 : vector<1x40xf32>
    %48 = arith.mulf %28, %40 : vector<1x40xf32>
    %49 = arith.mulf %29, %39 : vector<1x40xf32>
    %50 = arith.subf %48, %49 : vector<1x40xf32>
    %c0_4 = arith.constant 0 : index
    %c0_5 = arith.constant 0 : index
    %51 = vector.load %arg6[%c0_4, %c0_5] : memref<32x32xf32, #tpu.memory_space<vmem>>, vector<32x32xf32>
    %c0_6 = arith.constant 0 : index
    %c0_7 = arith.constant 0 : index
    %52 = vector.load %arg3[%c0_6, %c0_7] : memref<32x40xf32, #tpu.memory_space<vmem>>, vector<32x40xf32>
    %cst_8 = arith.constant dense<0.000000e+00> : vector<32x40xf32>
    %53 = tpu.matmul %51, %52, %cst_8 {dimension_numbers = #tpu.dot_dimension_numbers<[1], [0], [0], [1], [0, 0, 1, 1], [], []>} : vector<32x32xf32>, vector<32x40xf32>, vector<32x40xf32> -> vector<32x40xf32>
    %c0_9 = arith.constant 0 : index
    %c0_10 = arith.constant 0 : index
    %54 = vector.load %arg7[%c0_9, %c0_10] : memref<32x32xf32, #tpu.memory_space<vmem>>, vector<32x32xf32>
    %c0_11 = arith.constant 0 : index
    %c0_12 = arith.constant 0 : index
    %55 = vector.load %arg4[%c0_11, %c0_12] : memref<32x40xf32, #tpu.memory_space<vmem>>, vector<32x40xf32>
    %cst_13 = arith.constant dense<0.000000e+00> : vector<32x40xf32>
    %56 = tpu.matmul %54, %55, %cst_13 {dimension_numbers = #tpu.dot_dimension_numbers<[1], [0], [0], [1], [0, 0, 1, 1], [], []>} : vector<32x32xf32>, vector<32x40xf32>, vector<32x40xf32> -> vector<32x40xf32>
    %57 = arith.addf %53, %56 : vector<32x40xf32>
    %c0_14 = arith.constant 0 : index
    %c0_15 = arith.constant 0 : index
    %58 = vector.load %arg9[%c0_14, %c0_15] : memref<32x16xf32, #tpu.memory_space<vmem>>, vector<32x16xf32>
    %c0_16 = arith.constant 0 : index
    %c0_17 = arith.constant 0 : index
    %59 = vector.load %arg5[%c0_16, %c0_17] : memref<16x40xf32, #tpu.memory_space<vmem>>, vector<16x40xf32>
    %cst_18 = arith.constant dense<0.000000e+00> : vector<32x40xf32>
    %60 = tpu.matmul %58, %59, %cst_18 {dimension_numbers = #tpu.dot_dimension_numbers<[1], [0], [0], [1], [0, 0, 1, 1], [], []>} : vector<32x16xf32>, vector<16x40xf32>, vector<32x40xf32> -> vector<32x40xf32>
    %61 = arith.addf %57, %60 : vector<32x40xf32>
    %c0_19 = arith.constant 0 : index
    %c0_20 = arith.constant 0 : index
    %62 = vector.load %arg8[%c0_19, %c0_20] : memref<32x1xf32, #tpu.memory_space<vmem>>, vector<32x1xf32>
    %63 = vector.broadcast %62 : vector<32x1xf32> to vector<32x40xf32>
    %64 = vector.broadcast %15 : vector<1x40xf32> to vector<32x40xf32>
    %65 = arith.mulf %63, %64 : vector<32x40xf32>
    %66 = arith.addf %61, %65 : vector<32x40xf32>
    %c0_21 = arith.constant 0 : index
    %c0_22 = arith.constant 0 : index
    %67 = vector.load %arg10[%c0_21, %c0_22] : memref<32x1xf32, #tpu.memory_space<vmem>>, vector<32x1xf32>
    %68 = vector.broadcast %67 : vector<32x1xf32> to vector<32x40xf32>
    %69 = arith.addf %66, %68 : vector<32x40xf32>
    %cst_23 = arith.constant 0.000000e+00 : f32
    %70 = vector.broadcast %cst_23 : f32 to vector<32x40xf32>
    %71 = arith.maximumf %69, %70 : vector<32x40xf32>
    %c0_24 = arith.constant 0 : index
    %c0_25 = arith.constant 0 : index
    %72 = vector.load %arg11[%c0_24, %c0_25] : memref<32x32xf32, #tpu.memory_space<vmem>>, vector<32x32xf32>
    %cst_26 = arith.constant dense<0.000000e+00> : vector<32x40xf32>
    %73 = tpu.matmul %72, %71, %cst_26 {dimension_numbers = #tpu.dot_dimension_numbers<[1], [0], [0], [1], [0, 0, 1, 1], [], []>} : vector<32x32xf32>, vector<32x40xf32>, vector<32x40xf32> -> vector<32x40xf32>
    %c0_27 = arith.constant 0 : index
    %c0_28 = arith.constant 0 : index
    %74 = vector.load %arg12[%c0_27, %c0_28] : memref<32x1xf32, #tpu.memory_space<vmem>>, vector<32x1xf32>
    %75 = vector.broadcast %74 : vector<32x1xf32> to vector<32x40xf32>
    %76 = arith.addf %73, %75 : vector<32x40xf32>
    %cst_29 = arith.constant 0.000000e+00 : f32
    %77 = vector.broadcast %cst_29 : f32 to vector<32x40xf32>
    %78 = arith.maximumf %76, %77 : vector<32x40xf32>
    %c0_30 = arith.constant 0 : index
    %c0_31 = arith.constant 0 : index
    %79 = vector.load %arg16[%c0_30, %c0_31] : memref<32x40xf32, #tpu.memory_space<vmem>>, vector<32x40xf32>
    tpu.vector_store %arg16[%c0_30, %c0_31], %78 {strides = array<i32>} : memref<32x40xf32, #tpu.memory_space<vmem>>, vector<32x40xf32>,
    %c0_32 = arith.constant 0 : index
    %c0_33 = arith.constant 0 : index
    %80 = vector.load %arg13[%c0_32, %c0_33] : memref<32x32xf32, #tpu.memory_space<vmem>>, vector<32x32xf32>
    %cst_34 = arith.constant dense<0.000000e+00> : vector<32x40xf32>
    %81 = tpu.matmul %80, %78, %cst_34 {dimension_numbers = #tpu.dot_dimension_numbers<[1], [0], [0], [1], [0, 0, 1, 1], [], []>} : vector<32x32xf32>, vector<32x40xf32>, vector<32x40xf32> -> vector<32x40xf32>
    %c0_35 = arith.constant 0 : index
    %c0_36 = arith.constant 0 : index
    %82 = vector.load %arg14[%c0_35, %c0_36] : memref<32x1xf32, #tpu.memory_space<vmem>>, vector<32x1xf32>
    %83 = vector.broadcast %82 : vector<32x1xf32> to vector<32x40xf32>
    %84 = arith.addf %81, %83 : vector<32x40xf32>
    %cst_37 = arith.constant 0.000000e+00 : f32
    %85 = vector.broadcast %cst_37 : f32 to vector<32x40xf32>
    %86 = arith.maximumf %84, %85 : vector<32x40xf32>
    %c0_38 = arith.constant 0 : index
    %c0_39 = arith.constant 0 : index
    %87 = vector.load %arg15[%c0_38, %c0_39] : memref<3x32xf32, #tpu.memory_space<vmem>>, vector<3x32xf32>
    %cst_40 = arith.constant dense<0.000000e+00> : vector<3x40xf32>
    %88 = tpu.matmul %87, %86, %cst_40 {dimension_numbers = #tpu.dot_dimension_numbers<[1], [0], [0], [1], [0, 0, 1, 1], [], []>} : vector<3x32xf32>, vector<32x40xf32>, vector<3x40xf32> -> vector<3x40xf32>
    %89 = vector.extract_strided_slice %88 {offsets = [0, 0], sizes = [1, 40], strides = [1, 1]} : vector<3x40xf32> to vector<1x40xf32>
    %90 = vector.extract_strided_slice %88 {offsets = [1, 0], sizes = [1, 40], strides = [1, 1]} : vector<3x40xf32> to vector<1x40xf32>
    %91 = vector.extract_strided_slice %88 {offsets = [2, 0], sizes = [1, 40], strides = [1, 1]} : vector<3x40xf32> to vector<1x40xf32>
    %92 = arith.mulf %28, %89 : vector<1x40xf32>
    %93 = arith.mulf %39, %90 : vector<1x40xf32>
    %94 = arith.addf %92, %93 : vector<1x40xf32>
    %95 = arith.mulf %44, %91 : vector<1x40xf32>
    %96 = arith.addf %94, %95 : vector<1x40xf32>
    %cst_41 = arith.constant -1.000000e+02 : f32
    %cst_42 = arith.constant 1.000000e+02 : f32
    %97 = vector.broadcast %cst_41 : f32 to vector<1x40xf32>
    %98 = arith.maximumf %97, %96 : vector<1x40xf32>
    %99 = vector.broadcast %cst_42 : f32 to vector<1x40xf32>
    %100 = arith.minimumf %99, %98 : vector<1x40xf32>
    %c0_43 = arith.constant 0 : index
    %c0_44 = arith.constant 0 : index
    %101 = vector.load %arg17[%c0_43, %c0_44] : memref<3x40xf32, #tpu.memory_space<vmem>>, vector<1x40xf32>
    tpu.vector_store %arg17[%c0_43, %c0_44], %100 {strides = array<i32>} : memref<3x40xf32, #tpu.memory_space<vmem>>, vector<1x40xf32>,
    %102 = arith.mulf %29, %89 : vector<1x40xf32>
    %103 = arith.mulf %40, %90 : vector<1x40xf32>
    %104 = arith.addf %102, %103 : vector<1x40xf32>
    %105 = arith.mulf %47, %91 : vector<1x40xf32>
    %106 = arith.addf %104, %105 : vector<1x40xf32>
    %cst_45 = arith.constant -1.000000e+02 : f32
    %cst_46 = arith.constant 1.000000e+02 : f32
    %107 = vector.broadcast %cst_45 : f32 to vector<1x40xf32>
    %108 = arith.maximumf %107, %106 : vector<1x40xf32>
    %109 = vector.broadcast %cst_46 : f32 to vector<1x40xf32>
    %110 = arith.minimumf %109, %108 : vector<1x40xf32>
    %c1 = arith.constant 1 : index
    %c0_47 = arith.constant 0 : index
    %111 = vector.load %arg17[%c1, %c0_47] : memref<3x40xf32, #tpu.memory_space<vmem>>, vector<1x40xf32>
    tpu.vector_store %arg17[%c1, %c0_47], %110 {strides = array<i32>} : memref<3x40xf32, #tpu.memory_space<vmem>>, vector<1x40xf32>,
    %112 = arith.mulf %30, %89 : vector<1x40xf32>
    %113 = arith.mulf %41, %90 : vector<1x40xf32>
    %114 = arith.addf %112, %113 : vector<1x40xf32>
    %115 = arith.mulf %50, %91 : vector<1x40xf32>
    %116 = arith.addf %114, %115 : vector<1x40xf32>
    %cst_48 = arith.constant -1.000000e+02 : f32
    %cst_49 = arith.constant 1.000000e+02 : f32
    %117 = vector.broadcast %cst_48 : f32 to vector<1x40xf32>
    %118 = arith.maximumf %117, %116 : vector<1x40xf32>
    %119 = vector.broadcast %cst_49 : f32 to vector<1x40xf32>
    %120 = arith.minimumf %119, %118 : vector<1x40xf32>
    %c2 = arith.constant 2 : index
    %c0_50 = arith.constant 0 : index
    %121 = vector.load %arg17[%c2, %c0_50] : memref<3x40xf32, #tpu.memory_space<vmem>>, vector<1x40xf32>
    tpu.vector_store %arg17[%c2, %c0_50], %120 {strides = array<i32>} : memref<3x40xf32, #tpu.memory_space<vmem>>, vector<1x40xf32>,
    return
  }
  func.func @transform_0(%arg0: i32) -> (i32, i32) {
    %c0_i32 = arith.constant 0 : i32
    %c0_i32_0 = arith.constant 0 : i32
    return %c0_i32, %arg0 : i32, i32
  }
  func.func @transform_1(%arg0: i32) -> (i32, i32) {
    %c0_i32 = arith.constant 0 : i32
    %c0_i32_0 = arith.constant 0 : i32
    return %c0_i32, %arg0 : i32, i32
  }
  func.func @transform_2(%arg0: i32) -> (i32, i32) {
    %c0_i32 = arith.constant 0 : i32
    %c0_i32_0 = arith.constant 0 : i32
    return %c0_i32, %arg0 : i32, i32
  }
  func.func @transform_3(%arg0: i32) -> (i32, i32) {
    %c0_i32 = arith.constant 0 : i32
    %c0_i32_0 = arith.constant 0 : i32
    return %c0_i32, %arg0 : i32, i32
  }
  func.func @transform_4(%arg0: i32) -> (i32, i32) {
    %c0_i32 = arith.constant 0 : i32
    %c0_i32_0 = arith.constant 0 : i32
    return %c0_i32, %arg0 : i32, i32
  }
  func.func @transform_5(%arg0: i32) -> (i32, i32) {
    %c0_i32 = arith.constant 0 : i32
    %c0_i32_0 = arith.constant 0 : i32
    %c0_i32_1 = arith.constant 0 : i32
    return %c0_i32, %c0_i32_0 : i32, i32
  }
  func.func @transform_6(%arg0: i32) -> (i32, i32) {
    %c0_i32 = arith.constant 0 : i32
    %c0_i32_0 = arith.constant 0 : i32
    %c0_i32_1 = arith.constant 0 : i32
    return %c0_i32, %c0_i32_0 : i32, i32
  }
  func.func @transform_7(%arg0: i32) -> (i32, i32) {
    %c0_i32 = arith.constant 0 : i32
    %c0_i32_0 = arith.constant 0 : i32
    %c0_i32_1 = arith.constant 0 : i32
    return %c0_i32, %c0_i32_0 : i32, i32
  }
  func.func @transform_8(%arg0: i32) -> (i32, i32) {
    %c0_i32 = arith.constant 0 : i32
    %c0_i32_0 = arith.constant 0 : i32
    %c0_i32_1 = arith.constant 0 : i32
    return %c0_i32, %c0_i32_0 : i32, i32
  }
  func.func @transform_9(%arg0: i32) -> (i32, i32) {
    %c0_i32 = arith.constant 0 : i32
    %c0_i32_0 = arith.constant 0 : i32
    %c0_i32_1 = arith.constant 0 : i32
    return %c0_i32, %c0_i32_0 : i32, i32
  }
  func.func @transform_10(%arg0: i32) -> (i32, i32) {
    %c0_i32 = arith.constant 0 : i32
    %c0_i32_0 = arith.constant 0 : i32
    %c0_i32_1 = arith.constant 0 : i32
    return %c0_i32, %c0_i32_0 : i32, i32
  }
  func.func @transform_11(%arg0: i32) -> (i32, i32) {
    %c0_i32 = arith.constant 0 : i32
    %c0_i32_0 = arith.constant 0 : i32
    %c0_i32_1 = arith.constant 0 : i32
    return %c0_i32, %c0_i32_0 : i32, i32
  }
  func.func @transform_12(%arg0: i32) -> (i32, i32) {
    %c0_i32 = arith.constant 0 : i32
    %c0_i32_0 = arith.constant 0 : i32
    %c0_i32_1 = arith.constant 0 : i32
    return %c0_i32, %c0_i32_0 : i32, i32
  }
  func.func @transform_13(%arg0: i32) -> (i32, i32) {
    %c0_i32 = arith.constant 0 : i32
    %c0_i32_0 = arith.constant 0 : i32
    %c0_i32_1 = arith.constant 0 : i32
    return %c0_i32, %c0_i32_0 : i32, i32
  }
  func.func @transform_14(%arg0: i32) -> (i32, i32) {
    %c0_i32 = arith.constant 0 : i32
    %c0_i32_0 = arith.constant 0 : i32
    %c0_i32_1 = arith.constant 0 : i32
    return %c0_i32, %c0_i32_0 : i32, i32
  }
  func.func @transform_15(%arg0: i32) -> (i32, i32) {
    %c0_i32 = arith.constant 0 : i32
    %c0_i32_0 = arith.constant 0 : i32
    return %c0_i32, %arg0 : i32, i32
  }
  func.func @transform_16(%arg0: i32) -> (i32, i32) {
    %c0_i32 = arith.constant 0 : i32
    %c0_i32_0 = arith.constant 0 : i32
    return %c0_i32, %arg0 : i32, i32
  }
}

module attributes {stable_mosaic.version = 11 : i64} {
  func.func @_gcl_node_kernel(%arg0: i32, %arg1: memref<32x10xf32, #tpu.memory_space<vmem>>, %arg2: memref<32x10xf32, #tpu.memory_space<vmem>>, %arg3: memref<3x10xf32, #tpu.memory_space<vmem>>, %arg4: memref<32x32xf32, #tpu.memory_space<vmem>>, %arg5: memref<32x32xf32, #tpu.memory_space<vmem>>, %arg6: memref<32x1xf32, #tpu.memory_space<vmem>>, %arg7: memref<32x32xf32, #tpu.memory_space<vmem>>, %arg8: memref<32x1xf32, #tpu.memory_space<vmem>>, %arg9: memref<32x32xf32, #tpu.memory_space<vmem>>, %arg10: memref<32x1xf32, #tpu.memory_space<vmem>>, %arg11: memref<1x32xf32, #tpu.memory_space<vmem>>, %arg12: memref<1x1xf32, #tpu.memory_space<vmem>>, %arg13: memref<32x10xf32, #tpu.memory_space<vmem>>, %arg14: memref<3x10xf32, #tpu.memory_space<vmem>>) attributes {dimension_semantics = [#tpu.dimension_semantics<parallel>], iteration_bounds = array<i64: 1>, scalar_prefetch = 0 : i64, scratch_operands = 0 : i64, tpu.core_type = #tpu.core_type<tc>, window_params = [{transform_indices = @transform_0, window_bounds = array<i64: 32, 10>}, {transform_indices = @transform_1, window_bounds = array<i64: 32, 10>}, {transform_indices = @transform_2, window_bounds = array<i64: 3, 10>}, {pipeline_mode = #tpu.pipeline_mode<synchronous>, transform_indices = @transform_3, window_bounds = array<i64: 32, 32>}, {pipeline_mode = #tpu.pipeline_mode<synchronous>, transform_indices = @transform_4, window_bounds = array<i64: 32, 32>}, {pipeline_mode = #tpu.pipeline_mode<synchronous>, transform_indices = @transform_5, window_bounds = array<i64: 32, 1>}, {pipeline_mode = #tpu.pipeline_mode<synchronous>, transform_indices = @transform_6, window_bounds = array<i64: 32, 32>}, {pipeline_mode = #tpu.pipeline_mode<synchronous>, transform_indices = @transform_7, window_bounds = array<i64: 32, 1>}, {pipeline_mode = #tpu.pipeline_mode<synchronous>, transform_indices = @transform_8, window_bounds = array<i64: 32, 32>}, {pipeline_mode = #tpu.pipeline_mode<synchronous>, transform_indices = @transform_9, window_bounds = array<i64: 32, 1>}, {pipeline_mode = #tpu.pipeline_mode<synchronous>, transform_indices = @transform_10, window_bounds = array<i64: 1, 32>}, {pipeline_mode = #tpu.pipeline_mode<synchronous>, transform_indices = @transform_11, window_bounds = array<i64: 1, 1>}, {transform_indices = @transform_12, window_bounds = array<i64: 32, 10>}, {transform_indices = @transform_13, window_bounds = array<i64: 3, 10>}]} {
    %c0 = arith.constant 0 : index
    %c0_0 = arith.constant 0 : index
    %0 = vector.load %arg1[%c0, %c0_0] : memref<32x10xf32, #tpu.memory_space<vmem>>, vector<32x10xf32>
    %c0_1 = arith.constant 0 : index
    %c0_2 = arith.constant 0 : index
    %1 = vector.load %arg4[%c0_1, %c0_2] : memref<32x32xf32, #tpu.memory_space<vmem>>, vector<32x32xf32>
    %cst = arith.constant dense<0.000000e+00> : vector<32x10xf32>
    %2 = tpu.matmul %1, %0, %cst {dimension_numbers = #tpu.dot_dimension_numbers<[1], [0], [0], [1], [0, 0, 1, 1], [], []>} : vector<32x32xf32>, vector<32x10xf32>, vector<32x10xf32> -> vector<32x10xf32>
    %c0_3 = arith.constant 0 : index
    %c0_4 = arith.constant 0 : index
    %3 = vector.load %arg5[%c0_3, %c0_4] : memref<32x32xf32, #tpu.memory_space<vmem>>, vector<32x32xf32>
    %c0_5 = arith.constant 0 : index
    %c0_6 = arith.constant 0 : index
    %4 = vector.load %arg2[%c0_5, %c0_6] : memref<32x10xf32, #tpu.memory_space<vmem>>, vector<32x10xf32>
    %cst_7 = arith.constant dense<0.000000e+00> : vector<32x10xf32>
    %5 = tpu.matmul %3, %4, %cst_7 {dimension_numbers = #tpu.dot_dimension_numbers<[1], [0], [0], [1], [0, 0, 1, 1], [], []>} : vector<32x32xf32>, vector<32x10xf32>, vector<32x10xf32> -> vector<32x10xf32>
    %6 = arith.addf %2, %5 : vector<32x10xf32>
    %c0_8 = arith.constant 0 : index
    %c0_9 = arith.constant 0 : index
    %7 = vector.load %arg6[%c0_8, %c0_9] : memref<32x1xf32, #tpu.memory_space<vmem>>, vector<32x1xf32>
    %8 = vector.broadcast %7 : vector<32x1xf32> to vector<32x10xf32>
    %9 = arith.addf %6, %8 : vector<32x10xf32>
    %cst_10 = arith.constant 0.000000e+00 : f32
    %10 = vector.broadcast %cst_10 : f32 to vector<32x10xf32>
    %11 = arith.maximumf %9, %10 : vector<32x10xf32>
    %c0_11 = arith.constant 0 : index
    %c0_12 = arith.constant 0 : index
    %12 = vector.load %arg7[%c0_11, %c0_12] : memref<32x32xf32, #tpu.memory_space<vmem>>, vector<32x32xf32>
    %cst_13 = arith.constant dense<0.000000e+00> : vector<32x10xf32>
    %13 = tpu.matmul %12, %11, %cst_13 {dimension_numbers = #tpu.dot_dimension_numbers<[1], [0], [0], [1], [0, 0, 1, 1], [], []>} : vector<32x32xf32>, vector<32x10xf32>, vector<32x10xf32> -> vector<32x10xf32>
    %c0_14 = arith.constant 0 : index
    %c0_15 = arith.constant 0 : index
    %14 = vector.load %arg8[%c0_14, %c0_15] : memref<32x1xf32, #tpu.memory_space<vmem>>, vector<32x1xf32>
    %15 = vector.broadcast %14 : vector<32x1xf32> to vector<32x10xf32>
    %16 = arith.addf %13, %15 : vector<32x10xf32>
    %17 = arith.addf %0, %16 : vector<32x10xf32>
    %c0_16 = arith.constant 0 : index
    %c0_17 = arith.constant 0 : index
    %18 = vector.load %arg13[%c0_16, %c0_17] : memref<32x10xf32, #tpu.memory_space<vmem>>, vector<32x10xf32>
    tpu.vector_store %arg13[%c0_16, %c0_17], %17 {strides = array<i32>} : memref<32x10xf32, #tpu.memory_space<vmem>>, vector<32x10xf32>,
    %c0_18 = arith.constant 0 : index
    %c0_19 = arith.constant 0 : index
    %19 = vector.load %arg9[%c0_18, %c0_19] : memref<32x32xf32, #tpu.memory_space<vmem>>, vector<32x32xf32>
    %cst_20 = arith.constant dense<0.000000e+00> : vector<32x10xf32>
    %20 = tpu.matmul %19, %0, %cst_20 {dimension_numbers = #tpu.dot_dimension_numbers<[1], [0], [0], [1], [0, 0, 1, 1], [], []>} : vector<32x32xf32>, vector<32x10xf32>, vector<32x10xf32> -> vector<32x10xf32>
    %c0_21 = arith.constant 0 : index
    %c0_22 = arith.constant 0 : index
    %21 = vector.load %arg10[%c0_21, %c0_22] : memref<32x1xf32, #tpu.memory_space<vmem>>, vector<32x1xf32>
    %22 = vector.broadcast %21 : vector<32x1xf32> to vector<32x10xf32>
    %23 = arith.addf %20, %22 : vector<32x10xf32>
    %cst_23 = arith.constant 0.000000e+00 : f32
    %24 = vector.broadcast %cst_23 : f32 to vector<32x10xf32>
    %25 = arith.maximumf %23, %24 : vector<32x10xf32>
    %c0_24 = arith.constant 0 : index
    %c0_25 = arith.constant 0 : index
    %26 = vector.load %arg11[%c0_24, %c0_25] : memref<1x32xf32, #tpu.memory_space<vmem>>, vector<1x32xf32>
    %cst_26 = arith.constant dense<0.000000e+00> : vector<1x10xf32>
    %27 = tpu.matmul %26, %25, %cst_26 {dimension_numbers = #tpu.dot_dimension_numbers<[1], [0], [0], [1], [0, 0, 1, 1], [], []>} : vector<1x32xf32>, vector<32x10xf32>, vector<1x10xf32> -> vector<1x10xf32>
    %c0_27 = arith.constant 0 : index
    %c0_28 = arith.constant 0 : index
    %28 = vector.load %arg12[%c0_27, %c0_28] : memref<1x1xf32, #tpu.memory_space<vmem>>, vector<1x1xf32>
    %29 = vector.broadcast %28 : vector<1x1xf32> to vector<1x10xf32>
    %30 = arith.addf %27, %29 : vector<1x10xf32>
    %c0_29 = arith.constant 0 : index
    %c0_30 = arith.constant 0 : index
    %31 = vector.load %arg3[%c0_29, %c0_30] : memref<3x10xf32, #tpu.memory_space<vmem>>, vector<3x10xf32>
    %32 = vector.broadcast %30 : vector<1x10xf32> to vector<3x10xf32>
    %33 = arith.mulf %32, %31 : vector<3x10xf32>
    %c0_31 = arith.constant 0 : index
    %c0_32 = arith.constant 0 : index
    %34 = vector.load %arg14[%c0_31, %c0_32] : memref<3x10xf32, #tpu.memory_space<vmem>>, vector<3x10xf32>
    tpu.vector_store %arg14[%c0_31, %c0_32], %33 {strides = array<i32>} : memref<3x10xf32, #tpu.memory_space<vmem>>, vector<3x10xf32>,
    return
  }
  func.func @transform_0(%arg0: i32) -> (i32, i32) {
    %c0_i32 = arith.constant 0 : i32
    %c0_i32_0 = arith.constant 0 : i32
    return %c0_i32, %arg0 : i32, i32
  }
  func.func @transform_1(%arg0: i32) -> (i32, i32) {
    %c0_i32 = arith.constant 0 : i32
    %c0_i32_0 = arith.constant 0 : i32
    return %c0_i32, %arg0 : i32, i32
  }
  func.func @transform_2(%arg0: i32) -> (i32, i32) {
    %c0_i32 = arith.constant 0 : i32
    %c0_i32_0 = arith.constant 0 : i32
    return %c0_i32, %arg0 : i32, i32
  }
  func.func @transform_3(%arg0: i32) -> (i32, i32) {
    %c0_i32 = arith.constant 0 : i32
    %c0_i32_0 = arith.constant 0 : i32
    %c0_i32_1 = arith.constant 0 : i32
    return %c0_i32, %c0_i32_0 : i32, i32
  }
  func.func @transform_4(%arg0: i32) -> (i32, i32) {
    %c0_i32 = arith.constant 0 : i32
    %c0_i32_0 = arith.constant 0 : i32
    %c0_i32_1 = arith.constant 0 : i32
    return %c0_i32, %c0_i32_0 : i32, i32
  }
  func.func @transform_5(%arg0: i32) -> (i32, i32) {
    %c0_i32 = arith.constant 0 : i32
    %c0_i32_0 = arith.constant 0 : i32
    %c0_i32_1 = arith.constant 0 : i32
    return %c0_i32, %c0_i32_0 : i32, i32
  }
  func.func @transform_6(%arg0: i32) -> (i32, i32) {
    %c0_i32 = arith.constant 0 : i32
    %c0_i32_0 = arith.constant 0 : i32
    %c0_i32_1 = arith.constant 0 : i32
    return %c0_i32, %c0_i32_0 : i32, i32
  }
  func.func @transform_7(%arg0: i32) -> (i32, i32) {
    %c0_i32 = arith.constant 0 : i32
    %c0_i32_0 = arith.constant 0 : i32
    %c0_i32_1 = arith.constant 0 : i32
    return %c0_i32, %c0_i32_0 : i32, i32
  }
  func.func @transform_8(%arg0: i32) -> (i32, i32) {
    %c0_i32 = arith.constant 0 : i32
    %c0_i32_0 = arith.constant 0 : i32
    %c0_i32_1 = arith.constant 0 : i32
    return %c0_i32, %c0_i32_0 : i32, i32
  }
  func.func @transform_9(%arg0: i32) -> (i32, i32) {
    %c0_i32 = arith.constant 0 : i32
    %c0_i32_0 = arith.constant 0 : i32
    %c0_i32_1 = arith.constant 0 : i32
    return %c0_i32, %c0_i32_0 : i32, i32
  }
  func.func @transform_10(%arg0: i32) -> (i32, i32) {
    %c0_i32 = arith.constant 0 : i32
    %c0_i32_0 = arith.constant 0 : i32
    %c0_i32_1 = arith.constant 0 : i32
    return %c0_i32, %c0_i32_0 : i32, i32
  }
  func.func @transform_11(%arg0: i32) -> (i32, i32) {
    %c0_i32 = arith.constant 0 : i32
    %c0_i32_0 = arith.constant 0 : i32
    %c0_i32_1 = arith.constant 0 : i32
    return %c0_i32, %c0_i32_0 : i32, i32
  }
  func.func @transform_12(%arg0: i32) -> (i32, i32) {
    %c0_i32 = arith.constant 0 : i32
    %c0_i32_0 = arith.constant 0 : i32
    return %c0_i32, %arg0 : i32, i32
  }
  func.func @transform_13(%arg0: i32) -> (i32, i32) {
    %c0_i32 = arith.constant 0 : i32
    %c0_i32_0 = arith.constant 0 : i32
    return %c0_i32, %arg0 : i32, i32
  }
}

module attributes {stable_mosaic.version = 11 : i64} {
  func.func @_cdist_kernel(%arg0: memref<10x1xf32, #tpu.memory_space<vmem>>, %arg1: memref<10x1xf32, #tpu.memory_space<vmem>>, %arg2: memref<10x1xf32, #tpu.memory_space<vmem>>, %arg3: memref<3x10xf32, #tpu.memory_space<vmem>>, %arg4: memref<10x10xf32, #tpu.memory_space<vmem>>) attributes {dimension_semantics = [], scalar_prefetch = 0 : i64, scratch_operands = 0 : i64, tpu.core_type = #tpu.core_type<tc>} {
    %c0 = arith.constant 0 : index
    %c0_0 = arith.constant 0 : index
    %0 = vector.load %arg3[%c0, %c0_0] : memref<3x10xf32, #tpu.memory_space<vmem>>, vector<3x10xf32>
    %c0_1 = arith.constant 0 : index
    %c0_2 = arith.constant 0 : index
    %1 = vector.load %arg0[%c0_1, %c0_2] : memref<10x1xf32, #tpu.memory_space<vmem>>, vector<10x1xf32>
    %2 = vector.extract_strided_slice %0 {offsets = [0, 0], sizes = [1, 10], strides = [1, 1]} : vector<3x10xf32> to vector<1x10xf32>
    %3 = vector.broadcast %1 : vector<10x1xf32> to vector<10x10xf32>
    %4 = vector.broadcast %2 : vector<1x10xf32> to vector<10x10xf32>
    %5 = arith.subf %3, %4 : vector<10x10xf32>
    %c0_3 = arith.constant 0 : index
    %c0_4 = arith.constant 0 : index
    %6 = vector.load %arg1[%c0_3, %c0_4] : memref<10x1xf32, #tpu.memory_space<vmem>>, vector<10x1xf32>
    %7 = vector.extract_strided_slice %0 {offsets = [1, 0], sizes = [1, 10], strides = [1, 1]} : vector<3x10xf32> to vector<1x10xf32>
    %8 = vector.broadcast %6 : vector<10x1xf32> to vector<10x10xf32>
    %9 = vector.broadcast %7 : vector<1x10xf32> to vector<10x10xf32>
    %10 = arith.subf %8, %9 : vector<10x10xf32>
    %c0_5 = arith.constant 0 : index
    %c0_6 = arith.constant 0 : index
    %11 = vector.load %arg2[%c0_5, %c0_6] : memref<10x1xf32, #tpu.memory_space<vmem>>, vector<10x1xf32>
    %12 = vector.extract_strided_slice %0 {offsets = [2, 0], sizes = [1, 10], strides = [1, 1]} : vector<3x10xf32> to vector<1x10xf32>
    %13 = vector.broadcast %11 : vector<10x1xf32> to vector<10x10xf32>
    %14 = vector.broadcast %12 : vector<1x10xf32> to vector<10x10xf32>
    %15 = arith.subf %13, %14 : vector<10x10xf32>
    %16 = arith.mulf %5, %5 : vector<10x10xf32>
    %17 = arith.mulf %10, %10 : vector<10x10xf32>
    %18 = arith.addf %16, %17 : vector<10x10xf32>
    %19 = arith.mulf %15, %15 : vector<10x10xf32>
    %20 = arith.addf %18, %19 : vector<10x10xf32>
    %21 = math.sqrt %20 : vector<10x10xf32>
    %c0_7 = arith.constant 0 : index
    %c0_8 = arith.constant 0 : index
    %22 = vector.load %arg4[%c0_7, %c0_8] : memref<10x10xf32, #tpu.memory_space<vmem>>, vector<10x10xf32>
    tpu.vector_store %arg4[%c0_7, %c0_8], %21 {strides = array<i32>} : memref<10x10xf32, #tpu.memory_space<vmem>>, vector<10x10xf32>,
    return
  }
}

</mosaic_0001>

<llo_original>
// kernel: clofnet_vel_forward.11
$region0: #{clofnet_vel_forward.11}
  #allocation0 [shape = 'u32[]', space=smem, size = 0x4, offset = 0x4, fixed_abs, tag = 'smem constant byte address 0x4 - core index']
  #allocation1 [shape = 'u32[144,128]{1,0:T(1,128)}', space=vmem, size = 0x12000, scoped, tag = 'internal scratch']
  %s0 = inlined_call_operand.vmem [shape: f32[8,10], index: 0, kind: input, shape index: {}]
  %s1 = inlined_call_operand.vmem [shape: f32[32,8], index: 1, kind: input, shape index: {}]
  %s2 = inlined_call_operand.vmem [shape: f32[32,1], index: 2, kind: input, shape index: {}]
  %s3 = inlined_call_operand.vmem [shape: f32[32,10], index: 3, kind: output, shape index: {}]
  %s4 = sld [smem:[#allocation0]]
  $region22: #{clofnet_vel_forward.11} parent=0
    _
  %s6 = ssub.s32 1, %s4
  %s7 = scalar_select 0, %s6, %s4
  // Predicated region
  $region2: #{clofnet_vel_forward.11} parent=0 // pred_check
    _
  $region3: #{clofnet_vel_forward.11} parent=0 // pred_check_branch
    %9 = sbr.rel (0) target = $region5
  $region4: #{clofnet_vel_forward.11} parent=0 // pred_region
    _
  $region5: #{clofnet_vel_forward.11} parent=0 // pred_fallthru
    _
  // Predicated region
  $region6: #{clofnet_vel_forward.11} parent=0 // pred_check
    _
  $region7: #{clofnet_vel_forward.11} parent=0 // pred_check_branch
    %11 = sbr.rel (0) target = $region9
  $region8: #{clofnet_vel_forward.11} parent=0 // pred_region
    _
  $region9: #{clofnet_vel_forward.11} parent=0 // pred_fallthru
    _
  // Predicated region
  $region10: #{clofnet_vel_forward.11} parent=0 // pred_check
    _
  $region11: #{clofnet_vel_forward.11} parent=0 // pred_check_branch
    %13 = sbr.rel (0) target = $region13
  $region12: #{clofnet_vel_forward.11} parent=0 // pred_region
    _
  $region13: #{clofnet_vel_forward.11} parent=0 // pred_fallthru
    _
  %v14 = vld [vmem:[%s0] sm:$0xff]
  %v15 = vld [vmem:[%s1] sm:$0xff]
  %v16 = vld [vmem:[%s1 + $0x8] sm:$0xff]
  %v17 = vld [vmem:[%s1 + $0x10] sm:$0xff]
  %v18 = vld [vmem:[%s1 + $0x18] sm:$0xff]
  %v19 = vld [vmem:[%s2] sm:$0xff]
  %v20 = vld [vmem:[%s2 + $0x8] sm:$0xff]
  %v21 = vld [vmem:[%s2 + $0x10] sm:$0xff]
  %v22 = vld [vmem:[%s2 + $0x18] sm:$0xff]
  %24 = vset.pattern.permute.xlu0 0
  %25 = vperm.xlu0 %24, %v19
  %v26 = vpop.permute.xlu0 %25
  %29 = vset.pattern.permute.xlu0 0
  %30 = vperm.xlu0 %29, %v20
  %v31 = vpop.permute.xlu0 %30
  %34 = vset.pattern.permute.xlu0 0
  %35 = vperm.xlu0 %34, %v21
  %v36 = vpop.permute.xlu0 %35
  %39 = vset.pattern.permute.xlu0 0
  %40 = vperm.xlu0 %39, %v22
  %v41 = vpop.permute.xlu0 %40
  %vm43 = vcmask 64512
  %v45 = vsel %vm43, %v15, 0
  %v48 = vsel %vm43, %v16, 0
  %v51 = vsel %vm43, %v17, 0
  %v54 = vsel %vm43, %v18, 0
  %56 = vmatprep.subr.mxu0 0.0
  %57 = vmatpush1.msra.mxu0 0.0
  %58 = vmatprep.subr.mxu0 0.0
  %59 = vmatpush1.msra.mxu0 0.0
  %60 = vmatprep.subr.mxu0 0.0
  %61 = vmatpush1.msra.mxu0 0.0
  %62 = vmatprep.subr.mxu0 0.0
  %63 = vmatpush1.msra.mxu0 0.0
  %64 = vmatprep.subr.mxu0 0.0
  %65 = vmatpush1.msra.mxu0 0.0
  %66 = vmatprep.subr.mxu0 0.0
  %67 = vmatpush1.msra.mxu0 0.0
  %68 = vmatprep.subr.mxu0 0.0
  %69 = vmatpush1.msra.mxu0 0.0
  %70 = vmatprep.subr.mxu0 0.0
  %71 = vmatpush1.msra.mxu0 0.0
  %72 = vmatprep.subr.mxu0 0.0
  %73 = vmatpush1.msra.mxu0 0.0
  %74 = vmatprep.subr.mxu0 0.0
  %75 = vmatpush1.msra.mxu0 0.0
  %76 = vmatprep.subr.mxu0 0.0
  %77 = vmatpush1.msra.mxu0 0.0
  %78 = vmatprep.subr.mxu0 0.0
  %79 = vmatpush1.msra.mxu0 0.0
  %80 = vmatprep.subr.mxu0 0.0
  %81 = vmatpush1.msra.mxu0 0.0
  %82 = vmatprep.subr.mxu0 0.0
  %83 = vmatpush1.msra.mxu0 0.0
  %84 = vmatprep.subr.mxu0 0.0
  %85 = vmatpush1.msra.mxu0 0.0
  %86 = vmatprep.subr.mxu0 0.0
  %87 = vmatpush1.msra.mxu0 %v14
  %88 = vmatprep.subr.mxu0 0.0
  %89 = vmatpush2.msra.mxu0 0.0
  %90 = vmatprep.subr.mxu0 0.0
  %91 = vmatpush2.msra.mxu0 0.0
  %92 = vmatprep.subr.mxu0 0.0
  %93 = vmatpush2.msra.mxu0 0.0
  %94 = vmatprep.subr.mxu0 0.0
  %95 = vmatpush2.msra.mxu0 0.0
  %96 = vmatprep.subr.mxu0 0.0
  %97 = vmatpush2.msra.mxu0 0.0
  %98 = vmatprep.subr.mxu0 0.0
  %99 = vmatpush2.msra.mxu0 0.0
  %100 = vmatprep.subr.mxu0 0.0
  %101 = vmatpush2.msra.mxu0 0.0
  %102 = vmatprep.subr.mxu0 0.0
  %103 = vmatpush2.msra.mxu0 0.0
  %104 = vmatprep.subr.mxu0 0.0
  %105 = vmatpush2.msra.mxu0 0.0
  %106 = vmatprep.subr.mxu0 0.0
  %107 = vmatpush2.msra.mxu0 0.0
  %108 = vmatprep.subr.mxu0 0.0
  %109 = vmatpush2.msra.mxu0 0.0
  %110 = vmatprep.subr.mxu0 0.0
  %111 = vmatpush2.msra.mxu0 0.0
  %112 = vmatprep.subr.mxu0 0.0
  %113 = vmatpush2.msra.mxu0 0.0
  %114 = vmatprep.subr.mxu0 0.0
  %115 = vmatpush2.msra.mxu0 0.0
  %116 = vmatprep.subr.mxu0 0.0
  %117 = vmatpush2.msra.mxu0 0.0
  %118 = vmatprep.subr.mxu0 0.0
  %119 = vmatpush2.msra.mxu0 0.0
  %120 = vmatprep.mubr.f32.mxu0 0.0
  %121 = vmatmul.mubr.f32.gmra.mxu0 %v45
  %v122 = vpop.f32.mrf.mxu0
  %v123 = vadd.f32 %v26, %v122
  %v124 = vpop.f32.mrf.mxu0
  %125 = vmatprep.mubr.f32.mxu0 0.0
  %126 = vmatmul.mubr.f32.gmra.mxu0 %v48
  %v127 = vpop.f32.mrf.mxu0
  %v128 = vadd.f32 %v31, %v127
  %v129 = vpop.f32.mrf.mxu0
  %130 = vmatprep.mubr.f32.mxu0 0.0
  %131 = vmatmul.mubr.f32.gmra.mxu0 %v51
  %v132 = vpop.f32.mrf.mxu0
  %v133 = vadd.f32 %v36, %v132
  %v134 = vpop.f32.mrf.mxu0
  %135 = vmatprep.mubr.f32.mxu0 0.0
  %136 = vmatmul.mubr.f32.gmra.mxu0 %v54
  %v137 = vpop.f32.mrf.mxu0
  %v138 = vadd.f32 %v41, %v137
  %v139 = vpop.f32.mrf.mxu0
  %140 = vdwg.mxu0
  %vm141 = vcmask 80896
  %142 = vst.msk [vmem:[%s3] sm:$0xff] %vm141, %v123
  %143 = vst.msk [vmem:[%s3 + $0x8] sm:$0xff] %vm141, %v128
  %144 = vst.msk [vmem:[%s3 + $0x10] sm:$0xff] %vm141, %v133
  %145 = vst.msk [vmem:[%s3 + $0x18] sm:$0xff] %vm141, %v138
  // Predicated region
  $region14: #{clofnet_vel_forward.11} parent=0 // pred_check
    _
  $region15: #{clofnet_vel_forward.11} parent=0 // pred_check_branch
    %147 = sbr.rel (0) target = $region17
  $region16: #{clofnet_vel_forward.11} parent=0 // pred_region
    _
  $region17: #{clofnet_vel_forward.11} parent=0 // pred_fallthru
    _
  // Predicated region
  $region18: #{clofnet_vel_forward.11} parent=0 // pred_check
    _
  $region19: #{clofnet_vel_forward.11} parent=0 // pred_check_branch
    %149 = sbr.rel (0) target = $region21
  $region20: #{clofnet_vel_forward.11} parent=0 // pred_region
    _
  $region21: #{clofnet_vel_forward.11} parent=0 // pred_fallthru
    _

// kernel: clofnet_vel_forward.12
$region0: #{clofnet_vel_forward.12}
  #allocation0 [shape = 'u32[]', space=smem, size = 0x4, offset = 0x4, fixed_abs, tag = 'smem constant byte address 0x4 - core index']
  #allocation1 [shape = 'u32[144,128]{1,0:T(1,128)}', space=vmem, size = 0x12000, scoped, tag = 'internal scratch']
  #allocation2 [shape = 'f32[14,40]{1,0:T(8,128)}', space=vmem, size = 0x2000, scoped, tag = 'scratch operand']
  %s0 = inlined_call_operand.vmem [shape: f32[3,40], index: 0, kind: input, shape index: {}]
  %s1 = inlined_call_operand.vmem [shape: f32[3,40], index: 1, kind: input, shape index: {}]
  %s2 = inlined_call_operand.vmem [shape: f32[3,40], index: 2, kind: input, shape index: {}]
  %s3 = inlined_call_operand.vmem [shape: f32[3,40], index: 3, kind: input, shape index: {}]
  %s4 = inlined_call_operand.vmem [shape: f32[2,40], index: 4, kind: input, shape index: {}]
  %s5 = inlined_call_operand.vmem [shape: f32[16,14], index: 5, kind: input, shape index: {}]
  %s6 = inlined_call_operand.vmem [shape: f32[16,2], index: 6, kind: input, shape index: {}]
  %s7 = inlined_call_operand.vmem [shape: f32[16,1], index: 7, kind: input, shape index: {}]
  %s8 = inlined_call_operand.vmem [shape: f32[16,16], index: 8, kind: input, shape index: {}]
  %s9 = inlined_call_operand.vmem [shape: f32[16,1], index: 9, kind: input, shape index: {}]
  %s10 = inlined_call_operand.vmem [shape: f32[16,40], index: 10, kind: output, shape index: {}]
  %s11 = sld [smem:[#allocation0]]
  $region50: #{clofnet_vel_forward.12} parent=0
    _
  %s13 = ssub.s32 1, %s11
  %s14 = scalar_select 0, %s13, %s11
  // Predicated region
  $region2: #{clofnet_vel_forward.12} parent=0 // pred_check
    _
  $region3: #{clofnet_vel_forward.12} parent=0 // pred_check_branch
    %16 = sbr.rel (0) target = $region5
  $region4: #{clofnet_vel_forward.12} parent=0 // pred_region
    _
  $region5: #{clofnet_vel_forward.12} parent=0 // pred_fallthru
    _
  // Predicated region
  $region6: #{clofnet_vel_forward.12} parent=0 // pred_check
    _
  $region7: #{clofnet_vel_forward.12} parent=0 // pred_check_branch
    %18 = sbr.rel (0) target = $region9
  $region8: #{clofnet_vel_forward.12} parent=0 // pred_region
    _
  $region9: #{clofnet_vel_forward.12} parent=0 // pred_fallthru
    _
  // Predicated region
  $region10: #{clofnet_vel_forward.12} parent=0 // pred_check
    _
  $region11: #{clofnet_vel_forward.12} parent=0 // pred_check_branch
    %20 = sbr.rel (0) target = $region13
  $region12: #{clofnet_vel_forward.12} parent=0 // pred_region
    _
  $region13: #{clofnet_vel_forward.12} parent=0 // pred_fallthru
    _
  // Predicated region
  $region14: #{clofnet_vel_forward.12} parent=0 // pred_check
    _
  $region15: #{clofnet_vel_forward.12} parent=0 // pred_check_branch
    %22 = sbr.rel (0) target = $region17
  $region16: #{clofnet_vel_forward.12} parent=0 // pred_region
    _
  $region17: #{clofnet_vel_forward.12} parent=0 // pred_fallthru
    _
  // Predicated region
  $region18: #{clofnet_vel_forward.12} parent=0 // pred_check
    _
  $region19: #{clofnet_vel_forward.12} parent=0 // pred_check_branch
    %24 = sbr.rel (0) target = $region21
  $region20: #{clofnet_vel_forward.12} parent=0 // pred_region
    _
  $region21: #{clofnet_vel_forward.12} parent=0 // pred_fallthru
    _
  // Predicated region
  $region22: #{clofnet_vel_forward.12} parent=0 // pred_check
    _
  $region23: #{clofnet_vel_forward.12} parent=0 // pred_check_branch
    %26 = sbr.rel (0) target = $region25
  $region24: #{clofnet_vel_forward.12} parent=0 // pred_region
    _
  $region25: #{clofnet_vel_forward.12} parent=0 // pred_fallthru
    _
  // Predicated region
  $region26: #{clofnet_vel_forward.12} parent=0 // pred_check
    _
  $region27: #{clofnet_vel_forward.12} parent=0 // pred_check_branch
    %28 = sbr.rel (0) target = $region29
  $region28: #{clofnet_vel_forward.12} parent=0 // pred_region
    _
  $region29: #{clofnet_vel_forward.12} parent=0 // pred_fallthru
    _
  // Predicated region
  $region30: #{clofnet_vel_forward.12} parent=0 // pred_check
    _
  $region31: #{clofnet_vel_forward.12} parent=0 // pred_check_branch
    %30 = sbr.rel (0) target = $region33
  $region32: #{clofnet_vel_forward.12} parent=0 // pred_region
    _
  $region33: #{clofnet_vel_forward.12} parent=0 // pred_fallthru
    _
  // Predicated region
  $region34: #{clofnet_vel_forward.12} parent=0 // pred_check
    _
  $region35: #{clofnet_vel_forward.12} parent=0 // pred_check_branch
    %32 = sbr.rel (0) target = $region37
  $region36: #{clofnet_vel_forward.12} parent=0 // pred_region
    _
  $region37: #{clofnet_vel_forward.12} parent=0 // pred_fallthru
    _
  // Predicated region
  $region38: #{clofnet_vel_forward.12} parent=0 // pred_check
    _
  $region39: #{clofnet_vel_forward.12} parent=0 // pred_check_branch
    %34 = sbr.rel (0) target = $region41
  $region40: #{clofnet_vel_forward.12} parent=0 // pred_region
    _
  $region41: #{clofnet_vel_forward.12} parent=0 // pred_fallthru
    _
  %v35 = vld [vmem:[%s0] sm:$0x7]
  %v36 = vld [vmem:[%s1] sm:$0x7]
  %v37 = vld [vmem:[%s2] sm:$0x7]
  %v38 = vld [vmem:[%s3] sm:$0x7]
  %v39 = vsub.f32 %v35, %v36
  %v40 = vmul.f32 %v39, %v39
  %v42 = vrot.slane %v40, 1
  %v44 = vadd.f32 %v40, %v42
  %v45 = vrot.slane %v40, 2
  %v47 = vadd.f32 %v44, %v45
  %v49 = vrot.slane %v36, 1
  %v51 = vmul.f32 %v35, %v49
  %v52 = vrot.slane %v36, 7
  %v54 = vmul.f32 %v35, %v52
  %v56 = vrot.slane %v54, 1
  %v58 = vsub.f32 %v51, %v56
  %v59 = vrot.slane %v36, 6
  %v61 = vmul.f32 %v35, %v59
  %v62 = vrot.slane %v36, 2
  %v64 = vmul.f32 %v35, %v62
  %v66 = vrot.slane %v64, 6
  %v68 = vsub.f32 %v61, %v66
  %v69 = vrsqrt.pop %v47
  %v70 = vmul.f32 %v47, %v69
  %vm71 = vcmp.eq.f32.partialorder %v47, inf
  %v72 = vsel %vm71, %v47, %v70
  %vm73 = vcmp.eq.f32.partialorder %v47, 0.0
  %v74 = vand.u32 %v47, 2147483648
  %v75 = vsel %vm73, %v74, %v72
  %v76 = vadd.f32 %v75, 1.0
  %v77 = vrcp.pop %v76
  %v78 = vmul.f32 %v39, %v77
  %v80 = vrot.slane %v76, 7
  %v82 = vrcp.pop %v80
  %v83 = vmul.f32 %v39, %v82
  %v84 = vrot.slane %v76, 6
  %v86 = vrcp.pop %v84
  %v87 = vmul.f32 %v39, %v86
  %v88 = vmul.f32 %v58, %v58
  %v89 = vmul.f32 %v68, %v68
  %v91 = vrot.slane %v89, 1
  %v93 = vadd.f32 %v88, %v91
  %v95 = vrot.slane %v88, 7
  %v97 = vadd.f32 %v93, %v95
  %v98 = vrsqrt.pop %v97
  %v99 = vmul.f32 %v97, %v98
  %vm100 = vcmp.eq.f32.partialorder %v97, inf
  %v101 = vsel %vm100, %v97, %v99
  %vm102 = vcmp.eq.f32.partialorder %v97, 0.0
  %v103 = vand.u32 %v97, 2147483648
  %v104 = vsel %vm102, %v103, %v101
  %v105 = vadd.f32 %v104, 1.0
  %v106 = vrcp.pop %v105
  %v107 = vmul.f32 %v58, %v106
  %v109 = vrot.slane %v105, 7
  %v111 = vrcp.pop %v109
  %v112 = vmul.f32 %v68, %v111
  %v113 = vrot.slane %v105, 1
  %v115 = vrcp.pop %v113
  %v116 = vmul.f32 %v58, %v115
  %v118 = vrot.slane %v116, 7
  %v120 = vmul.f32 %v83, %v118
  %v121 = vmul.f32 %v87, %v112
  %v123 = vrot.slane %v121, 1
  %v125 = vsub.f32 %v120, %v123
  %v127 = vrot.slane %v107, 7
  %v129 = vmul.f32 %v87, %v127
  %v130 = vmul.f32 %v78, %v116
  %v132 = vrot.slane %v130, 6
  %v134 = vsub.f32 %v129, %v132
  %v136 = vrot.slane %v112, 2
  %v138 = vmul.f32 %v78, %v136
  %v139 = vmul.f32 %v83, %v107
  %v141 = vrot.slane %v139, 1
  %v143 = vsub.f32 %v138, %v141
  %v144 = vmul.f32 %v78, %v35
  %v145 = vmul.f32 %v83, %v35
  %v147 = vrot.slane %v145, 1
  %v149 = vadd.f32 %v144, %v147
  %v150 = vmul.f32 %v87, %v35
  %v152 = vrot.slane %v150, 2
  %v154 = vadd.f32 %v149, %v152
  %v156 = vrot.slane %v35, 7
  %v158 = vmul.f32 %v107, %v156
  %v159 = vmul.f32 %v112, %v156
  %v161 = vrot.slane %v159, 1
  %v163 = vadd.f32 %v158, %v161
  %v164 = vrot.slane %v35, 2
  %v166 = vmul.f32 %v116, %v164
  %v168 = vrot.slane %v166, 7
  %v170 = vadd.f32 %v163, %v168
  %v171 = vmul.f32 %v125, %v156
  %v172 = vmul.f32 %v134, %v156
  %v174 = vrot.slane %v172, 1
  %v176 = vadd.f32 %v171, %v174
  %v177 = vmul.f32 %v143, %v164
  %v179 = vrot.slane %v177, 7
  %v181 = vadd.f32 %v176, %v179
  %v182 = vmul.f32 %v78, %v36
  %v183 = vmul.f32 %v83, %v36
  %v185 = vrot.slane %v183, 1
  %v187 = vadd.f32 %v182, %v185
  %v188 = vmul.f32 %v87, %v36
  %v190 = vrot.slane %v188, 2
  %v192 = vadd.f32 %v187, %v190
  %v193 = vmul.f32 %v107, %v52
  %v194 = vmul.f32 %v112, %v52
  %v196 = vrot.slane %v194, 1
  %v198 = vadd.f32 %v193, %v196
  %v199 = vmul.f32 %v116, %v62
  %v201 = vrot.slane %v199, 7
  %v203 = vadd.f32 %v198, %v201
  %v204 = vmul.f32 %v125, %v52
  %v205 = vmul.f32 %v134, %v52
  %v207 = vrot.slane %v205, 1
  %v209 = vadd.f32 %v204, %v207
  %v210 = vmul.f32 %v143, %v62
  %v212 = vrot.slane %v210, 7
  %v214 = vadd.f32 %v209, %v212
  %v215 = vmul.f32 %v78, %v37
  %v216 = vmul.f32 %v83, %v37
  %v218 = vrot.slane %v216, 1
  %v220 = vadd.f32 %v215, %v218
  %v221 = vmul.f32 %v87, %v37
  %v223 = vrot.slane %v221, 2
  %v225 = vadd.f32 %v220, %v223
  %v227 = vrot.slane %v37, 7
  %v229 = vmul.f32 %v107, %v227
  %v230 = vmul.f32 %v112, %v227
  %v232 = vrot.slane %v230, 1
  %v234 = vadd.f32 %v229, %v232
  %v235 = vrot.slane %v37, 2
  %v237 = vmul.f32 %v116, %v235
  %v239 = vrot.slane %v237, 7
  %v241 = vadd.f32 %v234, %v239
  %v242 = vmul.f32 %v125, %v227
  %v243 = vmul.f32 %v134, %v227
  %v245 = vrot.slane %v243, 1
  %v247 = vadd.f32 %v242, %v245
  %v248 = vmul.f32 %v143, %v235
  %v250 = vrot.slane %v248, 7
  %v252 = vadd.f32 %v247, %v250
  %v253 = vmul.f32 %v78, %v38
  %v254 = vmul.f32 %v83, %v38
  %v256 = vrot.slane %v254, 1
  %v258 = vadd.f32 %v253, %v256
  %v259 = vmul.f32 %v87, %v38
  %v261 = vrot.slane %v259, 2
  %v263 = vadd.f32 %v258, %v261
  %v265 = vrot.slane %v38, 7
  %v267 = vmul.f32 %v107, %v265
  %v268 = vmul.f32 %v112, %v265
  %v270 = vrot.slane %v268, 1
  %v272 = vadd.f32 %v267, %v270
  %v273 = vrot.slane %v38, 2
  %v275 = vmul.f32 %v116, %v273
  %v277 = vrot.slane %v275, 7
  %v279 = vadd.f32 %v272, %v277
  %v280 = vmul.f32 %v125, %v265
  %v281 = vmul.f32 %v134, %v265
  %v283 = vrot.slane %v281, 1
  %v285 = vadd.f32 %v280, %v283
  %v286 = vmul.f32 %v143, %v273
  %v288 = vrot.slane %v286, 7
  %v290 = vadd.f32 %v285, %v288
  %v291 = vmul.f32 %v154, %v192
  %v292 = vmul.f32 %v170, %v203
  %v294 = vrot.slane %v292, 1
  %v296 = vadd.f32 %v291, %v294
  %v297 = vmul.f32 %v181, %v214
  %v299 = vrot.slane %v297, 1
  %v301 = vadd.f32 %v296, %v299
  %v302 = vmul.f32 %v154, %v154
  %v303 = vmul.f32 %v170, %v170
  %v305 = vrot.slane %v303, 1
  %v307 = vadd.f32 %v302, %v305
  %v308 = vmul.f32 %v181, %v181
  %v310 = vrot.slane %v308, 1
  %v312 = vadd.f32 %v307, %v310
  %v313 = vrsqrt.pop %v312
  %v314 = vmul.f32 %v312, %v313
  %vm315 = vcmp.eq.f32.partialorder %v312, inf
  %v316 = vsel %vm315, %v312, %v314
  %vm317 = vcmp.eq.f32.partialorder %v312, 0.0
  %v318 = vand.u32 %v312, 2147483648
  %v319 = vsel %vm317, %v318, %v316
  %v320 = vmul.f32 %v192, %v192
  %v321 = vmul.f32 %v203, %v203
  %v323 = vrot.slane %v321, 1
  %v325 = vadd.f32 %v320, %v323
  %v326 = vmul.f32 %v214, %v214
  %v328 = vrot.slane %v326, 1
  %v330 = vadd.f32 %v325, %v328
  %v331 = vrsqrt.pop %v330
  %v332 = vmul.f32 %v330, %v331
  %vm333 = vcmp.eq.f32.partialorder %v330, inf
  %v334 = vsel %vm333, %v330, %v332
  %vm335 = vcmp.eq.f32.partialorder %v330, 0.0
  %v336 = vand.u32 %v330, 2147483648
  %v337 = vsel %vm335, %v336, %v334
  %v338 = vadd.f32 %v319, 1e-05
  %v339 = vrcp.pop %v338
  %v340 = vmul.f32 %v301, %v339
  %v341 = vadd.f32 %v337, 1e-05
  %v342 = vrcp.pop %v341
  %v343 = vmul.f32 %v340, %v342
  %v344 = vmul.f32 %v343, %v343
  %v345 = vsub.f32 1.0, %v344
  %v346 = vmax.f32 %v345, 0.0
  %v347 = vrsqrt.pop %v346
  %v348 = vmul.f32 %v346, %v347
  %vm349 = vcmp.eq.f32.partialorder %v346, inf
  %v350 = vsel %vm349, %v346, %v348
  %vm351 = vcmp.eq.f32.partialorder %v346, 0.0
  %v352 = vand.u32 %v346, 2147483648
  %v353 = vsel %vm351, %v352, %v350
  %vm354 = vcmask 319488
  %355 = vst.msk [vmem:[#allocation2] sm:$0x1] %vm354, %v353
  %356 = vst.msk [vmem:[#allocation2 + $0x1] sm:$0x1] %vm354, %v343
  %357 = vst.msk [vmem:[#allocation2 + $0x2] sm:$0x1] %vm354, %v154
  %vm358 = vcmask 320513
  %359 = vst.msk [vmem:[#allocation2 + $0x2] sm:$0x2] %vm358, %v170
  %360 = vst.msk [vmem:[#allocation2 + $0x3] sm:$0x2] %vm358, %v181
  %361 = vst.msk [vmem:[#allocation2 + $0x5] sm:$0x1] %vm354, %v192
  %362 = vst.msk [vmem:[#allocation2 + $0x5] sm:$0x2] %vm358, %v203
  %363 = vst.msk [vmem:[#allocation2 + $0x6] sm:$0x2] %vm358, %v214
  %364 = vst.msk [vmem:[#allocation2 + $0x8] sm:$0x1] %vm354, %v225
  %365 = vst.msk [vmem:[#allocation2 + $0x8] sm:$0x2] %vm358, %v241
  %366 = vst.msk [vmem:[#allocation2 + $0x9] sm:$0x2] %vm358, %v252
  %367 = vst.msk [vmem:[#allocation2 + $0xb] sm:$0x1] %vm354, %v263
  %368 = vst.msk [vmem:[#allocation2 + $0xb] sm:$0x2] %vm358, %v279
  %369 = vst.msk [vmem:[#allocation2 + $0xc] sm:$0x2] %vm358, %v290
  %v370 = vld [vmem:[%s6] sm:$0xff]
  %v371 = vld [vmem:[%s6 + $0x8] sm:$0xff]
  %v372 = vld [vmem:[%s4] sm:$0x3]
  %v373 = vld [vmem:[%s5] sm:$0xff]
  %v374 = vld [vmem:[%s5 + $0x8] sm:$0xff]
  %v375 = vld [vmem:[#allocation2] sm:$0xff]
  %v376 = vld [vmem:[#allocation2 + $0x8] sm:$0x3f]
  %vm377 = vcmask 113664
  %v379 = vsel %vm377, %v373, 0
  %v382 = vsel %vm377, %v374, 0
  %vm384 = vcmask 1045504
  %v386 = vsel %vm384, %v376, 0
  %388 = vmatprep.subr.mxu0 0.0
  %389 = vmatpush1.msra.mxu0 0.0
  %390 = vmatprep.subr.mxu0 0.0
  %391 = vmatpush1.msra.mxu0 0.0
  %392 = vmatprep.subr.mxu0 0.0
  %393 = vmatpush1.msra.mxu0 0.0
  %394 = vmatprep.subr.mxu0 0.0
  %395 = vmatpush1.msra.mxu0 0.0
  %396 = vmatprep.subr.mxu0 0.0
  %397 = vmatpush1.msra.mxu0 0.0
  %398 = vmatprep.subr.mxu0 0.0
  %399 = vmatpush1.msra.mxu0 0.0
  %400 = vmatprep.subr.mxu0 0.0
  %401 = vmatpush1.msra.mxu0 0.0
  %402 = vmatprep.subr.mxu0 0.0
  %403 = vmatpush1.msra.mxu0 0.0
  %404 = vmatprep.subr.mxu0 0.0
  %405 = vmatpush1.msra.mxu0 0.0
  %406 = vmatprep.subr.mxu0 0.0
  %407 = vmatpush1.msra.mxu0 0.0
  %408 = vmatprep.subr.mxu0 0.0
  %409 = vmatpush1.msra.mxu0 0.0
  %410 = vmatprep.subr.mxu0 0.0
  %411 = vmatpush1.msra.mxu0 0.0
  %412 = vmatprep.subr.mxu0 0.0
  %413 = vmatpush1.msra.mxu0 0.0
  %414 = vmatprep.subr.mxu0 0.0
  %415 = vmatpush1.msra.mxu0 0.0
  %416 = vmatprep.subr.mxu0 0.0
  %417 = vmatpush1.msra.mxu0 %v386
  %418 = vmatprep.subr.mxu0 0.0
  %419 = vmatpush1.msra.mxu0 %v375
  %420 = vmatprep.subr.mxu0 0.0
  %421 = vmatpush2.msra.mxu0 0.0
  %422 = vmatprep.subr.mxu0 0.0
  %423 = vmatpush2.msra.mxu0 0.0
  %424 = vmatprep.subr.mxu0 0.0
  %425 = vmatpush2.msra.mxu0 0.0
  %426 = vmatprep.subr.mxu0 0.0
  %427 = vmatpush2.msra.mxu0 0.0
  %428 = vmatprep.subr.mxu0 0.0
  %429 = vmatpush2.msra.mxu0 0.0
  %430 = vmatprep.subr.mxu0 0.0
  %431 = vmatpush2.msra.mxu0 0.0
  %432 = vmatprep.subr.mxu0 0.0
  %433 = vmatpush2.msra.mxu0 0.0
  %434 = vmatprep.subr.mxu0 0.0
  %435 = vmatpush2.msra.mxu0 0.0
  %436 = vmatprep.subr.mxu0 0.0
  %437 = vmatpush2.msra.mxu0 0.0
  %438 = vmatprep.subr.mxu0 0.0
  %439 = vmatpush2.msra.mxu0 0.0
  %440 = vmatprep.subr.mxu0 0.0
  %441 = vmatpush2.msra.mxu0 0.0
  %442 = vmatprep.subr.mxu0 0.0
  %443 = vmatpush2.msra.mxu0 0.0
  %444 = vmatprep.subr.mxu0 0.0
  %445 = vmatpush2.msra.mxu0 0.0
  %446 = vmatprep.subr.mxu0 0.0
  %447 = vmatpush2.msra.mxu0 0.0
  %448 = vmatprep.subr.mxu0 0.0
  %449 = vmatpush2.msra.mxu0 0.0
  %450 = vmatprep.subr.mxu0 0.0
  %451 = vmatpush2.msra.mxu0 0.0
  %452 = vmatprep.mubr.f32.mxu0 0.0
  %453 = vmatmul.mubr.f32.gmra.mxu0 %v379
  %v454 = vpop.f32.mrf.mxu0
  %v455 = vadd.f32 0.0, %v454
  %v456 = vpop.f32.mrf.mxu0
  %457 = vmatprep.mubr.f32.mxu0 0.0
  %458 = vmatmul.mubr.f32.gmra.mxu0 %v382
  %v459 = vpop.f32.mrf.mxu0
  %v460 = vadd.f32 0.0, %v459
  %v461 = vpop.f32.mrf.mxu0
  %462 = vdwg.mxu0
  %vm463 = vcmask 15360
  %v465 = vsel %vm463, %v370, 0
  %v468 = vsel %vm463, %v371, 0
  %vm470 = vcmask 1041408
  %v472 = vsel %vm470, %v372, 0
  %474 = vmatprep.subr.mxu0 0.0
  %475 = vmatpush1.msra.mxu0 0.0
  %476 = vmatprep.subr.mxu0 0.0
  %477 = vmatpush1.msra.mxu0 0.0
  %478 = vmatprep.subr.mxu0 0.0
  %479 = vmatpush1.msra.mxu0 0.0
  %480 = vmatprep.subr.mxu0 0.0
  %481 = vmatpush1.msra.mxu0 0.0
  %482 = vmatprep.subr.mxu0 0.0
  %483 = vmatpush1.msra.mxu0 0.0
  %484 = vmatprep.subr.mxu0 0.0
  %485 = vmatpush1.msra.mxu0 0.0
  %486 = vmatprep.subr.mxu0 0.0
  %487 = vmatpush1.msra.mxu0 0.0
  %488 = vmatprep.subr.mxu0 0.0
  %489 = vmatpush1.msra.mxu0 0.0
  %490 = vmatprep.subr.mxu0 0.0
  %491 = vmatpush1.msra.mxu0 0.0
  %492 = vmatprep.subr.mxu0 0.0
  %493 = vmatpush1.msra.mxu0 0.0
  %494 = vmatprep.subr.mxu0 0.0
  %495 = vmatpush1.msra.mxu0 0.0
  %496 = vmatprep.subr.mxu0 0.0
  %497 = vmatpush1.msra.mxu0 0.0
  %498 = vmatprep.subr.mxu0 0.0
  %499 = vmatpush1.msra.mxu0 0.0
  %500 = vmatprep.subr.mxu0 0.0
  %501 = vmatpush1.msra.mxu0 0.0
  %502 = vmatprep.subr.mxu0 0.0
  %503 = vmatpush1.msra.mxu0 0.0
  %504 = vmatprep.subr.mxu0 0.0
  %505 = vmatpush1.msra.mxu0 %v472
  %506 = vmatprep.subr.mxu0 0.0
  %507 = vmatpush2.msra.mxu0 0.0
  %508 = vmatprep.subr.mxu0 0.0
  %509 = vmatpush2.msra.mxu0 0.0
  %510 = vmatprep.subr.mxu0 0.0
  %511 = vmatpush2.msra.mxu0 0.0
  %512 = vmatprep.subr.mxu0 0.0
  %513 = vmatpush2.msra.mxu0 0.0
  %514 = vmatprep.subr.mxu0 0.0
  %515 = vmatpush2.msra.mxu0 0.0
  %516 = vmatprep.subr.mxu0 0.0
  %517 = vmatpush2.msra.mxu0 0.0
  %518 = vmatprep.subr.mxu0 0.0
  %519 = vmatpush2.msra.mxu0 0.0
  %520 = vmatprep.subr.mxu0 0.0
  %521 = vmatpush2.msra.mxu0 0.0
  %522 = vmatprep.subr.mxu0 0.0
  %523 = vmatpush2.msra.mxu0 0.0
  %524 = vmatprep.subr.mxu0 0.0
  %525 = vmatpush2.msra.mxu0 0.0
  %526 = vmatprep.subr.mxu0 0.0
  %527 = vmatpush2.msra.mxu0 0.0
  %528 = vmatprep.subr.mxu0 0.0
  %529 = vmatpush2.msra.mxu0 0.0
  %530 = vmatprep.subr.mxu0 0.0
  %531 = vmatpush2.msra.mxu0 0.0
  %532 = vmatprep.subr.mxu0 0.0
  %533 = vmatpush2.msra.mxu0 0.0
  %534 = vmatprep.subr.mxu0 0.0
  %535 = vmatpush2.msra.mxu0 0.0
  %536 = vmatprep.subr.mxu0 0.0
  %537 = vmatpush2.msra.mxu0 0.0
  %538 = vmatprep.mubr.f32.mxu0 0.0
  %539 = vmatmul.mubr.f32.gmra.mxu0 %v465
  %v540 = vpop.f32.mrf.mxu0
  %v541 = vadd.f32 %v455, %v540
  %v542 = vpop.f32.mrf.mxu0
  %543 = vmatprep.mubr.f32.mxu0 0.0
  %544 = vmatmul.mubr.f32.gmra.mxu0 %v468
  %v545 = vpop.f32.mrf.mxu0
  %v546 = vadd.f32 %v460, %v545
  %v547 = vpop.f32.mrf.mxu0
  %548 = vdwg.mxu0
  %v549 = vld [vmem:[%s7] sm:$0xff]
  %v550 = vld [vmem:[%s7 + $0x8] sm:$0xff]
  %552 = vset.pattern.permute.xlu0 0
  %553 = vperm.xlu0 %552, %v549
  %v554 = vpop.permute.xlu0 %553
  %557 = vset.pattern.permute.xlu0 0
  %558 = vperm.xlu0 %557, %v550
  %v559 = vpop.permute.xlu0 %558
  %v561 = vadd.f32 %v541, %v554
  %v562 = vadd.f32 %v546, %v559
  %v563 = vmax.f32 %v561, 0.0
  %v564 = vmax.f32 %v562, 0.0
  %v565 = vld [vmem:[%s8] sm:$0xff]
  %v566 = vld [vmem:[%s8 + $0x8] sm:$0xff]
  %v567 = vld [vmem:[%s9] sm:$0xff]
  %v568 = vld [vmem:[%s9 + $0x8] sm:$0xff]
  %570 = vset.pattern.permute.xlu0 0
  %571 = vperm.xlu0 %570, %v567
  %v572 = vpop.permute.xlu0 %571
  %575 = vset.pattern.permute.xlu0 0
  %576 = vperm.xlu0 %575, %v568
  %v577 = vpop.permute.xlu0 %576
  %vm579 = vcmask 130048
  %v581 = vsel %vm579, %v565, 0
  %v584 = vsel %vm579, %v566, 0
  %586 = vmatprep.subr.mxu0 0.0
  %587 = vmatpush1.msra.mxu0 0.0
  %588 = vmatprep.subr.mxu0 0.0
  %589 = vmatpush1.msra.mxu0 0.0
  %590 = vmatprep.subr.mxu0 0.0
  %591 = vmatpush1.msra.mxu0 0.0
  %592 = vmatprep.subr.mxu0 0.0
  %593 = vmatpush1.msra.mxu0 0.0
  %594 = vmatprep.subr.mxu0 0.0
  %595 = vmatpush1.msra.mxu0 0.0
  %596 = vmatprep.subr.mxu0 0.0
  %597 = vmatpush1.msra.mxu0 0.0
  %598 = vmatprep.subr.mxu0 0.0
  %599 = vmatpush1.msra.mxu0 0.0
  %600 = vmatprep.subr.mxu0 0.0
  %601 = vmatpush1.msra.mxu0 0.0
  %602 = vmatprep.subr.mxu0 0.0
  %603 = vmatpush1.msra.mxu0 0.0
  %604 = vmatprep.subr.mxu0 0.0
  %605 = vmatpush1.msra.mxu0 0.0
  %606 = vmatprep.subr.mxu0 0.0
  %607 = vmatpush1.msra.mxu0 0.0
  %608 = vmatprep.subr.mxu0 0.0
  %609 = vmatpush1.msra.mxu0 0.0
  %610 = vmatprep.subr.mxu0 0.0
  %611 = vmatpush1.msra.mxu0 0.0
  %612 = vmatprep.subr.mxu0 0.0
  %613 = vmatpush1.msra.mxu0 0.0
  %614 = vmatprep.subr.mxu0 0.0
  %615 = vmatpush1.msra.mxu0 %v564
  %616 = vmatprep.subr.mxu0 0.0
  %617 = vmatpush1.msra.mxu0 %v563
  %618 = vmatprep.subr.mxu0 0.0
  %619 = vmatpush2.msra.mxu0 0.0
  %620 = vmatprep.subr.mxu0 0.0
  %621 = vmatpush2.msra.mxu0 0.0
  %622 = vmatprep.subr.mxu0 0.0
  %623 = vmatpush2.msra.mxu0 0.0
  %624 = vmatprep.subr.mxu0 0.0
  %625 = vmatpush2.msra.mxu0 0.0
  %626 = vmatprep.subr.mxu0 0.0
  %627 = vmatpush2.msra.mxu0 0.0
  %628 = vmatprep.subr.mxu0 0.0
  %629 = vmatpush2.msra.mxu0 0.0
  %630 = vmatprep.subr.mxu0 0.0
  %631 = vmatpush2.msra.mxu0 0.0
  %632 = vmatprep.subr.mxu0 0.0
  %633 = vmatpush2.msra.mxu0 0.0
  %634 = vmatprep.subr.mxu0 0.0
  %635 = vmatpush2.msra.mxu0 0.0
  %636 = vmatprep.subr.mxu0 0.0
  %637 = vmatpush2.msra.mxu0 0.0
  %638 = vmatprep.subr.mxu0 0.0
  %639 = vmatpush2.msra.mxu0 0.0
  %640 = vmatprep.subr.mxu0 0.0
  %641 = vmatpush2.msra.mxu0 0.0
  %642 = vmatprep.subr.mxu0 0.0
  %643 = vmatpush2.msra.mxu0 0.0
  %644 = vmatprep.subr.mxu0 0.0
  %645 = vmatpush2.msra.mxu0 0.0
  %646 = vmatprep.subr.mxu0 0.0
  %647 = vmatpush2.msra.mxu0 0.0
  %648 = vmatprep.subr.mxu0 0.0
  %649 = vmatpush2.msra.mxu0 0.0
  %650 = vmatprep.mubr.f32.mxu0 0.0
  %651 = vmatmul.mubr.f32.gmra.mxu0 %v581
  %v652 = vpop.f32.mrf.mxu0
  %v653 = vadd.f32 %v572, %v652
  %v654 = vpop.f32.mrf.mxu0
  %655 = vmatprep.mubr.f32.mxu0 0.0
  %656 = vmatmul.mubr.f32.gmra.mxu0 %v584
  %v657 = vpop.f32.mrf.mxu0
  %v658 = vadd.f32 %v577, %v657
  %v659 = vpop.f32.mrf.mxu0
  %660 = vdwg.mxu0
  %v661 = vmax.f32 %v653, 0.0
  %v662 = vmax.f32 %v658, 0.0
  %vm663 = vcmask 326656
  %664 = vst.msk [vmem:[%s10] sm:$0xff] %vm663, %v661
  %665 = vst.msk [vmem:[%s10 + $0x8] sm:$0xff] %vm663, %v662
  // Predicated region
  $region42: #{clofnet_vel_forward.12} parent=0 // pred_check
    _
  $region43: #{clofnet_vel_forward.12} parent=0 // pred_check_branch
    %667 = sbr.rel (0) target = $region45
  $region44: #{clofnet_vel_forward.12} parent=0 // pred_region
    _
  $region45: #{clofnet_vel_forward.12} parent=0 // pred_fallthru
    _
  // Predicated region
  $region46: #{clofnet_vel_forward.12} parent=0 // pred_check
    _
  $region47: #{clofnet_vel_forward.12} parent=0 // pred_check_branch
    %669 = sbr.rel (0) target = $region49
  $region48: #{clofnet_vel_forward.12} parent=0 // pred_region
    _
  $region49: #{clofnet_vel_forward.12} parent=0 // pred_fallthru
    _

// kernel: clofnet_vel_forward.14
$region0: #{clofnet_vel_forward.14}
  #allocation0 [shape = 'u32[]', space=smem, size = 0x4, offset = 0x4, fixed_abs, tag = 'smem constant byte address 0x4 - core index']
  #allocation1 [shape = 'u32[144,128]{1,0:T(1,128)}', space=vmem, size = 0x12000, scoped, tag = 'internal scratch']
  #allocation2 [shape = 'f32[1,1]{1,0:T(1,128)S(1)}', space=vmem, size = 0x200, scoped, tag = 'scoped memory for clofnet_vel_forward.14']
  %s0 = inlined_call_operand.vmem [shape: f32[32,10], index: 0, kind: input, shape index: {}]
  %s1 = inlined_call_operand.vmem [shape: f32[32,10], index: 1, kind: input, shape index: {}]
  %s2 = inlined_call_operand.vmem [shape: f32[3,10], index: 2, kind: input, shape index: {}]
  %s3 = inlined_call_operand.vmem [shape: f32[32,32], index: 3, kind: input, shape index: {}]
  %s4 = inlined_call_operand.vmem [shape: f32[32,32], index: 4, kind: input, shape index: {}]
  %s5 = inlined_call_operand.vmem [shape: f32[32,1], index: 5, kind: input, shape index: {}]
  %s6 = inlined_call_operand.vmem [shape: f32[32,32], index: 6, kind: input, shape index: {}]
  %s7 = inlined_call_operand.vmem [shape: f32[32,1], index: 7, kind: input, shape index: {}]
  %s8 = inlined_call_operand.vmem [shape: f32[32,32], index: 8, kind: input, shape index: {}]
  %s9 = inlined_call_operand.vmem [shape: f32[32,1], index: 9, kind: input, shape index: {}]
  %s10 = inlined_call_operand.vmem [shape: f32[1,32], index: 10, kind: input, shape index: {}]
  %s11 = inlined_call_operand.<no memory space> [shape: f32[1,1], index: 11, kind: input, shape index: {}]
  %s12 = inlined_call_operand.vmem [shape: f32[32,10], index: 12, kind: output, shape index: {0}]
  %s13 = inlined_call_operand.vmem [shape: f32[3,10], index: 13, kind: output, shape index: {1}]
  %14 = xla_tuple %s12, %s13
  %s15 = sld [smem:[#allocation0]]
  $region66: #{clofnet_vel_forward.14} parent=0
    _
  %s17 = ssub.s32 1, %s15
  %s18 = scalar_select 0, %s17, %s15
  %v19 = vstv %s11
  %20 = vst [vmem:[#allocation2] sm:$0x1] %v19
  // Predicated region
  $region2: #{clofnet_vel_forward.14} parent=0 // pred_check
    _
  $region3: #{clofnet_vel_forward.14} parent=0 // pred_check_branch
    %22 = sbr.rel (0) target = $region5
  $region4: #{clofnet_vel_forward.14} parent=0 // pred_region
    _
  $region5: #{clofnet_vel_forward.14} parent=0 // pred_fallthru
    _
  // Predicated region
  $region6: #{clofnet_vel_forward.14} parent=0 // pred_check
    _
  $region7: #{clofnet_vel_forward.14} parent=0 // pred_check_branch
    %24 = sbr.rel (0) target = $region9
  $region8: #{clofnet_vel_forward.14} parent=0 // pred_region
    _
  $region9: #{clofnet_vel_forward.14} parent=0 // pred_fallthru
    _
  // Predicated region
  $region10: #{clofnet_vel_forward.14} parent=0 // pred_check
    _
  $region11: #{clofnet_vel_forward.14} parent=0 // pred_check_branch
    %26 = sbr.rel (0) target = $region13
  $region12: #{clofnet_vel_forward.14} parent=0 // pred_region
    _
  $region13: #{clofnet_vel_forward.14} parent=0 // pred_fallthru
    _
  // Predicated region
  $region14: #{clofnet_vel_forward.14} parent=0 // pred_check
    _
  $region15: #{clofnet_vel_forward.14} parent=0 // pred_check_branch
    %28 = sbr.rel (0) target = $region17
  $region16: #{clofnet_vel_forward.14} parent=0 // pred_region
    _
  $region17: #{clofnet_vel_forward.14} parent=0 // pred_fallthru
    _
  // Predicated region
  $region18: #{clofnet_vel_forward.14} parent=0 // pred_check
    _
  $region19: #{clofnet_vel_forward.14} parent=0 // pred_check_branch
    %30 = sbr.rel (0) target = $region21
  $region20: #{clofnet_vel_forward.14} parent=0 // pred_region
    _
  $region21: #{clofnet_vel_forward.14} parent=0 // pred_fallthru
    _
  // Predicated region
  $region22: #{clofnet_vel_forward.14} parent=0 // pred_check
    _
  $region23: #{clofnet_vel_forward.14} parent=0 // pred_check_branch
    %32 = sbr.rel (0) target = $region25
  $region24: #{clofnet_vel_forward.14} parent=0 // pred_region
    _
  $region25: #{clofnet_vel_forward.14} parent=0 // pred_fallthru
    _
  // Predicated region
  $region26: #{clofnet_vel_forward.14} parent=0 // pred_check
    _
  $region27: #{clofnet_vel_forward.14} parent=0 // pred_check_branch
    %34 = sbr.rel (0) target = $region29
  $region28: #{clofnet_vel_forward.14} parent=0 // pred_region
    _
  $region29: #{clofnet_vel_forward.14} parent=0 // pred_fallthru
    _
  // Predicated region
  $region30: #{clofnet_vel_forward.14} parent=0 // pred_check
    _
  $region31: #{clofnet_vel_forward.14} parent=0 // pred_check_branch
    %36 = sbr.rel (0) target = $region33
  $region32: #{clofnet_vel_forward.14} parent=0 // pred_region
    _
  $region33: #{clofnet_vel_forward.14} parent=0 // pred_fallthru
    _
  // Predicated region
  $region34: #{clofnet_vel_forward.14} parent=0 // pred_check
    _
  $region35: #{clofnet_vel_forward.14} parent=0 // pred_check_branch
    %38 = sbr.rel (0) target = $region37
  $region36: #{clofnet_vel_forward.14} parent=0 // pred_region
    _
  $region37: #{clofnet_vel_forward.14} parent=0 // pred_fallthru
    _
  // Predicated region
  $region38: #{clofnet_vel_forward.14} parent=0 // pred_check
    _
  $region39: #{clofnet_vel_forward.14} parent=0 // pred_check_branch
    %40 = sbr.rel (0) target = $region41
  $region40: #{clofnet_vel_forward.14} parent=0 // pred_region
    _
  $region41: #{clofnet_vel_forward.14} parent=0 // pred_fallthru
    _
  // Predicated region
  $region42: #{clofnet_vel_forward.14} parent=0 // pred_check
    _
  $region43: #{clofnet_vel_forward.14} parent=0 // pred_check_branch
    %42 = sbr.rel (0) target = $region45
  $region44: #{clofnet_vel_forward.14} parent=0 // pred_region
    _
  $region45: #{clofnet_vel_forward.14} parent=0 // pred_fallthru
    _
  // Predicated region
  $region46: #{clofnet_vel_forward.14} parent=0 // pred_check
    _
  $region47: #{clofnet_vel_forward.14} parent=0 // pred_check_branch
    %44 = sbr.rel (0) target = $region49
  $region48: #{clofnet_vel_forward.14} parent=0 // pred_region
    _
  $region49: #{clofnet_vel_forward.14} parent=0 // pred_fallthru
    _
  %v45 = vld [vmem:[%s0] sm:$0xff]
  %v46 = vld [vmem:[%s0 + $0x8] sm:$0xff]
  %v47 = vld [vmem:[%s0 + $0x10] sm:$0xff]
  %v48 = vld [vmem:[%s0 + $0x18] sm:$0xff]
  %v49 = vld [vmem:[%s3] sm:$0xff]
  %v50 = vld [vmem:[%s3 + $0x8] sm:$0xff]
  %v51 = vld [vmem:[%s3 + $0x10] sm:$0xff]
  %v52 = vld [vmem:[%s3 + $0x18] sm:$0xff]
  %v53 = vld [vmem:[%s4] sm:$0xff]
  %v54 = vld [vmem:[%s4 + $0x8] sm:$0xff]
  %v55 = vld [vmem:[%s4 + $0x10] sm:$0xff]
  %v56 = vld [vmem:[%s4 + $0x18] sm:$0xff]
  %v57 = vld [vmem:[%s1] sm:$0xff]
  %v58 = vld [vmem:[%s1 + $0x8] sm:$0xff]
  %v59 = vld [vmem:[%s1 + $0x10] sm:$0xff]
  %v60 = vld [vmem:[%s1 + $0x18] sm:$0xff]
  %vm61 = vcmask 261120
  %v63 = vsel %vm61, %v53, 0
  %v66 = vsel %vm61, %v54, 0
  %v69 = vsel %vm61, %v55, 0
  %v72 = vsel %vm61, %v56, 0
  %74 = vmatprep.subr.mxu0 0.0
  %75 = vmatpush1.msra.mxu0 0.0
  %76 = vmatprep.subr.mxu0 0.0
  %77 = vmatpush1.msra.mxu0 0.0
  %78 = vmatprep.subr.mxu0 0.0
  %79 = vmatpush1.msra.mxu0 0.0
  %80 = vmatprep.subr.mxu0 0.0
  %81 = vmatpush1.msra.mxu0 0.0
  %82 = vmatprep.subr.mxu0 0.0
  %83 = vmatpush1.msra.mxu0 0.0
  %84 = vmatprep.subr.mxu0 0.0
  %85 = vmatpush1.msra.mxu0 0.0
  %86 = vmatprep.subr.mxu0 0.0
  %87 = vmatpush1.msra.mxu0 0.0
  %88 = vmatprep.subr.mxu0 0.0
  %89 = vmatpush1.msra.mxu0 0.0
  %90 = vmatprep.subr.mxu0 0.0
  %91 = vmatpush1.msra.mxu0 0.0
  %92 = vmatprep.subr.mxu0 0.0
  %93 = vmatpush1.msra.mxu0 0.0
  %94 = vmatprep.subr.mxu0 0.0
  %95 = vmatpush1.msra.mxu0 0.0
  %96 = vmatprep.subr.mxu0 0.0
  %97 = vmatpush1.msra.mxu0 0.0
  %98 = vmatprep.subr.mxu0 0.0
  %99 = vmatpush1.msra.mxu0 %v60
  %100 = vmatprep.subr.mxu0 0.0
  %101 = vmatpush1.msra.mxu0 %v59
  %102 = vmatprep.subr.mxu0 0.0
  %103 = vmatpush1.msra.mxu0 %v58
  %104 = vmatprep.subr.mxu0 0.0
  %105 = vmatpush1.msra.mxu0 %v57
  %106 = vmatprep.subr.mxu0 0.0
  %107 = vmatpush2.msra.mxu0 0.0
  %108 = vmatprep.subr.mxu0 0.0
  %109 = vmatpush2.msra.mxu0 0.0
  %110 = vmatprep.subr.mxu0 0.0
  %111 = vmatpush2.msra.mxu0 0.0
  %112 = vmatprep.subr.mxu0 0.0
  %113 = vmatpush2.msra.mxu0 0.0
  %114 = vmatprep.subr.mxu0 0.0
  %115 = vmatpush2.msra.mxu0 0.0
  %116 = vmatprep.subr.mxu0 0.0
  %117 = vmatpush2.msra.mxu0 0.0
  %118 = vmatprep.subr.mxu0 0.0
  %119 = vmatpush2.msra.mxu0 0.0
  %120 = vmatprep.subr.mxu0 0.0
  %121 = vmatpush2.msra.mxu0 0.0
  %122 = vmatprep.subr.mxu0 0.0
  %123 = vmatpush2.msra.mxu0 0.0
  %124 = vmatprep.subr.mxu0 0.0
  %125 = vmatpush2.msra.mxu0 0.0
  %126 = vmatprep.subr.mxu0 0.0
  %127 = vmatpush2.msra.mxu0 0.0
  %128 = vmatprep.subr.mxu0 0.0
  %129 = vmatpush2.msra.mxu0 0.0
  %130 = vmatprep.subr.mxu0 0.0
  %131 = vmatpush2.msra.mxu0 0.0
  %132 = vmatprep.subr.mxu0 0.0
  %133 = vmatpush2.msra.mxu0 0.0
  %134 = vmatprep.subr.mxu0 0.0
  %135 = vmatpush2.msra.mxu0 0.0
  %136 = vmatprep.subr.mxu0 0.0
  %137 = vmatpush2.msra.mxu0 0.0
  %138 = vmatprep.mubr.f32.mxu0 0.0
  %139 = vmatmul.mubr.f32.gmra.mxu0 %v63
  %v140 = vpop.f32.mrf.mxu0
  %v141 = vadd.f32 0.0, %v140
  %v142 = vpop.f32.mrf.mxu0
  %143 = vmatprep.mubr.f32.mxu0 0.0
  %144 = vmatmul.mubr.f32.gmra.mxu0 %v66
  %v145 = vpop.f32.mrf.mxu0
  %v146 = vadd.f32 0.0, %v145
  %v147 = vpop.f32.mrf.mxu0
  %148 = vmatprep.mubr.f32.mxu0 0.0
  %149 = vmatmul.mubr.f32.gmra.mxu0 %v69
  %v150 = vpop.f32.mrf.mxu0
  %v151 = vadd.f32 0.0, %v150
  %v152 = vpop.f32.mrf.mxu0
  %153 = vmatprep.mubr.f32.mxu0 0.0
  %154 = vmatmul.mubr.f32.gmra.mxu0 %v72
  %v155 = vpop.f32.mrf.mxu0
  %v156 = vadd.f32 0.0, %v155
  %v157 = vpop.f32.mrf.mxu0
  %158 = vdwg.mxu0
  %v160 = vsel %vm61, %v49, 0
  %v163 = vsel %vm61, %v50, 0
  %v166 = vsel %vm61, %v51, 0
  %v169 = vsel %vm61, %v52, 0
  %171 = vmatprep.subr.mxu0 0.0
  %172 = vmatpush1.msra.mxu0 0.0
  %173 = vmatprep.subr.mxu0 0.0
  %174 = vmatpush1.msra.mxu0 0.0
  %175 = vmatprep.subr.mxu0 0.0
  %176 = vmatpush1.msra.mxu0 0.0
  %177 = vmatprep.subr.mxu0 0.0
  %178 = vmatpush1.msra.mxu0 0.0
  %179 = vmatprep.subr.mxu0 0.0
  %180 = vmatpush1.msra.mxu0 0.0
  %181 = vmatprep.subr.mxu0 0.0
  %182 = vmatpush1.msra.mxu0 0.0
  %183 = vmatprep.subr.mxu0 0.0
  %184 = vmatpush1.msra.mxu0 0.0
  %185 = vmatprep.subr.mxu0 0.0
  %186 = vmatpush1.msra.mxu0 0.0
  %187 = vmatprep.subr.mxu0 0.0
  %188 = vmatpush1.msra.mxu0 0.0
  %189 = vmatprep.subr.mxu0 0.0
  %190 = vmatpush1.msra.mxu0 0.0
  %191 = vmatprep.subr.mxu0 0.0
  %192 = vmatpush1.msra.mxu0 0.0
  %193 = vmatprep.subr.mxu0 0.0
  %194 = vmatpush1.msra.mxu0 0.0
  %195 = vmatprep.subr.mxu0 0.0
  %196 = vmatpush1.msra.mxu0 %v48
  %197 = vmatprep.subr.mxu0 0.0
  %198 = vmatpush1.msra.mxu0 %v47
  %199 = vmatprep.subr.mxu0 0.0
  %200 = vmatpush1.msra.mxu0 %v46
  %201 = vmatprep.subr.mxu0 0.0
  %202 = vmatpush1.msra.mxu0 %v45
  %203 = vmatprep.subr.mxu0 0.0
  %204 = vmatpush2.msra.mxu0 0.0
  %205 = vmatprep.subr.mxu0 0.0
  %206 = vmatpush2.msra.mxu0 0.0
  %207 = vmatprep.subr.mxu0 0.0
  %208 = vmatpush2.msra.mxu0 0.0
  %209 = vmatprep.subr.mxu0 0.0
  %210 = vmatpush2.msra.mxu0 0.0
  %211 = vmatprep.subr.mxu0 0.0
  %212 = vmatpush2.msra.mxu0 0.0
  %213 = vmatprep.subr.mxu0 0.0
  %214 = vmatpush2.msra.mxu0 0.0
  %215 = vmatprep.subr.mxu0 0.0
  %216 = vmatpush2.msra.mxu0 0.0
  %217 = vmatprep.subr.mxu0 0.0
  %218 = vmatpush2.msra.mxu0 0.0
  %219 = vmatprep.subr.mxu0 0.0
  %220 = vmatpush2.msra.mxu0 0.0
  %221 = vmatprep.subr.mxu0 0.0
  %222 = vmatpush2.msra.mxu0 0.0
  %223 = vmatprep.subr.mxu0 0.0
  %224 = vmatpush2.msra.mxu0 0.0
  %225 = vmatprep.subr.mxu0 0.0
  %226 = vmatpush2.msra.mxu0 0.0
  %227 = vmatprep.subr.mxu0 0.0
  %228 = vmatpush2.msra.mxu0 0.0
  %229 = vmatprep.subr.mxu0 0.0
  %230 = vmatpush2.msra.mxu0 0.0
  %231 = vmatprep.subr.mxu0 0.0
  %232 = vmatpush2.msra.mxu0 0.0
  %233 = vmatprep.subr.mxu0 0.0
  %234 = vmatpush2.msra.mxu0 0.0
  %235 = vmatprep.mubr.f32.mxu0 0.0
  %236 = vmatmul.mubr.f32.gmra.mxu0 %v160
  %v237 = vpop.f32.mrf.mxu0
  %v238 = vadd.f32 %v141, %v237
  %v239 = vpop.f32.mrf.mxu0
  %240 = vmatprep.mubr.f32.mxu0 0.0
  %241 = vmatmul.mubr.f32.gmra.mxu0 %v163
  %v242 = vpop.f32.mrf.mxu0
  %v243 = vadd.f32 %v146, %v242
  %v244 = vpop.f32.mrf.mxu0
  %245 = vmatprep.mubr.f32.mxu0 0.0
  %246 = vmatmul.mubr.f32.gmra.mxu0 %v166
  %v247 = vpop.f32.mrf.mxu0
  %v248 = vadd.f32 %v151, %v247
  %v249 = vpop.f32.mrf.mxu0
  %250 = vmatprep.mubr.f32.mxu0 0.0
  %251 = vmatmul.mubr.f32.gmra.mxu0 %v169
  %v252 = vpop.f32.mrf.mxu0
  %v253 = vadd.f32 %v156, %v252
  %v254 = vpop.f32.mrf.mxu0
  %255 = vdwg.mxu0
  %v256 = vld [vmem:[%s5] sm:$0xff]
  %v257 = vld [vmem:[%s5 + $0x8] sm:$0xff]
  %v258 = vld [vmem:[%s5 + $0x10] sm:$0xff]
  %v259 = vld [vmem:[%s5 + $0x18] sm:$0xff]
  %261 = vset.pattern.permute.xlu0 0
  %262 = vperm.xlu0 %261, %v256
  %v263 = vpop.permute.xlu0 %262
  %266 = vset.pattern.permute.xlu0 0
  %267 = vperm.xlu0 %266, %v257
  %v268 = vpop.permute.xlu0 %267
  %271 = vset.pattern.permute.xlu0 0
  %272 = vperm.xlu0 %271, %v258
  %v273 = vpop.permute.xlu0 %272
  %276 = vset.pattern.permute.xlu0 0
  %277 = vperm.xlu0 %276, %v259
  %v278 = vpop.permute.xlu0 %277
  %v280 = vadd.f32 %v238, %v263
  %v281 = vadd.f32 %v243, %v268
  %v282 = vadd.f32 %v248, %v273
  %v283 = vadd.f32 %v253, %v278
  %v284 = vmax.f32 %v280, 0.0
  %v285 = vmax.f32 %v281, 0.0
  %v286 = vmax.f32 %v282, 0.0
  %v287 = vmax.f32 %v283, 0.0
  %v288 = vld [vmem:[%s6] sm:$0xff]
  %v289 = vld [vmem:[%s6 + $0x8] sm:$0xff]
  %v290 = vld [vmem:[%s6 + $0x10] sm:$0xff]
  %v291 = vld [vmem:[%s6 + $0x18] sm:$0xff]
  %v292 = vld [vmem:[%s7] sm:$0xff]
  %v293 = vld [vmem:[%s7 + $0x8] sm:$0xff]
  %v294 = vld [vmem:[%s7 + $0x10] sm:$0xff]
  %v295 = vld [vmem:[%s7 + $0x18] sm:$0xff]
  %297 = vset.pattern.permute.xlu0 0
  %298 = vperm.xlu0 %297, %v292
  %v299 = vpop.permute.xlu0 %298
  %302 = vset.pattern.permute.xlu0 0
  %303 = vperm.xlu0 %302, %v293
  %v304 = vpop.permute.xlu0 %303
  %307 = vset.pattern.permute.xlu0 0
  %308 = vperm.xlu0 %307, %v294
  %v309 = vpop.permute.xlu0 %308
  %312 = vset.pattern.permute.xlu0 0
  %313 = vperm.xlu0 %312, %v295
  %v314 = vpop.permute.xlu0 %313
  %v317 = vsel %vm61, %v288, 0
  %v320 = vsel %vm61, %v289, 0
  %v323 = vsel %vm61, %v290, 0
  %v326 = vsel %vm61, %v291, 0
  %328 = vmatprep.subr.mxu0 0.0
  %329 = vmatpush1.msra.mxu0 0.0
  %330 = vmatprep.subr.mxu0 0.0
  %331 = vmatpush1.msra.mxu0 0.0
  %332 = vmatprep.subr.mxu0 0.0
  %333 = vmatpush1.msra.mxu0 0.0
  %334 = vmatprep.subr.mxu0 0.0
  %335 = vmatpush1.msra.mxu0 0.0
  %336 = vmatprep.subr.mxu0 0.0
  %337 = vmatpush1.msra.mxu0 0.0
  %338 = vmatprep.subr.mxu0 0.0
  %339 = vmatpush1.msra.mxu0 0.0
  %340 = vmatprep.subr.mxu0 0.0
  %341 = vmatpush1.msra.mxu0 0.0
  %342 = vmatprep.subr.mxu0 0.0
  %343 = vmatpush1.msra.mxu0 0.0
  %344 = vmatprep.subr.mxu0 0.0
  %345 = vmatpush1.msra.mxu0 0.0
  %346 = vmatprep.subr.mxu0 0.0
  %347 = vmatpush1.msra.mxu0 0.0
  %348 = vmatprep.subr.mxu0 0.0
  %349 = vmatpush1.msra.mxu0 0.0
  %350 = vmatprep.subr.mxu0 0.0
  %351 = vmatpush1.msra.mxu0 0.0
  %352 = vmatprep.subr.mxu0 0.0
  %353 = vmatpush1.msra.mxu0 %v287
  %354 = vmatprep.subr.mxu0 0.0
  %355 = vmatpush1.msra.mxu0 %v286
  %356 = vmatprep.subr.mxu0 0.0
  %357 = vmatpush1.msra.mxu0 %v285
  %358 = vmatprep.subr.mxu0 0.0
  %359 = vmatpush1.msra.mxu0 %v284
  %360 = vmatprep.subr.mxu0 0.0
  %361 = vmatpush2.msra.mxu0 0.0
  %362 = vmatprep.subr.mxu0 0.0
  %363 = vmatpush2.msra.mxu0 0.0
  %364 = vmatprep.subr.mxu0 0.0
  %365 = vmatpush2.msra.mxu0 0.0
  %366 = vmatprep.subr.mxu0 0.0
  %367 = vmatpush2.msra.mxu0 0.0
  %368 = vmatprep.subr.mxu0 0.0
  %369 = vmatpush2.msra.mxu0 0.0
  %370 = vmatprep.subr.mxu0 0.0
  %371 = vmatpush2.msra.mxu0 0.0
  %372 = vmatprep.subr.mxu0 0.0
  %373 = vmatpush2.msra.mxu0 0.0
  %374 = vmatprep.subr.mxu0 0.0
  %375 = vmatpush2.msra.mxu0 0.0
  %376 = vmatprep.subr.mxu0 0.0
  %377 = vmatpush2.msra.mxu0 0.0
  %378 = vmatprep.subr.mxu0 0.0
  %379 = vmatpush2.msra.mxu0 0.0
  %380 = vmatprep.subr.mxu0 0.0
  %381 = vmatpush2.msra.mxu0 0.0
  %382 = vmatprep.subr.mxu0 0.0
  %383 = vmatpush2.msra.mxu0 0.0
  %384 = vmatprep.subr.mxu0 0.0
  %385 = vmatpush2.msra.mxu0 0.0
  %386 = vmatprep.subr.mxu0 0.0
  %387 = vmatpush2.msra.mxu0 0.0
  %388 = vmatprep.subr.mxu0 0.0
  %389 = vmatpush2.msra.mxu0 0.0
  %390 = vmatprep.subr.mxu0 0.0
  %391 = vmatpush2.msra.mxu0 0.0
  %392 = vmatprep.mubr.f32.mxu0 0.0
  %393 = vmatmul.mubr.f32.gmra.mxu0 %v317
  %v394 = vpop.f32.mrf.mxu0
  %v395 = vadd.f32 %v299, %v394
  %v396 = vpop.f32.mrf.mxu0
  %397 = vmatprep.mubr.f32.mxu0 0.0
  %398 = vmatmul.mubr.f32.gmra.mxu0 %v320
  %v399 = vpop.f32.mrf.mxu0
  %v400 = vadd.f32 %v304, %v399
  %v401 = vpop.f32.mrf.mxu0
  %402 = vmatprep.mubr.f32.mxu0 0.0
  %403 = vmatmul.mubr.f32.gmra.mxu0 %v323
  %v404 = vpop.f32.mrf.mxu0
  %v405 = vadd.f32 %v309, %v404
  %v406 = vpop.f32.mrf.mxu0
  %407 = vmatprep.mubr.f32.mxu0 0.0
  %408 = vmatmul.mubr.f32.gmra.mxu0 %v326
  %v409 = vpop.f32.mrf.mxu0
  %v410 = vadd.f32 %v314, %v409
  %v411 = vpop.f32.mrf.mxu0
  %412 = vdwg.mxu0
  %v413 = vadd.f32 %v45, %v395
  %v414 = vadd.f32 %v46, %v400
  %v415 = vadd.f32 %v47, %v405
  %v416 = vadd.f32 %v48, %v410
  %vm417 = vcmask 80896
  %418 = vst.msk [vmem:[%s12] sm:$0xff] %vm417, %v413
  %419 = vst.msk [vmem:[%s12 + $0x8] sm:$0xff] %vm417, %v414
  %420 = vst.msk [vmem:[%s12 + $0x10] sm:$0xff] %vm417, %v415
  %421 = vst.msk [vmem:[%s12 + $0x18] sm:$0xff] %vm417, %v416
  %v422 = vld [vmem:[%s8] sm:$0xff]
  %v423 = vld [vmem:[%s8 + $0x8] sm:$0xff]
  %v424 = vld [vmem:[%s8 + $0x10] sm:$0xff]
  %v425 = vld [vmem:[%s8 + $0x18] sm:$0xff]
  %v426 = vld [vmem:[%s9] sm:$0xff]
  %v427 = vld [vmem:[%s9 + $0x8] sm:$0xff]
  %v428 = vld [vmem:[%s9 + $0x10] sm:$0xff]
  %v429 = vld [vmem:[%s9 + $0x18] sm:$0xff]
  %431 = vset.pattern.permute.xlu0 0
  %432 = vperm.xlu0 %431, %v426
  %v433 = vpop.permute.xlu0 %432
  %436 = vset.pattern.permute.xlu0 0
  %437 = vperm.xlu0 %436, %v427
  %v438 = vpop.permute.xlu0 %437
  %441 = vset.pattern.permute.xlu0 0
  %442 = vperm.xlu0 %441, %v428
  %v443 = vpop.permute.xlu0 %442
  %446 = vset.pattern.permute.xlu0 0
  %447 = vperm.xlu0 %446, %v429
  %v448 = vpop.permute.xlu0 %447
  %v451 = vsel %vm61, %v422, 0
  %v454 = vsel %vm61, %v423, 0
  %v457 = vsel %vm61, %v424, 0
  %v460 = vsel %vm61, %v425, 0
  %462 = vmatprep.subr.mxu0 0.0
  %463 = vmatpush1.msra.mxu0 0.0
  %464 = vmatprep.subr.mxu0 0.0
  %465 = vmatpush1.msra.mxu0 0.0
  %466 = vmatprep.subr.mxu0 0.0
  %467 = vmatpush1.msra.mxu0 0.0
  %468 = vmatprep.subr.mxu0 0.0
  %469 = vmatpush1.msra.mxu0 0.0
  %470 = vmatprep.subr.mxu0 0.0
  %471 = vmatpush1.msra.mxu0 0.0
  %472 = vmatprep.subr.mxu0 0.0
  %473 = vmatpush1.msra.mxu0 0.0
  %474 = vmatprep.subr.mxu0 0.0
  %475 = vmatpush1.msra.mxu0 0.0
  %476 = vmatprep.subr.mxu0 0.0
  %477 = vmatpush1.msra.mxu0 0.0
  %478 = vmatprep.subr.mxu0 0.0
  %479 = vmatpush1.msra.mxu0 0.0
  %480 = vmatprep.subr.mxu0 0.0
  %481 = vmatpush1.msra.mxu0 0.0
  %482 = vmatprep.subr.mxu0 0.0
  %483 = vmatpush1.msra.mxu0 0.0
  %484 = vmatprep.subr.mxu0 0.0
  %485 = vmatpush1.msra.mxu0 0.0
  %486 = vmatprep.subr.mxu0 0.0
  %487 = vmatpush1.msra.mxu0 %v48
  %488 = vmatprep.subr.mxu0 0.0
  %489 = vmatpush1.msra.mxu0 %v47
  %490 = vmatprep.subr.mxu0 0.0
  %491 = vmatpush1.msra.mxu0 %v46
  %492 = vmatprep.subr.mxu0 0.0
  %493 = vmatpush1.msra.mxu0 %v45
  %494 = vmatprep.subr.mxu0 0.0
  %495 = vmatpush2.msra.mxu0 0.0
  %496 = vmatprep.subr.mxu0 0.0
  %497 = vmatpush2.msra.mxu0 0.0
  %498 = vmatprep.subr.mxu0 0.0
  %499 = vmatpush2.msra.mxu0 0.0
  %500 = vmatprep.subr.mxu0 0.0
  %501 = vmatpush2.msra.mxu0 0.0
  %502 = vmatprep.subr.mxu0 0.0
  %503 = vmatpush2.msra.mxu0 0.0
  %504 = vmatprep.subr.mxu0 0.0
  %505 = vmatpush2.msra.mxu0 0.0
  %506 = vmatprep.subr.mxu0 0.0
  %507 = vmatpush2.msra.mxu0 0.0
  %508 = vmatprep.subr.mxu0 0.0
  %509 = vmatpush2.msra.mxu0 0.0
  %510 = vmatprep.subr.mxu0 0.0
  %511 = vmatpush2.msra.mxu0 0.0
  %512 = vmatprep.subr.mxu0 0.0
  %513 = vmatpush2.msra.mxu0 0.0
  %514 = vmatprep.subr.mxu0 0.0
  %515 = vmatpush2.msra.mxu0 0.0
  %516 = vmatprep.subr.mxu0 0.0
  %517 = vmatpush2.msra.mxu0 0.0
  %518 = vmatprep.subr.mxu0 0.0
  %519 = vmatpush2.msra.mxu0 0.0
  %520 = vmatprep.subr.mxu0 0.0
  %521 = vmatpush2.msra.mxu0 0.0
  %522 = vmatprep.subr.mxu0 0.0
  %523 = vmatpush2.msra.mxu0 0.0
  %524 = vmatprep.subr.mxu0 0.0
  %525 = vmatpush2.msra.mxu0 0.0
  %526 = vmatprep.mubr.f32.mxu0 0.0
  %527 = vmatmul.mubr.f32.gmra.mxu0 %v451
  %v528 = vpop.f32.mrf.mxu0
  %v529 = vadd.f32 %v433, %v528
  %v530 = vpop.f32.mrf.mxu0
  %531 = vmatprep.mubr.f32.mxu0 0.0
  %532 = vmatmul.mubr.f32.gmra.mxu0 %v454
  %v533 = vpop.f32.mrf.mxu0
  %v534 = vadd.f32 %v438, %v533
  %v535 = vpop.f32.mrf.mxu0
  %536 = vmatprep.mubr.f32.mxu0 0.0
  %537 = vmatmul.mubr.f32.gmra.mxu0 %v457
  %v538 = vpop.f32.mrf.mxu0
  %v539 = vadd.f32 %v443, %v538
  %v540 = vpop.f32.mrf.mxu0
  %541 = vmatprep.mubr.f32.mxu0 0.0
  %542 = vmatmul.mubr.f32.gmra.mxu0 %v460
  %v543 = vpop.f32.mrf.mxu0
  %v544 = vadd.f32 %v448, %v543
  %v545 = vpop.f32.mrf.mxu0
  %546 = vdwg.mxu0
  %v547 = vmax.f32 %v529, 0.0
  %v548 = vmax.f32 %v534, 0.0
  %v549 = vmax.f32 %v539, 0.0
  %v550 = vmax.f32 %v544, 0.0
  %v551 = vld [vmem:[%s10] sm:$0x1]
  %v552 = vld [vmem:[#allocation2] sm:$0x1]
  %554 = vset.pattern.permute.xlu0 0
  %555 = vperm.xlu0 %554, %v552
  %v556 = vpop.permute.xlu0 %555
  %v558 = vlaneseq
  %v559 = vshrl.u32 %v558, 7
  %v560 = vsub.s32 0, %v559
  %v561 = vrot.slane %v556, %v560
  %v563 = vsel %vm61, %v551, 0
  %565 = vmatprep.subr.mxu0 0.0
  %566 = vmatpush1.msra.mxu0 0.0
  %567 = vmatprep.subr.mxu0 0.0
  %568 = vmatpush1.msra.mxu0 0.0
  %569 = vmatprep.subr.mxu0 0.0
  %570 = vmatpush1.msra.mxu0 0.0
  %571 = vmatprep.subr.mxu0 0.0
  %572 = vmatpush1.msra.mxu0 0.0
  %573 = vmatprep.subr.mxu0 0.0
  %574 = vmatpush1.msra.mxu0 0.0
  %575 = vmatprep.subr.mxu0 0.0
  %576 = vmatpush1.msra.mxu0 0.0
  %577 = vmatprep.subr.mxu0 0.0
  %578 = vmatpush1.msra.mxu0 0.0
  %579 = vmatprep.subr.mxu0 0.0
  %580 = vmatpush1.msra.mxu0 0.0
  %581 = vmatprep.subr.mxu0 0.0
  %582 = vmatpush1.msra.mxu0 0.0
  %583 = vmatprep.subr.mxu0 0.0
  %584 = vmatpush1.msra.mxu0 0.0
  %585 = vmatprep.subr.mxu0 0.0
  %586 = vmatpush1.msra.mxu0 0.0
  %587 = vmatprep.subr.mxu0 0.0
  %588 = vmatpush1.msra.mxu0 0.0
  %589 = vmatprep.subr.mxu0 0.0
  %590 = vmatpush1.msra.mxu0 %v550
  %591 = vmatprep.subr.mxu0 0.0
  %592 = vmatpush1.msra.mxu0 %v549
  %593 = vmatprep.subr.mxu0 0.0
  %594 = vmatpush1.msra.mxu0 %v548
  %595 = vmatprep.subr.mxu0 0.0
  %596 = vmatpush1.msra.mxu0 %v547
  %597 = vmatprep.subr.mxu0 0.0
  %598 = vmatpush2.msra.mxu0 0.0
  %599 = vmatprep.subr.mxu0 0.0
  %600 = vmatpush2.msra.mxu0 0.0
  %601 = vmatprep.subr.mxu0 0.0
  %602 = vmatpush2.msra.mxu0 0.0
  %603 = vmatprep.subr.mxu0 0.0
  %604 = vmatpush2.msra.mxu0 0.0
  %605 = vmatprep.subr.mxu0 0.0
  %606 = vmatpush2.msra.mxu0 0.0
  %607 = vmatprep.subr.mxu0 0.0
  %608 = vmatpush2.msra.mxu0 0.0
  %609 = vmatprep.subr.mxu0 0.0
  %610 = vmatpush2.msra.mxu0 0.0
  %611 = vmatprep.subr.mxu0 0.0
  %612 = vmatpush2.msra.mxu0 0.0
  %613 = vmatprep.subr.mxu0 0.0
  %614 = vmatpush2.msra.mxu0 0.0
  %615 = vmatprep.subr.mxu0 0.0
  %616 = vmatpush2.msra.mxu0 0.0
  %617 = vmatprep.subr.mxu0 0.0
  %618 = vmatpush2.msra.mxu0 0.0
  %619 = vmatprep.subr.mxu0 0.0
  %620 = vmatpush2.msra.mxu0 0.0
  %621 = vmatprep.subr.mxu0 0.0
  %622 = vmatpush2.msra.mxu0 0.0
  %623 = vmatprep.subr.mxu0 0.0
  %624 = vmatpush2.msra.mxu0 0.0
  %625 = vmatprep.subr.mxu0 0.0
  %626 = vmatpush2.msra.mxu0 0.0
  %627 = vmatprep.subr.mxu0 0.0
  %628 = vmatpush2.msra.mxu0 0.0
  %629 = vmatprep.mubr.f32.mxu0 0.0
  %630 = vmatmul.mubr.f32.gmra.mxu0 %v563
  %v631 = vpop.f32.mrf.mxu0
  %v632 = vadd.f32 %v561, %v631
  %v633 = vpop.f32.mrf.mxu0
  %634 = vdwg.mxu0
  %v635 = vld [vmem:[%s2] sm:$0x7]
  %v636 = vlaneseq
  %v637 = vshrl.u32 %v636, 7
  %v638 = vsub.s32 0, %v637
  %v639 = vrot.slane %v632, %v638
  %v640 = vmul.f32 %v639, %v635
  %vm641 = vcmask 75776
  %642 = vst.msk [vmem:[%s13] sm:$0x7] %vm641, %v640
  // Predicated region
  $region50: #{clofnet_vel_forward.14} parent=0 // pred_check
    _
  $region51: #{clofnet_vel_forward.14} parent=0 // pred_check_branch
    %644 = sbr.rel (0) target = $region53
  $region52: #{clofnet_vel_forward.14} parent=0 // pred_region
    _
  $region53: #{clofnet_vel_forward.14} parent=0 // pred_fallthru
    _
  // Predicated region
  $region54: #{clofnet_vel_forward.14} parent=0 // pred_check
    _
  $region55: #{clofnet_vel_forward.14} parent=0 // pred_check_branch
    %646 = sbr.rel (0) target = $region57
  $region56: #{clofnet_vel_forward.14} parent=0 // pred_region
    _
  $region57: #{clofnet_vel_forward.14} parent=0 // pred_fallthru
    _
  // Predicated region
  $region58: #{clofnet_vel_forward.14} parent=0 // pred_check
    _
  $region59: #{clofnet_vel_forward.14} parent=0 // pred_check_branch
    %648 = sbr.rel (0) target = $region61
  $region60: #{clofnet_vel_forward.14} parent=0 // pred_region
    _
  $region61: #{clofnet_vel_forward.14} parent=0 // pred_fallthru
    _
  // Predicated region
  $region62: #{clofnet_vel_forward.14} parent=0 // pred_check
    _
  $region63: #{clofnet_vel_forward.14} parent=0 // pred_check_branch
    %650 = sbr.rel (0) target = $region65
  $region64: #{clofnet_vel_forward.14} parent=0 // pred_region
    _
  $region65: #{clofnet_vel_forward.14} parent=0 // pred_fallthru
    _

// kernel: clofnet_vel_forward.13
$region0: #{clofnet_vel_forward.13}
  #allocation0 [shape = 'u32[]', space=smem, size = 0x4, offset = 0x4, fixed_abs, tag = 'smem constant byte address 0x4 - core index']
  #allocation1 [shape = 'u32[144,128]{1,0:T(1,128)}', space=vmem, size = 0x12000, scoped, tag = 'internal scratch']
  %s0 = inlined_call_operand.vmem [shape: f32[3,40], index: 0, kind: input, shape index: {}]
  %s1 = inlined_call_operand.vmem [shape: f32[3,40], index: 1, kind: input, shape index: {}]
  %s2 = inlined_call_operand.vmem [shape: f32[32,40], index: 2, kind: input, shape index: {}]
  %s3 = inlined_call_operand.vmem [shape: f32[32,40], index: 3, kind: input, shape index: {}]
  %s4 = inlined_call_operand.vmem [shape: f32[16,40], index: 4, kind: input, shape index: {}]
  %s5 = inlined_call_operand.vmem [shape: f32[32,32], index: 5, kind: input, shape index: {}]
  %s6 = inlined_call_operand.vmem [shape: f32[32,32], index: 6, kind: input, shape index: {}]
  %s7 = inlined_call_operand.vmem [shape: f32[32,1], index: 7, kind: input, shape index: {}]
  %s8 = inlined_call_operand.vmem [shape: f32[32,16], index: 8, kind: input, shape index: {}]
  %s9 = inlined_call_operand.vmem [shape: f32[32,1], index: 9, kind: input, shape index: {}]
  %s10 = inlined_call_operand.vmem [shape: f32[32,32], index: 10, kind: input, shape index: {}]
  %s11 = inlined_call_operand.vmem [shape: f32[32,1], index: 11, kind: input, shape index: {}]
  %s12 = inlined_call_operand.vmem [shape: f32[32,32], index: 12, kind: input, shape index: {}]
  %s13 = inlined_call_operand.vmem [shape: f32[32,1], index: 13, kind: input, shape index: {}]
  %s14 = inlined_call_operand.vmem [shape: f32[3,32], index: 14, kind: input, shape index: {}]
  %s15 = inlined_call_operand.vmem [shape: f32[32,40], index: 15, kind: output, shape index: {0}]
  %s16 = inlined_call_operand.vmem [shape: f32[3,40], index: 16, kind: output, shape index: {1}]
  %17 = xla_tuple %s15, %s16
  %s18 = sld [smem:[#allocation0]]
  $region78: #{clofnet_vel_forward.13} parent=0
    _
  %s20 = ssub.s32 1, %s18
  %s21 = scalar_select 0, %s20, %s18
  // Predicated region
  $region2: #{clofnet_vel_forward.13} parent=0 // pred_check
    _
  $region3: #{clofnet_vel_forward.13} parent=0 // pred_check_branch
    %23 = sbr.rel (0) target = $region5
  $region4: #{clofnet_vel_forward.13} parent=0 // pred_region
    _
  $region5: #{clofnet_vel_forward.13} parent=0 // pred_fallthru
    _
  // Predicated region
  $region6: #{clofnet_vel_forward.13} parent=0 // pred_check
    _
  $region7: #{clofnet_vel_forward.13} parent=0 // pred_check_branch
    %25 = sbr.rel (0) target = $region9
  $region8: #{clofnet_vel_forward.13} parent=0 // pred_region
    _
  $region9: #{clofnet_vel_forward.13} parent=0 // pred_fallthru
    _
  // Predicated region
  $region10: #{clofnet_vel_forward.13} parent=0 // pred_check
    _
  $region11: #{clofnet_vel_forward.13} parent=0 // pred_check_branch
    %27 = sbr.rel (0) target = $region13
  $region12: #{clofnet_vel_forward.13} parent=0 // pred_region
    _
  $region13: #{clofnet_vel_forward.13} parent=0 // pred_fallthru
    _
  // Predicated region
  $region14: #{clofnet_vel_forward.13} parent=0 // pred_check
    _
  $region15: #{clofnet_vel_forward.13} parent=0 // pred_check_branch
    %29 = sbr.rel (0) target = $region17
  $region16: #{clofnet_vel_forward.13} parent=0 // pred_region
    _
  $region17: #{clofnet_vel_forward.13} parent=0 // pred_fallthru
    _
  // Predicated region
  $region18: #{clofnet_vel_forward.13} parent=0 // pred_check
    _
  $region19: #{clofnet_vel_forward.13} parent=0 // pred_check_branch
    %31 = sbr.rel (0) target = $region21
  $region20: #{clofnet_vel_forward.13} parent=0 // pred_region
    _
  $region21: #{clofnet_vel_forward.13} parent=0 // pred_fallthru
    _
  // Predicated region
  $region22: #{clofnet_vel_forward.13} parent=0 // pred_check
    _
  $region23: #{clofnet_vel_forward.13} parent=0 // pred_check_branch
    %33 = sbr.rel (0) target = $region25
  $region24: #{clofnet_vel_forward.13} parent=0 // pred_region
    _
  $region25: #{clofnet_vel_forward.13} parent=0 // pred_fallthru
    _
  // Predicated region
  $region26: #{clofnet_vel_forward.13} parent=0 // pred_check
    _
  $region27: #{clofnet_vel_forward.13} parent=0 // pred_check_branch
    %35 = sbr.rel (0) target = $region29
  $region28: #{clofnet_vel_forward.13} parent=0 // pred_region
    _
  $region29: #{clofnet_vel_forward.13} parent=0 // pred_fallthru
    _
  // Predicated region
  $region30: #{clofnet_vel_forward.13} parent=0 // pred_check
    _
  $region31: #{clofnet_vel_forward.13} parent=0 // pred_check_branch
    %37 = sbr.rel (0) target = $region33
  $region32: #{clofnet_vel_forward.13} parent=0 // pred_region
    _
  $region33: #{clofnet_vel_forward.13} parent=0 // pred_fallthru
    _
  // Predicated region
  $region34: #{clofnet_vel_forward.13} parent=0 // pred_check
    _
  $region35: #{clofnet_vel_forward.13} parent=0 // pred_check_branch
    %39 = sbr.rel (0) target = $region37
  $region36: #{clofnet_vel_forward.13} parent=0 // pred_region
    _
  $region37: #{clofnet_vel_forward.13} parent=0 // pred_fallthru
    _
  // Predicated region
  $region38: #{clofnet_vel_forward.13} parent=0 // pred_check
    _
  $region39: #{clofnet_vel_forward.13} parent=0 // pred_check_branch
    %41 = sbr.rel (0) target = $region41
  $region40: #{clofnet_vel_forward.13} parent=0 // pred_region
    _
  $region41: #{clofnet_vel_forward.13} parent=0 // pred_fallthru
    _
  // Predicated region
  $region42: #{clofnet_vel_forward.13} parent=0 // pred_check
    _
  $region43: #{clofnet_vel_forward.13} parent=0 // pred_check_branch
    %43 = sbr.rel (0) target = $region45
  $region44: #{clofnet_vel_forward.13} parent=0 // pred_region
    _
  $region45: #{clofnet_vel_forward.13} parent=0 // pred_fallthru
    _
  // Predicated region
  $region46: #{clofnet_vel_forward.13} parent=0 // pred_check
    _
  $region47: #{clofnet_vel_forward.13} parent=0 // pred_check_branch
    %45 = sbr.rel (0) target = $region49
  $region48: #{clofnet_vel_forward.13} parent=0 // pred_region
    _
  $region49: #{clofnet_vel_forward.13} parent=0 // pred_fallthru
    _
  // Predicated region
  $region50: #{clofnet_vel_forward.13} parent=0 // pred_check
    _
  $region51: #{clofnet_vel_forward.13} parent=0 // pred_check_branch
    %47 = sbr.rel (0) target = $region53
  $region52: #{clofnet_vel_forward.13} parent=0 // pred_region
    _
  $region53: #{clofnet_vel_forward.13} parent=0 // pred_fallthru
    _
  // Predicated region
  $region54: #{clofnet_vel_forward.13} parent=0 // pred_check
    _
  $region55: #{clofnet_vel_forward.13} parent=0 // pred_check_branch
    %49 = sbr.rel (0) target = $region57
  $region56: #{clofnet_vel_forward.13} parent=0 // pred_region
    _
  $region57: #{clofnet_vel_forward.13} parent=0 // pred_fallthru
    _
  // Predicated region
  $region58: #{clofnet_vel_forward.13} parent=0 // pred_check
    _
  $region59: #{clofnet_vel_forward.13} parent=0 // pred_check_branch
    %51 = sbr.rel (0) target = $region61
  $region60: #{clofnet_vel_forward.13} parent=0 // pred_region
    _
  $region61: #{clofnet_vel_forward.13} parent=0 // pred_fallthru
    _
  %v52 = vld [vmem:[%s0] sm:$0x7]
  %v53 = vld [vmem:[%s1] sm:$0x7]
  %v54 = vsub.f32 %v52, %v53
  %v55 = vmul.f32 %v54, %v54
  %v57 = vrot.slane %v55, 1
  %v59 = vadd.f32 %v55, %v57
  %v60 = vrot.slane %v55, 2
  %v62 = vadd.f32 %v59, %v60
  %v64 = vrot.slane %v53, 1
  %v66 = vmul.f32 %v52, %v64
  %v67 = vrot.slane %v53, 7
  %v69 = vmul.f32 %v52, %v67
  %v71 = vrot.slane %v69, 1
  %v73 = vsub.f32 %v66, %v71
  %v74 = vrot.slane %v53, 6
  %v76 = vmul.f32 %v52, %v74
  %v77 = vrot.slane %v53, 2
  %v79 = vmul.f32 %v52, %v77
  %v81 = vrot.slane %v79, 6
  %v83 = vsub.f32 %v76, %v81
  %v84 = vrsqrt.pop %v62
  %v85 = vmul.f32 %v62, %v84
  %vm86 = vcmp.eq.f32.partialorder %v62, inf
  %v87 = vsel %vm86, %v62, %v85
  %vm88 = vcmp.eq.f32.partialorder %v62, 0.0
  %v89 = vand.u32 %v62, 2147483648
  %v90 = vsel %vm88, %v89, %v87
  %v91 = vadd.f32 %v90, 1.0
  %v92 = vrcp.pop %v91
  %v93 = vmul.f32 %v54, %v92
  %v95 = vrot.slane %v91, 7
  %v97 = vrcp.pop %v95
  %v98 = vmul.f32 %v54, %v97
  %v99 = vrot.slane %v91, 6
  %v101 = vrcp.pop %v99
  %v102 = vmul.f32 %v54, %v101
  %v103 = vmul.f32 %v73, %v73
  %v104 = vmul.f32 %v83, %v83
  %v106 = vrot.slane %v104, 1
  %v108 = vadd.f32 %v103, %v106
  %v110 = vrot.slane %v103, 7
  %v112 = vadd.f32 %v108, %v110
  %v113 = vrsqrt.pop %v112
  %v114 = vmul.f32 %v112, %v113
  %vm115 = vcmp.eq.f32.partialorder %v112, inf
  %v116 = vsel %vm115, %v112, %v114
  %vm117 = vcmp.eq.f32.partialorder %v112, 0.0
  %v118 = vand.u32 %v112, 2147483648
  %v119 = vsel %vm117, %v118, %v116
  %v120 = vadd.f32 %v119, 1.0
  %v121 = vrcp.pop %v120
  %v122 = vmul.f32 %v73, %v121
  %v124 = vrot.slane %v120, 7
  %v126 = vrcp.pop %v124
  %v127 = vmul.f32 %v83, %v126
  %v128 = vrot.slane %v120, 1
  %v130 = vrcp.pop %v128
  %v131 = vmul.f32 %v73, %v130
  %v133 = vrot.slane %v131, 7
  %v135 = vmul.f32 %v98, %v133
  %v136 = vmul.f32 %v102, %v127
  %v138 = vrot.slane %v136, 1
  %v140 = vsub.f32 %v135, %v138
  %v142 = vrot.slane %v122, 7
  %v144 = vmul.f32 %v102, %v142
  %v145 = vmul.f32 %v93, %v131
  %v147 = vrot.slane %v145, 6
  %v149 = vsub.f32 %v144, %v147
  %v151 = vrot.slane %v127, 2
  %v153 = vmul.f32 %v93, %v151
  %v154 = vmul.f32 %v98, %v122
  %v156 = vrot.slane %v154, 1
  %v158 = vsub.f32 %v153, %v156
  %v159 = vld [vmem:[%s5] sm:$0xff]
  %v160 = vld [vmem:[%s5 + $0x8] sm:$0xff]
  %v161 = vld [vmem:[%s5 + $0x10] sm:$0xff]
  %v162 = vld [vmem:[%s5 + $0x18] sm:$0xff]
  %v163 = vld [vmem:[%s2] sm:$0xff]
  %v164 = vld [vmem:[%s2 + $0x8] sm:$0xff]
  %v165 = vld [vmem:[%s2 + $0x10] sm:$0xff]
  %v166 = vld [vmem:[%s2 + $0x18] sm:$0xff]
  %v167 = vld [vmem:[%s6] sm:$0xff]
  %v168 = vld [vmem:[%s6 + $0x8] sm:$0xff]
  %v169 = vld [vmem:[%s6 + $0x10] sm:$0xff]
  %v170 = vld [vmem:[%s6 + $0x18] sm:$0xff]
  %v171 = vld [vmem:[%s3] sm:$0xff]
  %v172 = vld [vmem:[%s3 + $0x8] sm:$0xff]
  %v173 = vld [vmem:[%s3 + $0x10] sm:$0xff]
  %v174 = vld [vmem:[%s3 + $0x18] sm:$0xff]
  %vm175 = vcmask 261120
  %v177 = vsel %vm175, %v167, 0
  %v180 = vsel %vm175, %v168, 0
  %v183 = vsel %vm175, %v169, 0
  %v186 = vsel %vm175, %v170, 0
  %188 = vmatprep.subr.mxu0 0.0
  %189 = vmatpush1.msra.mxu0 0.0
  %190 = vmatprep.subr.mxu0 0.0
  %191 = vmatpush1.msra.mxu0 0.0
  %192 = vmatprep.subr.mxu0 0.0
  %193 = vmatpush1.msra.mxu0 0.0
  %194 = vmatprep.subr.mxu0 0.0
  %195 = vmatpush1.msra.mxu0 0.0
  %196 = vmatprep.subr.mxu0 0.0
  %197 = vmatpush1.msra.mxu0 0.0
  %198 = vmatprep.subr.mxu0 0.0
  %199 = vmatpush1.msra.mxu0 0.0
  %200 = vmatprep.subr.mxu0 0.0
  %201 = vmatpush1.msra.mxu0 0.0
  %202 = vmatprep.subr.mxu0 0.0
  %203 = vmatpush1.msra.mxu0 0.0
  %204 = vmatprep.subr.mxu0 0.0
  %205 = vmatpush1.msra.mxu0 0.0
  %206 = vmatprep.subr.mxu0 0.0
  %207 = vmatpush1.msra.mxu0 0.0
  %208 = vmatprep.subr.mxu0 0.0
  %209 = vmatpush1.msra.mxu0 0.0
  %210 = vmatprep.subr.mxu0 0.0
  %211 = vmatpush1.msra.mxu0 0.0
  %212 = vmatprep.subr.mxu0 0.0
  %213 = vmatpush1.msra.mxu0 %v174
  %214 = vmatprep.subr.mxu0 0.0
  %215 = vmatpush1.msra.mxu0 %v173
  %216 = vmatprep.subr.mxu0 0.0
  %217 = vmatpush1.msra.mxu0 %v172
  %218 = vmatprep.subr.mxu0 0.0
  %219 = vmatpush1.msra.mxu0 %v171
  %220 = vmatprep.subr.mxu0 0.0
  %221 = vmatpush2.msra.mxu0 0.0
  %222 = vmatprep.subr.mxu0 0.0
  %223 = vmatpush2.msra.mxu0 0.0
  %224 = vmatprep.subr.mxu0 0.0
  %225 = vmatpush2.msra.mxu0 0.0
  %226 = vmatprep.subr.mxu0 0.0
  %227 = vmatpush2.msra.mxu0 0.0
  %228 = vmatprep.subr.mxu0 0.0
  %229 = vmatpush2.msra.mxu0 0.0
  %230 = vmatprep.subr.mxu0 0.0
  %231 = vmatpush2.msra.mxu0 0.0
  %232 = vmatprep.subr.mxu0 0.0
  %233 = vmatpush2.msra.mxu0 0.0
  %234 = vmatprep.subr.mxu0 0.0
  %235 = vmatpush2.msra.mxu0 0.0
  %236 = vmatprep.subr.mxu0 0.0
  %237 = vmatpush2.msra.mxu0 0.0
  %238 = vmatprep.subr.mxu0 0.0
  %239 = vmatpush2.msra.mxu0 0.0
  %240 = vmatprep.subr.mxu0 0.0
  %241 = vmatpush2.msra.mxu0 0.0
  %242 = vmatprep.subr.mxu0 0.0
  %243 = vmatpush2.msra.mxu0 0.0
  %244 = vmatprep.subr.mxu0 0.0
  %245 = vmatpush2.msra.mxu0 0.0
  %246 = vmatprep.subr.mxu0 0.0
  %247 = vmatpush2.msra.mxu0 0.0
  %248 = vmatprep.subr.mxu0 0.0
  %249 = vmatpush2.msra.mxu0 0.0
  %250 = vmatprep.subr.mxu0 0.0
  %251 = vmatpush2.msra.mxu0 0.0
  %252 = vmatprep.mubr.f32.mxu0 0.0
  %253 = vmatmul.mubr.f32.gmra.mxu0 %v177
  %v254 = vpop.f32.mrf.mxu0
  %v255 = vadd.f32 0.0, %v254
  %v256 = vpop.f32.mrf.mxu0
  %257 = vmatprep.mubr.f32.mxu0 0.0
  %258 = vmatmul.mubr.f32.gmra.mxu0 %v180
  %v259 = vpop.f32.mrf.mxu0
  %v260 = vadd.f32 0.0, %v259
  %v261 = vpop.f32.mrf.mxu0
  %262 = vmatprep.mubr.f32.mxu0 0.0
  %263 = vmatmul.mubr.f32.gmra.mxu0 %v183
  %v264 = vpop.f32.mrf.mxu0
  %v265 = vadd.f32 0.0, %v264
  %v266 = vpop.f32.mrf.mxu0
  %267 = vmatprep.mubr.f32.mxu0 0.0
  %268 = vmatmul.mubr.f32.gmra.mxu0 %v186
  %v269 = vpop.f32.mrf.mxu0
  %v270 = vadd.f32 0.0, %v269
  %v271 = vpop.f32.mrf.mxu0
  %272 = vdwg.mxu0
  %v274 = vsel %vm175, %v159, 0
  %v277 = vsel %vm175, %v160, 0
  %v280 = vsel %vm175, %v161, 0
  %v283 = vsel %vm175, %v162, 0
  %285 = vmatprep.subr.mxu0 0.0
  %286 = vmatpush1.msra.mxu0 0.0
  %287 = vmatprep.subr.mxu0 0.0
  %288 = vmatpush1.msra.mxu0 0.0
  %289 = vmatprep.subr.mxu0 0.0
  %290 = vmatpush1.msra.mxu0 0.0
  %291 = vmatprep.subr.mxu0 0.0
  %292 = vmatpush1.msra.mxu0 0.0
  %293 = vmatprep.subr.mxu0 0.0
  %294 = vmatpush1.msra.mxu0 0.0
  %295 = vmatprep.subr.mxu0 0.0
  %296 = vmatpush1.msra.mxu0 0.0
  %297 = vmatprep.subr.mxu0 0.0
  %298 = vmatpush1.msra.mxu0 0.0
  %299 = vmatprep.subr.mxu0 0.0
  %300 = vmatpush1.msra.mxu0 0.0
  %301 = vmatprep.subr.mxu0 0.0
  %302 = vmatpush1.msra.mxu0 0.0
  %303 = vmatprep.subr.mxu0 0.0
  %304 = vmatpush1.msra.mxu0 0.0
  %305 = vmatprep.subr.mxu0 0.0
  %306 = vmatpush1.msra.mxu0 0.0
  %307 = vmatprep.subr.mxu0 0.0
  %308 = vmatpush1.msra.mxu0 0.0
  %309 = vmatprep.subr.mxu0 0.0
  %310 = vmatpush1.msra.mxu0 %v166
  %311 = vmatprep.subr.mxu0 0.0
  %312 = vmatpush1.msra.mxu0 %v165
  %313 = vmatprep.subr.mxu0 0.0
  %314 = vmatpush1.msra.mxu0 %v164
  %315 = vmatprep.subr.mxu0 0.0
  %316 = vmatpush1.msra.mxu0 %v163
  %317 = vmatprep.subr.mxu0 0.0
  %318 = vmatpush2.msra.mxu0 0.0
  %319 = vmatprep.subr.mxu0 0.0
  %320 = vmatpush2.msra.mxu0 0.0
  %321 = vmatprep.subr.mxu0 0.0
  %322 = vmatpush2.msra.mxu0 0.0
  %323 = vmatprep.subr.mxu0 0.0
  %324 = vmatpush2.msra.mxu0 0.0
  %325 = vmatprep.subr.mxu0 0.0
  %326 = vmatpush2.msra.mxu0 0.0
  %327 = vmatprep.subr.mxu0 0.0
  %328 = vmatpush2.msra.mxu0 0.0
  %329 = vmatprep.subr.mxu0 0.0
  %330 = vmatpush2.msra.mxu0 0.0
  %331 = vmatprep.subr.mxu0 0.0
  %332 = vmatpush2.msra.mxu0 0.0
  %333 = vmatprep.subr.mxu0 0.0
  %334 = vmatpush2.msra.mxu0 0.0
  %335 = vmatprep.subr.mxu0 0.0
  %336 = vmatpush2.msra.mxu0 0.0
  %337 = vmatprep.subr.mxu0 0.0
  %338 = vmatpush2.msra.mxu0 0.0
  %339 = vmatprep.subr.mxu0 0.0
  %340 = vmatpush2.msra.mxu0 0.0
  %341 = vmatprep.subr.mxu0 0.0
  %342 = vmatpush2.msra.mxu0 0.0
  %343 = vmatprep.subr.mxu0 0.0
  %344 = vmatpush2.msra.mxu0 0.0
  %345 = vmatprep.subr.mxu0 0.0
  %346 = vmatpush2.msra.mxu0 0.0
  %347 = vmatprep.subr.mxu0 0.0
  %348 = vmatpush2.msra.mxu0 0.0
  %349 = vmatprep.mubr.f32.mxu0 0.0
  %350 = vmatmul.mubr.f32.gmra.mxu0 %v274
  %v351 = vpop.f32.mrf.mxu0
  %v352 = vadd.f32 %v255, %v351
  %v353 = vpop.f32.mrf.mxu0
  %354 = vmatprep.mubr.f32.mxu0 0.0
  %355 = vmatmul.mubr.f32.gmra.mxu0 %v277
  %v356 = vpop.f32.mrf.mxu0
  %v357 = vadd.f32 %v260, %v356
  %v358 = vpop.f32.mrf.mxu0
  %359 = vmatprep.mubr.f32.mxu0 0.0
  %360 = vmatmul.mubr.f32.gmra.mxu0 %v280
  %v361 = vpop.f32.mrf.mxu0
  %v362 = vadd.f32 %v265, %v361
  %v363 = vpop.f32.mrf.mxu0
  %364 = vmatprep.mubr.f32.mxu0 0.0
  %365 = vmatmul.mubr.f32.gmra.mxu0 %v283
  %v366 = vpop.f32.mrf.mxu0
  %v367 = vadd.f32 %v270, %v366
  %v368 = vpop.f32.mrf.mxu0
  %369 = vdwg.mxu0
  %v370 = vld [vmem:[%s8] sm:$0xff]
  %v371 = vld [vmem:[%s8 + $0x8] sm:$0xff]
  %v372 = vld [vmem:[%s8 + $0x10] sm:$0xff]
  %v373 = vld [vmem:[%s8 + $0x18] sm:$0xff]
  %v374 = vld [vmem:[%s4] sm:$0xff]
  %v375 = vld [vmem:[%s4 + $0x8] sm:$0xff]
  %vm376 = vcmask 130048
  %v378 = vsel %vm376, %v370, 0
  %v381 = vsel %vm376, %v371, 0
  %v384 = vsel %vm376, %v372, 0
  %v387 = vsel %vm376, %v373, 0
  %389 = vmatprep.subr.mxu0 0.0
  %390 = vmatpush1.msra.mxu0 0.0
  %391 = vmatprep.subr.mxu0 0.0
  %392 = vmatpush1.msra.mxu0 0.0
  %393 = vmatprep.subr.mxu0 0.0
  %394 = vmatpush1.msra.mxu0 0.0
  %395 = vmatprep.subr.mxu0 0.0
  %396 = vmatpush1.msra.mxu0 0.0
  %397 = vmatprep.subr.mxu0 0.0
  %398 = vmatpush1.msra.mxu0 0.0
  %399 = vmatprep.subr.mxu0 0.0
  %400 = vmatpush1.msra.mxu0 0.0
  %401 = vmatprep.subr.mxu0 0.0
  %402 = vmatpush1.msra.mxu0 0.0
  %403 = vmatprep.subr.mxu0 0.0
  %404 = vmatpush1.msra.mxu0 0.0
  %405 = vmatprep.subr.mxu0 0.0
  %406 = vmatpush1.msra.mxu0 0.0
  %407 = vmatprep.subr.mxu0 0.0
  %408 = vmatpush1.msra.mxu0 0.0
  %409 = vmatprep.subr.mxu0 0.0
  %410 = vmatpush1.msra.mxu0 0.0
  %411 = vmatprep.subr.mxu0 0.0
  %412 = vmatpush1.msra.mxu0 0.0
  %413 = vmatprep.subr.mxu0 0.0
  %414 = vmatpush1.msra.mxu0 0.0
  %415 = vmatprep.subr.mxu0 0.0
  %416 = vmatpush1.msra.mxu0 0.0
  %417 = vmatprep.subr.mxu0 0.0
  %418 = vmatpush1.msra.mxu0 %v375
  %419 = vmatprep.subr.mxu0 0.0
  %420 = vmatpush1.msra.mxu0 %v374
  %421 = vmatprep.subr.mxu0 0.0
  %422 = vmatpush2.msra.mxu0 0.0
  %423 = vmatprep.subr.mxu0 0.0
  %424 = vmatpush2.msra.mxu0 0.0
  %425 = vmatprep.subr.mxu0 0.0
  %426 = vmatpush2.msra.mxu0 0.0
  %427 = vmatprep.subr.mxu0 0.0
  %428 = vmatpush2.msra.mxu0 0.0
  %429 = vmatprep.subr.mxu0 0.0
  %430 = vmatpush2.msra.mxu0 0.0
  %431 = vmatprep.subr.mxu0 0.0
  %432 = vmatpush2.msra.mxu0 0.0
  %433 = vmatprep.subr.mxu0 0.0
  %434 = vmatpush2.msra.mxu0 0.0
  %435 = vmatprep.subr.mxu0 0.0
  %436 = vmatpush2.msra.mxu0 0.0
  %437 = vmatprep.subr.mxu0 0.0
  %438 = vmatpush2.msra.mxu0 0.0
  %439 = vmatprep.subr.mxu0 0.0
  %440 = vmatpush2.msra.mxu0 0.0
  %441 = vmatprep.subr.mxu0 0.0
  %442 = vmatpush2.msra.mxu0 0.0
  %443 = vmatprep.subr.mxu0 0.0
  %444 = vmatpush2.msra.mxu0 0.0
  %445 = vmatprep.subr.mxu0 0.0
  %446 = vmatpush2.msra.mxu0 0.0
  %447 = vmatprep.subr.mxu0 0.0
  %448 = vmatpush2.msra.mxu0 0.0
  %449 = vmatprep.subr.mxu0 0.0
  %450 = vmatpush2.msra.mxu0 0.0
  %451 = vmatprep.subr.mxu0 0.0
  %452 = vmatpush2.msra.mxu0 0.0
  %453 = vmatprep.mubr.f32.mxu0 0.0
  %454 = vmatmul.mubr.f32.gmra.mxu0 %v378
  %v455 = vpop.f32.mrf.mxu0
  %v456 = vadd.f32 0.0, %v455
  %v457 = vpop.f32.mrf.mxu0
  %458 = vmatprep.mubr.f32.mxu0 0.0
  %459 = vmatmul.mubr.f32.gmra.mxu0 %v381
  %v460 = vpop.f32.mrf.mxu0
  %v461 = vadd.f32 0.0, %v460
  %v462 = vpop.f32.mrf.mxu0
  %463 = vmatprep.mubr.f32.mxu0 0.0
  %464 = vmatmul.mubr.f32.gmra.mxu0 %v384
  %v465 = vpop.f32.mrf.mxu0
  %v466 = vadd.f32 0.0, %v465
  %v467 = vpop.f32.mrf.mxu0
  %468 = vmatprep.mubr.f32.mxu0 0.0
  %469 = vmatmul.mubr.f32.gmra.mxu0 %v387
  %v470 = vpop.f32.mrf.mxu0
  %v471 = vadd.f32 0.0, %v470
  %v472 = vpop.f32.mrf.mxu0
  %473 = vdwg.mxu0
  %v474 = vadd.f32 %v352, %v456
  %v475 = vadd.f32 %v357, %v461
  %v476 = vadd.f32 %v362, %v466
  %v477 = vadd.f32 %v367, %v471
  %v478 = vld [vmem:[%s7] sm:$0xff]
  %v479 = vld [vmem:[%s7 + $0x8] sm:$0xff]
  %v480 = vld [vmem:[%s7 + $0x10] sm:$0xff]
  %v481 = vld [vmem:[%s7 + $0x18] sm:$0xff]
  %483 = vset.pattern.permute.xlu0 0
  %484 = vperm.xlu0 %483, %v478
  %v485 = vpop.permute.xlu0 %484
  %488 = vset.pattern.permute.xlu0 0
  %489 = vperm.xlu0 %488, %v479
  %v490 = vpop.permute.xlu0 %489
  %493 = vset.pattern.permute.xlu0 0
  %494 = vperm.xlu0 %493, %v480
  %v495 = vpop.permute.xlu0 %494
  %498 = vset.pattern.permute.xlu0 0
  %499 = vperm.xlu0 %498, %v481
  %v500 = vpop.permute.xlu0 %499
  %v502 = vlaneseq
  %v503 = vshrl.u32 %v502, 7
  %v504 = vsub.s32 0, %v503
  %v505 = vrot.slane %v62, %v504
  %v506 = vmul.f32 %v485, %v505
  %v507 = vmul.f32 %v490, %v505
  %v508 = vmul.f32 %v495, %v505
  %v509 = vmul.f32 %v500, %v505
  %v510 = vadd.f32 %v474, %v506
  %v511 = vadd.f32 %v475, %v507
  %v512 = vadd.f32 %v476, %v508
  %v513 = vadd.f32 %v477, %v509
  %v514 = vld [vmem:[%s9] sm:$0xff]
  %v515 = vld [vmem:[%s9 + $0x8] sm:$0xff]
  %v516 = vld [vmem:[%s9 + $0x10] sm:$0xff]
  %v517 = vld [vmem:[%s9 + $0x18] sm:$0xff]
  %519 = vset.pattern.permute.xlu0 0
  %520 = vperm.xlu0 %519, %v514
  %v521 = vpop.permute.xlu0 %520
  %524 = vset.pattern.permute.xlu0 0
  %525 = vperm.xlu0 %524, %v515
  %v526 = vpop.permute.xlu0 %525
  %529 = vset.pattern.permute.xlu0 0
  %530 = vperm.xlu0 %529, %v516
  %v531 = vpop.permute.xlu0 %530
  %534 = vset.pattern.permute.xlu0 0
  %535 = vperm.xlu0 %534, %v517
  %v536 = vpop.permute.xlu0 %535
  %v538 = vadd.f32 %v510, %v521
  %v539 = vadd.f32 %v511, %v526
  %v540 = vadd.f32 %v512, %v531
  %v541 = vadd.f32 %v513, %v536
  %v542 = vmax.f32 %v538, 0.0
  %v543 = vmax.f32 %v539, 0.0
  %v544 = vmax.f32 %v540, 0.0
  %v545 = vmax.f32 %v541, 0.0
  %v546 = vld [vmem:[%s10] sm:$0xff]
  %v547 = vld [vmem:[%s10 + $0x8] sm:$0xff]
  %v548 = vld [vmem:[%s10 + $0x10] sm:$0xff]
  %v549 = vld [vmem:[%s10 + $0x18] sm:$0xff]
  %v550 = vld [vmem:[%s11] sm:$0xff]
  %v551 = vld [vmem:[%s11 + $0x8] sm:$0xff]
  %v552 = vld [vmem:[%s11 + $0x10] sm:$0xff]
  %v553 = vld [vmem:[%s11 + $0x18] sm:$0xff]
  %555 = vset.pattern.permute.xlu0 0
  %556 = vperm.xlu0 %555, %v550
  %v557 = vpop.permute.xlu0 %556
  %560 = vset.pattern.permute.xlu0 0
  %561 = vperm.xlu0 %560, %v551
  %v562 = vpop.permute.xlu0 %561
  %565 = vset.pattern.permute.xlu0 0
  %566 = vperm.xlu0 %565, %v552
  %v567 = vpop.permute.xlu0 %566
  %570 = vset.pattern.permute.xlu0 0
  %571 = vperm.xlu0 %570, %v553
  %v572 = vpop.permute.xlu0 %571
  %v575 = vsel %vm175, %v546, 0
  %v578 = vsel %vm175, %v547, 0
  %v581 = vsel %vm175, %v548, 0
  %v584 = vsel %vm175, %v549, 0
  %586 = vmatprep.subr.mxu0 0.0
  %587 = vmatpush1.msra.mxu0 0.0
  %588 = vmatprep.subr.mxu0 0.0
  %589 = vmatpush1.msra.mxu0 0.0
  %590 = vmatprep.subr.mxu0 0.0
  %591 = vmatpush1.msra.mxu0 0.0
  %592 = vmatprep.subr.mxu0 0.0
  %593 = vmatpush1.msra.mxu0 0.0
  %594 = vmatprep.subr.mxu0 0.0
  %595 = vmatpush1.msra.mxu0 0.0
  %596 = vmatprep.subr.mxu0 0.0
  %597 = vmatpush1.msra.mxu0 0.0
  %598 = vmatprep.subr.mxu0 0.0
  %599 = vmatpush1.msra.mxu0 0.0
  %600 = vmatprep.subr.mxu0 0.0
  %601 = vmatpush1.msra.mxu0 0.0
  %602 = vmatprep.subr.mxu0 0.0
  %603 = vmatpush1.msra.mxu0 0.0
  %604 = vmatprep.subr.mxu0 0.0
  %605 = vmatpush1.msra.mxu0 0.0
  %606 = vmatprep.subr.mxu0 0.0
  %607 = vmatpush1.msra.mxu0 0.0
  %608 = vmatprep.subr.mxu0 0.0
  %609 = vmatpush1.msra.mxu0 0.0
  %610 = vmatprep.subr.mxu0 0.0
  %611 = vmatpush1.msra.mxu0 %v545
  %612 = vmatprep.subr.mxu0 0.0
  %613 = vmatpush1.msra.mxu0 %v544
  %614 = vmatprep.subr.mxu0 0.0
  %615 = vmatpush1.msra.mxu0 %v543
  %616 = vmatprep.subr.mxu0 0.0
  %617 = vmatpush1.msra.mxu0 %v542
  %618 = vmatprep.subr.mxu0 0.0
  %619 = vmatpush2.msra.mxu0 0.0
  %620 = vmatprep.subr.mxu0 0.0
  %621 = vmatpush2.msra.mxu0 0.0
  %622 = vmatprep.subr.mxu0 0.0
  %623 = vmatpush2.msra.mxu0 0.0
  %624 = vmatprep.subr.mxu0 0.0
  %625 = vmatpush2.msra.mxu0 0.0
  %626 = vmatprep.subr.mxu0 0.0
  %627 = vmatpush2.msra.mxu0 0.0
  %628 = vmatprep.subr.mxu0 0.0
  %629 = vmatpush2.msra.mxu0 0.0
  %630 = vmatprep.subr.mxu0 0.0
  %631 = vmatpush2.msra.mxu0 0.0
  %632 = vmatprep.subr.mxu0 0.0
  %633 = vmatpush2.msra.mxu0 0.0
  %634 = vmatprep.subr.mxu0 0.0
  %635 = vmatpush2.msra.mxu0 0.0
  %636 = vmatprep.subr.mxu0 0.0
  %637 = vmatpush2.msra.mxu0 0.0
  %638 = vmatprep.subr.mxu0 0.0
  %639 = vmatpush2.msra.mxu0 0.0
  %640 = vmatprep.subr.mxu0 0.0
  %641 = vmatpush2.msra.mxu0 0.0
  %642 = vmatprep.subr.mxu0 0.0
  %643 = vmatpush2.msra.mxu0 0.0
  %644 = vmatprep.subr.mxu0 0.0
  %645 = vmatpush2.msra.mxu0 0.0
  %646 = vmatprep.subr.mxu0 0.0
  %647 = vmatpush2.msra.mxu0 0.0
  %648 = vmatprep.subr.mxu0 0.0
  %649 = vmatpush2.msra.mxu0 0.0
  %650 = vmatprep.mubr.f32.mxu0 0.0
  %651 = vmatmul.mubr.f32.gmra.mxu0 %v575
  %v652 = vpop.f32.mrf.mxu0
  %v653 = vadd.f32 %v557, %v652
  %v654 = vpop.f32.mrf.mxu0
  %655 = vmatprep.mubr.f32.mxu0 0.0
  %656 = vmatmul.mubr.f32.gmra.mxu0 %v578
  %v657 = vpop.f32.mrf.mxu0
  %v658 = vadd.f32 %v562, %v657
  %v659 = vpop.f32.mrf.mxu0
  %660 = vmatprep.mubr.f32.mxu0 0.0
  %661 = vmatmul.mubr.f32.gmra.mxu0 %v581
  %v662 = vpop.f32.mrf.mxu0
  %v663 = vadd.f32 %v567, %v662
  %v664 = vpop.f32.mrf.mxu0
  %665 = vmatprep.mubr.f32.mxu0 0.0
  %666 = vmatmul.mubr.f32.gmra.mxu0 %v584
  %v667 = vpop.f32.mrf.mxu0
  %v668 = vadd.f32 %v572, %v667
  %v669 = vpop.f32.mrf.mxu0
  %670 = vdwg.mxu0
  %v671 = vmax.f32 %v653, 0.0
  %v672 = vmax.f32 %v658, 0.0
  %v673 = vmax.f32 %v663, 0.0
  %v674 = vmax.f32 %v668, 0.0
  %vm675 = vcmask 326656
  %676 = vst.msk [vmem:[%s15] sm:$0xff] %vm675, %v671
  %677 = vst.msk [vmem:[%s15 + $0x8] sm:$0xff] %vm675, %v672
  %678 = vst.msk [vmem:[%s15 + $0x10] sm:$0xff] %vm675, %v673
  %679 = vst.msk [vmem:[%s15 + $0x18] sm:$0xff] %vm675, %v674
  %v680 = vld [vmem:[%s12] sm:$0xff]
  %v681 = vld [vmem:[%s12 + $0x8] sm:$0xff]
  %v682 = vld [vmem:[%s12 + $0x10] sm:$0xff]
  %v683 = vld [vmem:[%s12 + $0x18] sm:$0xff]
  %v684 = vld [vmem:[%s13] sm:$0xff]
  %v685 = vld [vmem:[%s13 + $0x8] sm:$0xff]
  %v686 = vld [vmem:[%s13 + $0x10] sm:$0xff]
  %v687 = vld [vmem:[%s13 + $0x18] sm:$0xff]
  %689 = vset.pattern.permute.xlu0 0
  %690 = vperm.xlu0 %689, %v684
  %v691 = vpop.permute.xlu0 %690
  %694 = vset.pattern.permute.xlu0 0
  %695 = vperm.xlu0 %694, %v685
  %v696 = vpop.permute.xlu0 %695
  %699 = vset.pattern.permute.xlu0 0
  %700 = vperm.xlu0 %699, %v686
  %v701 = vpop.permute.xlu0 %700
  %704 = vset.pattern.permute.xlu0 0
  %705 = vperm.xlu0 %704, %v687
  %v706 = vpop.permute.xlu0 %705
  %v709 = vsel %vm175, %v680, 0
  %v712 = vsel %vm175, %v681, 0
  %v715 = vsel %vm175, %v682, 0
  %v718 = vsel %vm175, %v683, 0
  %720 = vmatprep.subr.mxu0 0.0
  %721 = vmatpush1.msra.mxu0 0.0
  %722 = vmatprep.subr.mxu0 0.0
  %723 = vmatpush1.msra.mxu0 0.0
  %724 = vmatprep.subr.mxu0 0.0
  %725 = vmatpush1.msra.mxu0 0.0
  %726 = vmatprep.subr.mxu0 0.0
  %727 = vmatpush1.msra.mxu0 0.0
  %728 = vmatprep.subr.mxu0 0.0
  %729 = vmatpush1.msra.mxu0 0.0
  %730 = vmatprep.subr.mxu0 0.0
  %731 = vmatpush1.msra.mxu0 0.0
  %732 = vmatprep.subr.mxu0 0.0
  %733 = vmatpush1.msra.mxu0 0.0
  %734 = vmatprep.subr.mxu0 0.0
  %735 = vmatpush1.msra.mxu0 0.0
  %736 = vmatprep.subr.mxu0 0.0
  %737 = vmatpush1.msra.mxu0 0.0
  %738 = vmatprep.subr.mxu0 0.0
  %739 = vmatpush1.msra.mxu0 0.0
  %740 = vmatprep.subr.mxu0 0.0
  %741 = vmatpush1.msra.mxu0 0.0
  %742 = vmatprep.subr.mxu0 0.0
  %743 = vmatpush1.msra.mxu0 0.0
  %744 = vmatprep.subr.mxu0 0.0
  %745 = vmatpush1.msra.mxu0 %v674
  %746 = vmatprep.subr.mxu0 0.0
  %747 = vmatpush1.msra.mxu0 %v673
  %748 = vmatprep.subr.mxu0 0.0
  %749 = vmatpush1.msra.mxu0 %v672
  %750 = vmatprep.subr.mxu0 0.0
  %751 = vmatpush1.msra.mxu0 %v671
  %752 = vmatprep.subr.mxu0 0.0
  %753 = vmatpush2.msra.mxu0 0.0
  %754 = vmatprep.subr.mxu0 0.0
  %755 = vmatpush2.msra.mxu0 0.0
  %756 = vmatprep.subr.mxu0 0.0
  %757 = vmatpush2.msra.mxu0 0.0
  %758 = vmatprep.subr.mxu0 0.0
  %759 = vmatpush2.msra.mxu0 0.0
  %760 = vmatprep.subr.mxu0 0.0
  %761 = vmatpush2.msra.mxu0 0.0
  %762 = vmatprep.subr.mxu0 0.0
  %763 = vmatpush2.msra.mxu0 0.0
  %764 = vmatprep.subr.mxu0 0.0
  %765 = vmatpush2.msra.mxu0 0.0
  %766 = vmatprep.subr.mxu0 0.0
  %767 = vmatpush2.msra.mxu0 0.0
  %768 = vmatprep.subr.mxu0 0.0
  %769 = vmatpush2.msra.mxu0 0.0
  %770 = vmatprep.subr.mxu0 0.0
  %771 = vmatpush2.msra.mxu0 0.0
  %772 = vmatprep.subr.mxu0 0.0
  %773 = vmatpush2.msra.mxu0 0.0
  %774 = vmatprep.subr.mxu0 0.0
  %775 = vmatpush2.msra.mxu0 0.0
  %776 = vmatprep.subr.mxu0 0.0
  %777 = vmatpush2.msra.mxu0 0.0
  %778 = vmatprep.subr.mxu0 0.0
  %779 = vmatpush2.msra.mxu0 0.0
  %780 = vmatprep.subr.mxu0 0.0
  %781 = vmatpush2.msra.mxu0 0.0
  %782 = vmatprep.subr.mxu0 0.0
  %783 = vmatpush2.msra.mxu0 0.0
  %784 = vmatprep.mubr.f32.mxu0 0.0
  %785 = vmatmul.mubr.f32.gmra.mxu0 %v709
  %v786 = vpop.f32.mrf.mxu0
  %v787 = vadd.f32 %v691, %v786
  %v788 = vpop.f32.mrf.mxu0
  %789 = vmatprep.mubr.f32.mxu0 0.0
  %790 = vmatmul.mubr.f32.gmra.mxu0 %v712
  %v791 = vpop.f32.mrf.mxu0
  %v792 = vadd.f32 %v696, %v791
  %v793 = vpop.f32.mrf.mxu0
  %794 = vmatprep.mubr.f32.mxu0 0.0
  %795 = vmatmul.mubr.f32.gmra.mxu0 %v715
  %v796 = vpop.f32.mrf.mxu0
  %v797 = vadd.f32 %v701, %v796
  %v798 = vpop.f32.mrf.mxu0
  %799 = vmatprep.mubr.f32.mxu0 0.0
  %800 = vmatmul.mubr.f32.gmra.mxu0 %v718
  %v801 = vpop.f32.mrf.mxu0
  %v802 = vadd.f32 %v706, %v801
  %v803 = vpop.f32.mrf.mxu0
  %804 = vdwg.mxu0
  %v805 = vmax.f32 %v787, 0.0
  %v806 = vmax.f32 %v792, 0.0
  %v807 = vmax.f32 %v797, 0.0
  %v808 = vmax.f32 %v802, 0.0
  %v809 = vld [vmem:[%s14] sm:$0x7]
  %v811 = vsel %vm175, %v809, 0
  %813 = vmatprep.subr.mxu0 0.0
  %814 = vmatpush1.msra.mxu0 0.0
  %815 = vmatprep.subr.mxu0 0.0
  %816 = vmatpush1.msra.mxu0 0.0
  %817 = vmatprep.subr.mxu0 0.0
  %818 = vmatpush1.msra.mxu0 0.0
  %819 = vmatprep.subr.mxu0 0.0
  %820 = vmatpush1.msra.mxu0 0.0
  %821 = vmatprep.subr.mxu0 0.0
  %822 = vmatpush1.msra.mxu0 0.0
  %823 = vmatprep.subr.mxu0 0.0
  %824 = vmatpush1.msra.mxu0 0.0
  %825 = vmatprep.subr.mxu0 0.0
  %826 = vmatpush1.msra.mxu0 0.0
  %827 = vmatprep.subr.mxu0 0.0
  %828 = vmatpush1.msra.mxu0 0.0
  %829 = vmatprep.subr.mxu0 0.0
  %830 = vmatpush1.msra.mxu0 0.0
  %831 = vmatprep.subr.mxu0 0.0
  %832 = vmatpush1.msra.mxu0 0.0
  %833 = vmatprep.subr.mxu0 0.0
  %834 = vmatpush1.msra.mxu0 0.0
  %835 = vmatprep.subr.mxu0 0.0
  %836 = vmatpush1.msra.mxu0 0.0
  %837 = vmatprep.subr.mxu0 0.0
  %838 = vmatpush1.msra.mxu0 %v808
  %839 = vmatprep.subr.mxu0 0.0
  %840 = vmatpush1.msra.mxu0 %v807
  %841 = vmatprep.subr.mxu0 0.0
  %842 = vmatpush1.msra.mxu0 %v806
  %843 = vmatprep.subr.mxu0 0.0
  %844 = vmatpush1.msra.mxu0 %v805
  %845 = vmatprep.subr.mxu0 0.0
  %846 = vmatpush2.msra.mxu0 0.0
  %847 = vmatprep.subr.mxu0 0.0
  %848 = vmatpush2.msra.mxu0 0.0
  %849 = vmatprep.subr.mxu0 0.0
  %850 = vmatpush2.msra.mxu0 0.0
  %851 = vmatprep.subr.mxu0 0.0
  %852 = vmatpush2.msra.mxu0 0.0
  %853 = vmatprep.subr.mxu0 0.0
  %854 = vmatpush2.msra.mxu0 0.0
  %855 = vmatprep.subr.mxu0 0.0
  %856 = vmatpush2.msra.mxu0 0.0
  %857 = vmatprep.subr.mxu0 0.0
  %858 = vmatpush2.msra.mxu0 0.0
  %859 = vmatprep.subr.mxu0 0.0
  %860 = vmatpush2.msra.mxu0 0.0
  %861 = vmatprep.subr.mxu0 0.0
  %862 = vmatpush2.msra.mxu0 0.0
  %863 = vmatprep.subr.mxu0 0.0
  %864 = vmatpush2.msra.mxu0 0.0
  %865 = vmatprep.subr.mxu0 0.0
  %866 = vmatpush2.msra.mxu0 0.0
  %867 = vmatprep.subr.mxu0 0.0
  %868 = vmatpush2.msra.mxu0 0.0
  %869 = vmatprep.subr.mxu0 0.0
  %870 = vmatpush2.msra.mxu0 0.0
  %871 = vmatprep.subr.mxu0 0.0
  %872 = vmatpush2.msra.mxu0 0.0
  %873 = vmatprep.subr.mxu0 0.0
  %874 = vmatpush2.msra.mxu0 0.0
  %875 = vmatprep.subr.mxu0 0.0
  %876 = vmatpush2.msra.mxu0 0.0
  %877 = vmatprep.mubr.f32.mxu0 0.0
  %878 = vmatmul.mubr.f32.gmra.mxu0 %v811
  %v879 = vpop.f32.mrf.mxu0
  %v880 = vadd.f32 0.0, %v879
  %v881 = vpop.f32.mrf.mxu0
  %882 = vdwg.mxu0
  %v883 = vmul.f32 %v93, %v880
  %v884 = vmul.f32 %v122, %v880
  %v886 = vrot.slane %v884, 1
  %v888 = vadd.f32 %v883, %v886
  %v890 = vrot.slane %v880, 1
  %v892 = vmul.f32 %v140, %v890
  %v894 = vrot.slane %v892, 1
  %v896 = vadd.f32 %v888, %v894
  %v897 = vmax.f32 %v896, -100.0
  %v898 = vmin.f32 %v897, 100.0
  %vm899 = vcmask 319488
  %900 = vst.msk [vmem:[%s16] sm:$0x1] %vm899, %v898
  %v901 = vrot.slane %v880, 7
  %v903 = vmul.f32 %v98, %v901
  %v904 = vmul.f32 %v127, %v901
  %v906 = vrot.slane %v904, 1
  %v908 = vadd.f32 %v903, %v906
  %v909 = vmul.f32 %v149, %v880
  %v911 = vrot.slane %v909, 1
  %v913 = vadd.f32 %v908, %v911
  %v914 = vmax.f32 %v913, -100.0
  %v915 = vmin.f32 %v914, 100.0
  %vm916 = vcmask 320513
  %917 = vst.msk [vmem:[%s16] sm:$0x2] %vm916, %v915
  %v918 = vrot.slane %v880, 6
  %v920 = vmul.f32 %v102, %v918
  %v921 = vmul.f32 %v131, %v890
  %v923 = vrot.slane %v921, 6
  %v925 = vadd.f32 %v920, %v923
  %v926 = vrot.slane %v880, 2
  %v928 = vmul.f32 %v158, %v926
  %v930 = vrot.slane %v928, 6
  %v932 = vadd.f32 %v925, %v930
  %v933 = vmax.f32 %v932, -100.0
  %v934 = vmin.f32 %v933, 100.0
  %vm935 = vcmask 321538
  %936 = vst.msk [vmem:[%s16] sm:$0x4] %vm935, %v934
  // Predicated region
  $region62: #{clofnet_vel_forward.13} parent=0 // pred_check
    _
  $region63: #{clofnet_vel_forward.13} parent=0 // pred_check_branch
    %938 = sbr.rel (0) target = $region65
  $region64: #{clofnet_vel_forward.13} parent=0 // pred_region
    _
  $region65: #{clofnet_vel_forward.13} parent=0 // pred_fallthru
    _
  // Predicated region
  $region66: #{clofnet_vel_forward.13} parent=0 // pred_check
    _
  $region67: #{clofnet_vel_forward.13} parent=0 // pred_check_branch
    %940 = sbr.rel (0) target = $region69
  $region68: #{clofnet_vel_forward.13} parent=0 // pred_region
    _
  $region69: #{clofnet_vel_forward.13} parent=0 // pred_fallthru
    _
  // Predicated region
  $region70: #{clofnet_vel_forward.13} parent=0 // pred_check
    _
  $region71: #{clofnet_vel_forward.13} parent=0 // pred_check_branch
    %942 = sbr.rel (0) target = $region73
  $region72: #{clofnet_vel_forward.13} parent=0 // pred_region
    _
  $region73: #{clofnet_vel_forward.13} parent=0 // pred_fallthru
    _
  // Predicated region
  $region74: #{clofnet_vel_forward.13} parent=0 // pred_check
    _
  $region75: #{clofnet_vel_forward.13} parent=0 // pred_check_branch
    %944 = sbr.rel (0) target = $region77
  $region76: #{clofnet_vel_forward.13} parent=0 // pred_region
    _
  $region77: #{clofnet_vel_forward.13} parent=0 // pred_fallthru
    _

// kernel: clofnet_vel_forward.21
$region0: #{clofnet_vel_forward.21}
  #allocation0 [shape = 'u32[]', space=smem, size = 0x4, offset = 0x4, fixed_abs, tag = 'smem constant byte address 0x4 - core index']
  #allocation1 [shape = 'u32[144,128]{1,0:T(1,128)}', space=vmem, size = 0x12000, scoped, tag = 'internal scratch']
  %s0 = inlined_call_operand.vmem [shape: f32[10,1], index: 0, kind: input, shape index: {}]
  %s1 = inlined_call_operand.vmem [shape: f32[10,1], index: 1, kind: input, shape index: {}]
  %s2 = inlined_call_operand.vmem [shape: f32[10,1], index: 2, kind: input, shape index: {}]
  %s3 = inlined_call_operand.vmem [shape: f32[3,10], index: 3, kind: input, shape index: {}]
  %s4 = inlined_call_operand.hbm [shape: f32[10,10], index: 4, kind: output, shape index: {}]
  %s5 = sld [smem:[#allocation0]]
  $region26: #{clofnet_vel_forward.21} parent=0
    _
  %s7 = ssub.s32 1, %s5
  %s8 = scalar_select 0, %s7, %s5
  $region1: #{clofnet_vel_forward.21} parent=0
    #allocation2 [shape = 'u8[8192]{0}', space=vmem, size = 0x2000, scoped, tag = 'output window, operand 0, single buffered']
    #allocation3 [shape = 's32[1]{0}', space=sflag, size = 0x4, scoped, tag = 'scoped memory for clofnet_vel_forward.21']
    %9 = vsyncpa [#allocation3], 0
    // Predicated region
    $region2: #{clofnet_vel_forward.21} parent=1 // pred_check
      _
    $region3: #{clofnet_vel_forward.21} parent=1 // pred_check_branch
      %11 = sbr.rel (0) target = $region5
    $region4: #{clofnet_vel_forward.21} parent=1 // pred_region
      _
    $region5: #{clofnet_vel_forward.21} parent=1 // pred_fallthru
      _
    // Predicated region
    $region6: #{clofnet_vel_forward.21} parent=1 // pred_check
      _
    $region7: #{clofnet_vel_forward.21} parent=1 // pred_check_branch
      %13 = sbr.rel (0) target = $region9
    $region8: #{clofnet_vel_forward.21} parent=1 // pred_region
      _
    $region9: #{clofnet_vel_forward.21} parent=1 // pred_fallthru
      _
    // Predicated region
    $region10: #{clofnet_vel_forward.21} parent=1 // pred_check
      _
    $region11: #{clofnet_vel_forward.21} parent=1 // pred_check_branch
      %15 = sbr.rel (0) target = $region13
    $region12: #{clofnet_vel_forward.21} parent=1 // pred_region
      _
    $region13: #{clofnet_vel_forward.21} parent=1 // pred_fallthru
      _
    // Predicated region
    $region14: #{clofnet_vel_forward.21} parent=1 // pred_check
      _
    $region15: #{clofnet_vel_forward.21} parent=1 // pred_check_branch
      %17 = sbr.rel (0) target = $region17
    $region16: #{clofnet_vel_forward.21} parent=1 // pred_region
      _
    $region17: #{clofnet_vel_forward.21} parent=1 // pred_fallthru
      _
    %v18 = vld [vmem:[%s3] sm:$0x7]
    %v19 = vld [vmem:[%s0] sm:$0xff]
    %v20 = vld [vmem:[%s0 + $0x8] sm:$0x3]
    %22 = vset.pattern.permute.xlu0 0
    %23 = vperm.xlu0 %22, %v19
    %v24 = vpop.permute.xlu0 %23
    %27 = vset.pattern.permute.xlu0 0
    %28 = vperm.xlu0 %27, %v20
    %v29 = vpop.permute.xlu0 %28
    %v31 = vlaneseq
    %v32 = vshrl.u32 %v31, 7
    %v33 = vsub.s32 0, %v32
    %v34 = vrot.slane %v18, %v33
    %v35 = vsub.f32 %v24, %v34
    %v36 = vsub.f32 %v29, %v34
    %v37 = vld [vmem:[%s1] sm:$0xff]
    %v38 = vld [vmem:[%s1 + $0x8] sm:$0x3]
    %40 = vset.pattern.permute.xlu0 0
    %41 = vperm.xlu0 %40, %v37
    %v42 = vpop.permute.xlu0 %41
    %45 = vset.pattern.permute.xlu0 0
    %46 = vperm.xlu0 %45, %v38
    %v47 = vpop.permute.xlu0 %46
    %v49 = vlaneseq
    %v50 = vshrl.u32 %v49, 7
    %v51 = vsub.s32 1, %v50
    %v52 = vrot.slane %v18, %v51
    %v53 = vsub.f32 %v42, %v52
    %v54 = vsub.f32 %v47, %v52
    %v55 = vld [vmem:[%s2] sm:$0xff]
    %v56 = vld [vmem:[%s2 + $0x8] sm:$0x3]
    %58 = vset.pattern.permute.xlu0 0
    %59 = vperm.xlu0 %58, %v55
    %v60 = vpop.permute.xlu0 %59
    %63 = vset.pattern.permute.xlu0 0
    %64 = vperm.xlu0 %63, %v56
    %v65 = vpop.permute.xlu0 %64
    %v67 = vlaneseq
    %v68 = vshrl.u32 %v67, 7
    %v69 = vsub.s32 2, %v68
    %v70 = vrot.slane %v18, %v69
    %v71 = vsub.f32 %v60, %v70
    %v72 = vsub.f32 %v65, %v70
    %v73 = vmul.f32 %v35, %v35
    %v74 = vmul.f32 %v36, %v36
    %v75 = vmul.f32 %v53, %v53
    %v76 = vmul.f32 %v54, %v54
    %v77 = vadd.f32 %v73, %v75
    %v78 = vadd.f32 %v74, %v76
    %v79 = vmul.f32 %v71, %v71
    %v80 = vmul.f32 %v72, %v72
    %v81 = vadd.f32 %v77, %v79
    %v82 = vadd.f32 %v78, %v80
    %v83 = vrsqrt.pop %v81
    %v84 = vmul.f32 %v81, %v83
    %vm85 = vcmp.eq.f32.partialorder %v81, inf
    %v86 = vsel %vm85, %v81, %v84
    %vm87 = vcmp.eq.f32.partialorder %v81, 0.0
    %v88 = vand.u32 %v81, 2147483648
    %v89 = vsel %vm87, %v88, %v86
    %v90 = vrsqrt.pop %v82
    %v91 = vmul.f32 %v82, %v90
    %vm92 = vcmp.eq.f32.partialorder %v82, inf
    %v93 = vsel %vm92, %v82, %v91
    %vm94 = vcmp.eq.f32.partialorder %v82, 0.0
    %v95 = vand.u32 %v82, 2147483648
    %v96 = vsel %vm94, %v95, %v93
    %vm97 = vcmask 80896
    %98 = vst.msk [vmem:[#allocation2] sm:$0xff] %vm97, %v89
    %vm99 = vcmask 74752
    %100 = vst.msk [vmem:[#allocation2 + $0x8] sm:$0x3] %vm99, %v96
    // Predicated region
    $region18: #{clofnet_vel_forward.21} parent=1 // pred_check
      _
    $region19: #{clofnet_vel_forward.21} parent=1 // pred_check_branch
      %102 = sbr.rel (0) target = $region21
    $region20: #{clofnet_vel_forward.21} parent=1 // pred_region
      %s104 = ssub.s32 256, 256
      %105 = vsyncadd [#allocation3], %s104
      %s106 = sshll.u32 [#allocation2], 4
      %s107 = int_to_ptr.vmem [resolvable:$true] %s106
      %112 = dma.vmem_to_hbm [thread:$0]  %s107, 256, %s4, [#allocation3], 128, 128, 8
    $region21: #{clofnet_vel_forward.21} parent=1 // pred_fallthru
      _
    // Predicated region
    $region22: #{clofnet_vel_forward.21} parent=1 // pred_check
      _
    $region23: #{clofnet_vel_forward.21} parent=1 // pred_check_branch
      %114 = sbr.rel (0) target = $region25
    $region24: #{clofnet_vel_forward.21} parent=1 // pred_region
      %115 = dma.done [#allocation3], 256
    $region25: #{clofnet_vel_forward.21} parent=1 // pred_fallthru
      _
    %116 = vsyncpa [#allocation3], 1

</llo_original>
